<compile_context>
chip_gen: v7x
topology: tpu7x:2x2x1
jax: 0.10.0
libtpu: 0.0.40
codegen_flags: <defaults>
</compile_context>

<pallas_src>
import math
from functools import partial

import numpy as np
import jax
import jax.numpy as jnp
from jax.experimental import pallas as pl
from jax.experimental.pallas import tpu as pltpu


# ----------------------------------------------------------------------------- kernel
def encoder_layer_kernel(x_ref, pos_ref,
                         wqk_ref, bqk_ref,
                         wv_ref, bv_ref,
                         wo_ref, bo_ref,
                         ln1w_ref, ln1b_ref,
                         w1_ref, b1_ref,
                         w2_ref, b2_ref,
                         ln2w_ref, ln2b_ref,
                         out_ref,
                         ctx_ref,                 # VMEM scratch (n_rows, D) bf16
                         *, nhead, seq_len):
    f32 = jnp.float32
    bf16 = jnp.bfloat16

    x = x_ref[...].astype(f32)                    # (N, D), N = TB*S, batch-major rows
    n_rows, D = x.shape
    S = seq_len
    TB = n_rows // S
    hd = D // nhead

    # ----- fused Q/K projection (1/sqrt(hd) folded into wq/bq host-side) + V -----
    qk_in = (x + pos_ref[...].astype(f32)).astype(bf16)
    qk = jnp.dot(qk_in, wqk_ref[...], preferred_element_type=f32) + bqk_ref[...]        # (N, 2D)
    v = jnp.dot(x.astype(bf16), wv_ref[...], preferred_element_type=f32) + bv_ref[...]  # (N, D)

    # ----- multi-head self-attention, batched over the batch tile; heads unrolled -----
    # Each head's context goes into ctx_ref at its lane offset; the output projection
    # is then a single full-D-contraction matmul (instead of nhead K=hd matmuls).
    for h in range(nhead):                        # static unroll, nhead small
        qh = qk[:, h * hd:(h + 1) * hd].reshape(TB, S, hd).astype(bf16)
        kh = qk[:, D + h * hd:D + (h + 1) * hd].reshape(TB, S, hd).astype(bf16)
        vh = v[:, h * hd:(h + 1) * hd].reshape(TB, S, hd).astype(bf16)
        s = jnp.einsum('bqd,bkd->bqk', qh, kh, preferred_element_type=f32)   # (TB, S, S)
        m = jnp.max(s, axis=-1, keepdims=True)
        p = jnp.exp(s - m)
        inv = pl.reciprocal(jnp.sum(p, axis=-1, keepdims=True), approx=True)
        attn = (p * inv).astype(bf16)
        ctx = jnp.einsum('bqk,bkd->bqd', attn, vh, preferred_element_type=f32)  # (TB, S, hd)
        ctx_ref[:, h * hd:(h + 1) * hd] = ctx.reshape(n_rows, hd).astype(bf16)

    attn_out = jnp.dot(ctx_ref[...], wo_ref[...], preferred_element_type=f32) + bo_ref[...]

    # ----- residual + LayerNorm 1 (f32) -----
    y = x + attn_out
    mu = jnp.mean(y, axis=-1, keepdims=True)
    var = jnp.mean((y - mu) ** 2, axis=-1, keepdims=True)
    y = (y - mu) * jax.lax.rsqrt(var + 1e-5) * ln1w_ref[...] + ln1b_ref[...]

    # ----- feed-forward: linear1 -> relu -> linear2 -----
    h1 = jnp.dot(y.astype(bf16), w1_ref[...], preferred_element_type=f32) + b1_ref[...]
    h1 = jnp.maximum(h1, 0.0)
    ff = jnp.dot(h1.astype(bf16), w2_ref[...], preferred_element_type=f32) + b2_ref[...]

    # ----- residual + LayerNorm 2 (f32) -----
    z = y + ff
    mu2 = jnp.mean(z, axis=-1, keepdims=True)
    var2 = jnp.mean((z - mu2) ** 2, axis=-1, keepdims=True)
    z = (z - mu2) * jax.lax.rsqrt(var2 + 1e-5) * ln2w_ref[...] + ln2b_ref[...]

    out_ref[...] = z.astype(out_ref.dtype)


# ----------------------------------------------------------------- hardware / tiling policy
def _device_kind():
    try:
        return jax.devices()[0].device_kind.lower()
    except Exception:
        return ""


def _vmem_capacity_bytes(kind):
    try:
        cap = int(pltpu.get_tpu_info().vmem_capacity_bytes)
        if cap > 0:
            return cap
    except Exception:
        pass
    if "v7" in kind:
        return 64 * 1024 * 1024
    return 128 * 1024 * 1024


def _tensorcores_per_device(kind):
    # v4 / v5p / v7x expose 2 TensorCores per JAX device (megacore / dual-TC);
    # v5e / v6e are single-TC, so extra grid steps there are pure serial overhead.
    return 2 if any(t in kind for t in ("v7", "v4", "v5p")) else 1


def _pick_block_b(B, S, D, dff, n_cores, act_budget_bytes):
    """Largest batch tile that (a) fits the activation VMEM budget, (b) keeps at least
    n_cores 'parallel' grid steps when possible, (c) respects the (8,128) tiling rule."""
    # rough live-VMEM bytes per activation row (double-buffered x/pos/out tiles,
    # f32 qk/v/h1 intermediates, bf16 ctx scratch, per-head score block, slack):
    per_row = 48 * D + 4 * dff + 8 * S
    max_bb = max(1, int(act_budget_bytes // (per_row * S)))
    divs = [d for d in range(1, B + 1) if B % d == 0]
    cands = [d for d in divs if d <= max_bb and B // d >= n_cores]
    if not cands:
        cands = [d for d in divs if d <= max_bb] or [1]
    block_b = max(cands)
    if block_b != B and (block_b * S) % 8 != 0:
        ok = [d for d in cands if (d * S) % 8 == 0]
        block_b = max(ok) if ok else B   # full-extent block always satisfies the rule
    return block_b


# ------------------------------------------------------------------- one-time weight packing
def pack_params(params, nhead):
    """One-time host-side packing (do NOT call per forward pass):
       * Q & K fused into one (D, 2D) weight, 1/sqrt(hd) folded into wq/bq,
       * all weights stored (in_dim, out_dim) and cast to bf16 (MXU inputs, f32 acc)."""
    D = params["wq"].shape[0]
    hd = D // nhead
    scale = 1.0 / math.sqrt(hd)
    f32, bf16 = jnp.float32, jnp.bfloat16
    return {
        "nhead": nhead,
        "d_model": D,
        "dim_feedforward": params["w1"].shape[0],
        "wqk": jnp.concatenate([(params["wq"] * scale).T, params["wk"].T], axis=1).astype(bf16),
        "bqk": jnp.concatenate([params["bq"] * scale, params["bk"]], axis=1).astype(f32),
        "wv": params["wv"].T.astype(bf16),
        "bv": params["bv"].astype(f32),
        "wo": params["wo"].T.astype(bf16),            # (D, D) full, in_dim x out_dim
        "bo": params["bo"].astype(f32),
        "ln1_w": params["ln1_w"].astype(f32),
        "ln1_b": params["ln1_b"].astype(f32),
        "w1": params["w1"].T.astype(bf16),
        "b1": params["b1"].astype(f32),
        "w2": params["w2"].T.astype(bf16),
        "b2": params["b2"].astype(f32),
        "ln2_w": params["ln2_w"].astype(f32),
        "ln2_b": params["ln2_b"].astype(f32),
    }


# --------------------------------------------------------------------------- pallas_call wrapper
def _make_call(S, B, D, dff, nhead, block_b, out_dtype, vmem_limit, single_buffer_weights):
    n_rows = block_b * S
    grid = (B // block_b,)

    if single_buffer_weights:
        # grid-invariant operands: one VMEM buffer is enough (halves weight footprint)
        def const(shape):
            return pl.BlockSpec(shape, lambda b, _s=shape: (0,) * len(_s),
                                pipeline_mode=pl.Buffered(1))
    else:
        def const(shape):
            return pl.BlockSpec(shape, lambda b, _s=shape: (0,) * len(_s))

    grid_spec = pltpu.PrefetchScalarGridSpec(
        num_scalar_prefetch=0,
        grid=grid,
        in_specs=[
            pl.BlockSpec((n_rows, D), lambda b: (b, 0)),        # x rows (f32)
            pl.BlockSpec((n_rows, D), lambda b: (b, 0)),        # pos rows (bf16)
            const((D, 2 * D)), const((1, 2 * D)),               # wqk, bqk
            const((D, D)), const((1, D)),                       # wv, bv
            const((D, D)), const((1, D)),                       # wo, bo
            const((1, D)), const((1, D)),                       # ln1 w, b
            const((D, dff)), const((1, dff)),                   # w1, b1
            const((dff, D)), const((1, D)),                     # w2, b2
            const((1, D)), const((1, D)),                       # ln2 w, b
        ],
        out_specs=pl.BlockSpec((n_rows, D), lambda b: (b, 0)),
        scratch_shapes=[pltpu.VMEM((n_rows, D), jnp.bfloat16)],  # per-head ctx assembly
    )
    return pl.pallas_call(
        partial(encoder_layer_kernel, nhead=nhead, seq_len=S),
        out_shape=jax.ShapeDtypeStruct((B * S, D), out_dtype),
        grid_spec=grid_spec,
        compiler_params=pltpu.CompilerParams(
            dimension_semantics=("parallel",),
            vmem_limit_bytes=int(vmem_limit)),
    )


def encoder_layer(src, pos, packed, *, block_b=None):
    """src, pos: (S, B, D) float32 (seq-first, nn.MultiheadAttention convention).
    `packed` comes from pack_params (call it once, outside any per-step jit).
    Returns (S, B, D)."""
    S, B, D = src.shape
    nhead = packed["nhead"]
    dff = packed["dim_feedforward"]
    assert D % nhead == 0

    kind = _device_kind()
    n_cores = _tensorcores_per_device(kind)
    vmem_cap = _vmem_capacity_bytes(kind)
    vmem_limit = max(32 << 20, min(int(vmem_cap * 0.75), vmem_cap - (16 << 20)))
    # weight VMEM (bf16 weights + f32 biases/LN); keep headroom in case of double buffering
    weight_bytes = 2 * (2 * D * D + 2 * D * D + 2 * D * dff) + 4 * (10 * D + 2 * dff)
    act_budget = vmem_limit - 2 * weight_bytes - (4 << 20)

    if block_b is None:
        block_b = _pick_block_b(B, S, D, dff, n_cores, act_budget)
    assert B % block_b == 0

    # single (S,B,D) -> (B*S, D) layout change; kernel works on 2-D row slabs.
    x2 = jnp.transpose(src, (1, 0, 2)).reshape(B * S, D)
    p2 = jnp.transpose(pos, (1, 0, 2)).reshape(B * S, D).astype(jnp.bfloat16)

    args = (x2, p2,
            packed["wqk"], packed["bqk"],
            packed["wv"], packed["bv"],
            packed["wo"], packed["bo"],
            packed["ln1_w"], packed["ln1_b"],
            packed["w1"], packed["b1"],
            packed["w2"], packed["b2"],
            packed["ln2_w"], packed["ln2_b"])

    try:
        call = _make_call(S, B, D, dff, nhead, block_b, src.dtype, vmem_limit,
                          single_buffer_weights=True)
        out2 = jax.block_until_ready(call(*args))
    except Exception:
        # pipeline_mode=pl.Buffered(1) unsupported on this build -> default buffering.
        call = _make_call(S, B, D, dff, nhead, block_b, src.dtype, vmem_limit,
                          single_buffer_weights=False)
        out2 = call(*args)

    return out2.reshape(B, S, D).transpose(1, 0, 2)   # back to (S, B, D)


# ------------------------------------------------------------------------------ reference / demo
def reference_encoder_layer(src, pos, params, *, nhead):
    """Pure-JAX f32 reference of the same forward pass (seq-first)."""
    S, B, D = src.shape
    hd = D // nhead
    x = jnp.transpose(src, (1, 0, 2)).astype(jnp.float32)  # (B,S,D)
    p = jnp.transpose(pos, (1, 0, 2)).astype(jnp.float32)
    qk = x + p
    q = qk @ params["wq"].T + params["bq"]
    k = qk @ params["wk"].T + params["bk"]
    v = x @ params["wv"].T + params["bv"]
    qh = q.reshape(B, S, nhead, hd).transpose(0, 2, 1, 3)
    kh = k.reshape(B, S, nhead, hd).transpose(0, 2, 1, 3)
    vh = v.reshape(B, S, nhead, hd).transpose(0, 2, 1, 3)
    scores = jnp.einsum("bhqd,bhkd->bhqk", qh, kh) / math.sqrt(hd)
    attn = jax.nn.softmax(scores, axis=-1)
    ctx = jnp.einsum("bhqk,bhkd->bhqd", attn, vh).transpose(0, 2, 1, 3).reshape(B, S, D)
    attn_out = ctx @ params["wo"].T + params["bo"]

    def ln(t, w, b):
        mu = jnp.mean(t, axis=-1, keepdims=True)
        var = jnp.mean((t - mu) ** 2, axis=-1, keepdims=True)
        return (t - mu) * jax.lax.rsqrt(var + 1e-5) * w + b

    y = ln(x + attn_out, params["ln1_w"], params["ln1_b"])
    ff = jnp.maximum(y @ params["w1"].T + params["b1"], 0.0) @ params["w2"].T + params["b2"]
    z = ln(y + ff, params["ln2_w"], params["ln2_b"])
    return z.transpose(1, 0, 2)


def init_params(key, d_model, nhead, dim_feedforward):
    ks = jax.random.split(key, 10)
    s = 0.02
    D, F = d_model, dim_feedforward
    return {
        "wq": s * jax.random.normal(ks[0], (D, D), jnp.float32),
        "wk": s * jax.random.normal(ks[1], (D, D), jnp.float32),
        "wv": s * jax.random.normal(ks[2], (D, D), jnp.float32),
        "bq": s * jax.random.normal(ks[3], (1, D), jnp.float32),
        "bk": s * jax.random.normal(ks[4], (1, D), jnp.float32),
        "bv": s * jax.random.normal(ks[5], (1, D), jnp.float32),
        "wo": s * jax.random.normal(ks[6], (D, D), jnp.float32),
        "bo": jnp.zeros((1, D), jnp.float32),
        "ln1_w": jnp.ones((1, D), jnp.float32),
        "ln1_b": jnp.zeros((1, D), jnp.float32),
        "w1": s * jax.random.normal(ks[7], (F, D), jnp.float32),
        "b1": s * jax.random.normal(ks[8], (1, F), jnp.float32),
        "w2": s * jax.random.normal(ks[9], (D, F), jnp.float32),
        "b2": jnp.zeros((1, D), jnp.float32),
        "ln2_w": jnp.ones((1, D), jnp.float32),
        "ln2_b": jnp.zeros((1, D), jnp.float32),
    }


if __name__ == "__main__":
    # Small shapes consistent with the module: seq=8, batch=2, d_model=32, nhead=4, dff=64
    S, B, D, NHEAD, DFF = 8, 2, 32, 4, 64
    key = jax.random.PRNGKey(0)
    k_src, k_pos, k_par = jax.random.split(key, 3)

    src = jax.random.normal(k_src, (S, B, D), jnp.float32)
    pos = jax.random.normal(k_pos, (S, B, D), jnp.float32)
    params = init_params(k_par, D, NHEAD, DFF)
    packed = pack_params(params, NHEAD)          # one-time host-side packing

    out = jax.block_until_ready(encoder_layer(src, pos, packed))
    ref = jax.block_until_ready(reference_encoder_layer(src, pos, params, nhead=NHEAD))

    # bf16 MXU inputs / bf16 pos (f32 accumulation) + approx reciprocal -> looser tolerance
    np.testing.assert_allclose(np.asarray(out), np.asarray(ref), rtol=2e-2, atol=2e-2)

    print("KERNEL_OK")
</pallas_src>

<mosaic_0001>
module attributes {stable_mosaic.version = 11 : i64} {
  func.func @encoder_layer_kernel(%arg0: i32, %arg1: memref<16x32xf32, #tpu.memory_space<vmem>>, %arg2: memref<16x32xbf16, #tpu.memory_space<vmem>>, %arg3: memref<32x64xbf16, #tpu.memory_space<vmem>>, %arg4: memref<1x64xf32, #tpu.memory_space<vmem>>, %arg5: memref<32x32xbf16, #tpu.memory_space<vmem>>, %arg6: memref<1x32xf32, #tpu.memory_space<vmem>>, %arg7: memref<32x32xbf16, #tpu.memory_space<vmem>>, %arg8: memref<1x32xf32, #tpu.memory_space<vmem>>, %arg9: memref<1x32xf32, #tpu.memory_space<vmem>>, %arg10: memref<1x32xf32, #tpu.memory_space<vmem>>, %arg11: memref<32x64xbf16, #tpu.memory_space<vmem>>, %arg12: memref<1x64xf32, #tpu.memory_space<vmem>>, %arg13: memref<64x32xbf16, #tpu.memory_space<vmem>>, %arg14: memref<1x32xf32, #tpu.memory_space<vmem>>, %arg15: memref<1x32xf32, #tpu.memory_space<vmem>>, %arg16: memref<1x32xf32, #tpu.memory_space<vmem>>, %arg17: memref<16x32xf32, #tpu.memory_space<vmem>>, %arg18: memref<16x32xbf16, #tpu.memory_space<vmem>>) attributes {dimension_semantics = [#tpu.dimension_semantics<parallel>], iteration_bounds = array<i64: 1>, scalar_prefetch = 0 : i64, scratch_operands = 1 : i64, tpu.core_type = #tpu.core_type<tc>, window_params = [{transform_indices = @transform_0, window_bounds = array<i64: 16, 32>}, {transform_indices = @transform_1, window_bounds = array<i64: 16, 32>}, {pipeline_mode = #tpu.pipeline_mode<synchronous>, transform_indices = @transform_2, window_bounds = array<i64: 32, 64>}, {pipeline_mode = #tpu.pipeline_mode<synchronous>, transform_indices = @transform_3, window_bounds = array<i64: 1, 64>}, {pipeline_mode = #tpu.pipeline_mode<synchronous>, transform_indices = @transform_4, window_bounds = array<i64: 32, 32>}, {pipeline_mode = #tpu.pipeline_mode<synchronous>, transform_indices = @transform_5, window_bounds = array<i64: 1, 32>}, {pipeline_mode = #tpu.pipeline_mode<synchronous>, transform_indices = @transform_6, window_bounds = array<i64: 32, 32>}, {pipeline_mode = #tpu.pipeline_mode<synchronous>, transform_indices = @transform_7, window_bounds = array<i64: 1, 32>}, {pipeline_mode = #tpu.pipeline_mode<synchronous>, transform_indices = @transform_8, window_bounds = array<i64: 1, 32>}, {pipeline_mode = #tpu.pipeline_mode<synchronous>, transform_indices = @transform_9, window_bounds = array<i64: 1, 32>}, {pipeline_mode = #tpu.pipeline_mode<synchronous>, transform_indices = @transform_10, window_bounds = array<i64: 32, 64>}, {pipeline_mode = #tpu.pipeline_mode<synchronous>, transform_indices = @transform_11, window_bounds = array<i64: 1, 64>}, {pipeline_mode = #tpu.pipeline_mode<synchronous>, transform_indices = @transform_12, window_bounds = array<i64: 64, 32>}, {pipeline_mode = #tpu.pipeline_mode<synchronous>, transform_indices = @transform_13, window_bounds = array<i64: 1, 32>}, {pipeline_mode = #tpu.pipeline_mode<synchronous>, transform_indices = @transform_14, window_bounds = array<i64: 1, 32>}, {pipeline_mode = #tpu.pipeline_mode<synchronous>, transform_indices = @transform_15, window_bounds = array<i64: 1, 32>}, {transform_indices = @transform_16, window_bounds = array<i64: 16, 32>}]} {
    %c0 = arith.constant 0 : index
    %c0_0 = arith.constant 0 : index
    %0 = vector.load %arg1[%c0, %c0_0] : memref<16x32xf32, #tpu.memory_space<vmem>>, vector<16x32xf32>
    %c0_1 = arith.constant 0 : index
    %c0_2 = arith.constant 0 : index
    %1 = vector.load %arg2[%c0_1, %c0_2] : memref<16x32xbf16, #tpu.memory_space<vmem>>, vector<16x32xbf16>
    %2 = arith.extf %1 : vector<16x32xbf16> to vector<16x32xf32>
    %3 = arith.addf %0, %2 : vector<16x32xf32>
    %4 = arith.truncf %3 : vector<16x32xf32> to vector<16x32xbf16>
    %c0_3 = arith.constant 0 : index
    %c0_4 = arith.constant 0 : index
    %5 = vector.load %arg3[%c0_3, %c0_4] : memref<32x64xbf16, #tpu.memory_space<vmem>>, vector<32x64xbf16>
    %cst = arith.constant dense<0.000000e+00> : vector<16x64xf32>
    %6 = tpu.matmul %4, %5, %cst {dimension_numbers = #tpu.dot_dimension_numbers<[1], [0], [0], [1], [0, 0, 1, 1], [], []>} : vector<16x32xbf16>, vector<32x64xbf16>, vector<16x64xf32> -> vector<16x64xf32>
    %c0_5 = arith.constant 0 : index
    %c0_6 = arith.constant 0 : index
    %7 = vector.load %arg4[%c0_5, %c0_6] : memref<1x64xf32, #tpu.memory_space<vmem>>, vector<1x64xf32>
    %8 = vector.broadcast %7 : vector<1x64xf32> to vector<16x64xf32>
    %9 = arith.addf %6, %8 : vector<16x64xf32>
    %10 = arith.truncf %0 : vector<16x32xf32> to vector<16x32xbf16>
    %c0_7 = arith.constant 0 : index
    %c0_8 = arith.constant 0 : index
    %11 = vector.load %arg5[%c0_7, %c0_8] : memref<32x32xbf16, #tpu.memory_space<vmem>>, vector<32x32xbf16>
    %cst_9 = arith.constant dense<0.000000e+00> : vector<16x32xf32>
    %12 = tpu.matmul %10, %11, %cst_9 {dimension_numbers = #tpu.dot_dimension_numbers<[1], [0], [0], [1], [0, 0, 1, 1], [], []>} : vector<16x32xbf16>, vector<32x32xbf16>, vector<16x32xf32> -> vector<16x32xf32>
    %c0_10 = arith.constant 0 : index
    %c0_11 = arith.constant 0 : index
    %13 = vector.load %arg6[%c0_10, %c0_11] : memref<1x32xf32, #tpu.memory_space<vmem>>, vector<1x32xf32>
    %14 = vector.broadcast %13 : vector<1x32xf32> to vector<16x32xf32>
    %15 = arith.addf %12, %14 : vector<16x32xf32>
    %16 = vector.extract_strided_slice %9 {offsets = [0, 0], sizes = [16, 8], strides = [1, 1]} : vector<16x64xf32> to vector<16x8xf32>
    %17 = vector.shape_cast %16 : vector<16x8xf32> to vector<2x8x8xf32>
    %18 = arith.truncf %17 : vector<2x8x8xf32> to vector<2x8x8xbf16>
    %19 = vector.extract_strided_slice %9 {offsets = [0, 32], sizes = [16, 8], strides = [1, 1]} : vector<16x64xf32> to vector<16x8xf32>
    %20 = vector.shape_cast %19 : vector<16x8xf32> to vector<2x8x8xf32>
    %21 = arith.truncf %20 : vector<2x8x8xf32> to vector<2x8x8xbf16>
    %22 = vector.extract_strided_slice %15 {offsets = [0, 0], sizes = [16, 8], strides = [1, 1]} : vector<16x32xf32> to vector<16x8xf32>
    %23 = vector.shape_cast %22 : vector<16x8xf32> to vector<2x8x8xf32>
    %24 = arith.truncf %23 : vector<2x8x8xf32> to vector<2x8x8xbf16>
    "tpu.trace_start"() <{level = 10 : i32, message = "bqd,bkd->bqk"}> : () -> ()
    %cst_12 = arith.constant dense<0.000000e+00> : vector<2x8x8xf32>
    %25 = tpu.matmul %18, %21, %cst_12 {dimension_numbers = #tpu.dot_dimension_numbers<[2], [2], [1], [1], [0, 0, 0, 1, 1, 1], [0], [0]>} : vector<2x8x8xbf16>, vector<2x8x8xbf16>, vector<2x8x8xf32> -> vector<2x8x8xf32>
    "tpu.trace_stop"() : () -> ()
    %cst_13 = arith.constant dense<0xFF800000> : vector<2x8xf32>
    %26 = vector.multi_reduction <maximumf>, %25, %cst_13 [2] : vector<2x8x8xf32> to vector<2x8xf32>
    %27 = vector.shape_cast %26 : vector<2x8xf32> to vector<2x8x1xf32>
    %28 = vector.broadcast %27 : vector<2x8x1xf32> to vector<2x8x8xf32>
    %29 = arith.subf %25, %28 : vector<2x8x8xf32>
    %30 = math.exp %29 : vector<2x8x8xf32>
    %cst_14 = arith.constant dense<0.000000e+00> : vector<2x8xf32>
    %31 = vector.multi_reduction <add>, %30, %cst_14 [2] : vector<2x8x8xf32> to vector<2x8xf32>
    %32 = vector.shape_cast %31 : vector<2x8xf32> to vector<2x8x1xf32>
    %33 = tpu.reciprocal %32 {approx = true} : vector<2x8x1xf32> -> vector<2x8x1xf32>
    %34 = vector.broadcast %33 : vector<2x8x1xf32> to vector<2x8x8xf32>
    %35 = arith.mulf %30, %34 : vector<2x8x8xf32>
    %36 = arith.truncf %35 : vector<2x8x8xf32> to vector<2x8x8xbf16>
    "tpu.trace_start"() <{level = 10 : i32, message = "bqk,bkd->bqd"}> : () -> ()
    %cst_15 = arith.constant dense<0.000000e+00> : vector<2x8x8xf32>
    %37 = tpu.matmul %36, %24, %cst_15 {dimension_numbers = #tpu.dot_dimension_numbers<[2], [1], [1], [2], [0, 0, 0, 1, 1, 2], [0], [0]>} : vector<2x8x8xbf16>, vector<2x8x8xbf16>, vector<2x8x8xf32> -> vector<2x8x8xf32>
    "tpu.trace_stop"() : () -> ()
    %38 = vector.shape_cast %37 : vector<2x8x8xf32> to vector<16x8xf32>
    %39 = arith.truncf %38 : vector<16x8xf32> to vector<16x8xbf16>
    %c0_16 = arith.constant 0 : index
    %c0_17 = arith.constant 0 : index
    %40 = vector.load %arg18[%c0_16, %c0_17] : memref<16x32xbf16, #tpu.memory_space<vmem>>, vector<16x8xbf16>
    tpu.vector_store %arg18[%c0_16, %c0_17], %39 {strides = array<i32>} : memref<16x32xbf16, #tpu.memory_space<vmem>>, vector<16x8xbf16>,
    %41 = vector.extract_strided_slice %9 {offsets = [0, 8], sizes = [16, 8], strides = [1, 1]} : vector<16x64xf32> to vector<16x8xf32>
    %42 = vector.shape_cast %41 : vector<16x8xf32> to vector<2x8x8xf32>
    %43 = arith.truncf %42 : vector<2x8x8xf32> to vector<2x8x8xbf16>
    %44 = vector.extract_strided_slice %9 {offsets = [0, 40], sizes = [16, 8], strides = [1, 1]} : vector<16x64xf32> to vector<16x8xf32>
    %45 = vector.shape_cast %44 : vector<16x8xf32> to vector<2x8x8xf32>
    %46 = arith.truncf %45 : vector<2x8x8xf32> to vector<2x8x8xbf16>
    %47 = vector.extract_strided_slice %15 {offsets = [0, 8], sizes = [16, 8], strides = [1, 1]} : vector<16x32xf32> to vector<16x8xf32>
    %48 = vector.shape_cast %47 : vector<16x8xf32> to vector<2x8x8xf32>
    %49 = arith.truncf %48 : vector<2x8x8xf32> to vector<2x8x8xbf16>
    "tpu.trace_start"() <{level = 10 : i32, message = "bqd,bkd->bqk"}> : () -> ()
    %cst_18 = arith.constant dense<0.000000e+00> : vector<2x8x8xf32>
    %50 = tpu.matmul %43, %46, %cst_18 {dimension_numbers = #tpu.dot_dimension_numbers<[2], [2], [1], [1], [0, 0, 0, 1, 1, 1], [0], [0]>} : vector<2x8x8xbf16>, vector<2x8x8xbf16>, vector<2x8x8xf32> -> vector<2x8x8xf32>
    "tpu.trace_stop"() : () -> ()
    %cst_19 = arith.constant dense<0xFF800000> : vector<2x8xf32>
    %51 = vector.multi_reduction <maximumf>, %50, %cst_19 [2] : vector<2x8x8xf32> to vector<2x8xf32>
    %52 = vector.shape_cast %51 : vector<2x8xf32> to vector<2x8x1xf32>
    %53 = vector.broadcast %52 : vector<2x8x1xf32> to vector<2x8x8xf32>
    %54 = arith.subf %50, %53 : vector<2x8x8xf32>
    %55 = math.exp %54 : vector<2x8x8xf32>
    %cst_20 = arith.constant dense<0.000000e+00> : vector<2x8xf32>
    %56 = vector.multi_reduction <add>, %55, %cst_20 [2] : vector<2x8x8xf32> to vector<2x8xf32>
    %57 = vector.shape_cast %56 : vector<2x8xf32> to vector<2x8x1xf32>
    %58 = tpu.reciprocal %57 {approx = true} : vector<2x8x1xf32> -> vector<2x8x1xf32>
    %59 = vector.broadcast %58 : vector<2x8x1xf32> to vector<2x8x8xf32>
    %60 = arith.mulf %55, %59 : vector<2x8x8xf32>
    %61 = arith.truncf %60 : vector<2x8x8xf32> to vector<2x8x8xbf16>
    "tpu.trace_start"() <{level = 10 : i32, message = "bqk,bkd->bqd"}> : () -> ()
    %cst_21 = arith.constant dense<0.000000e+00> : vector<2x8x8xf32>
    %62 = tpu.matmul %61, %49, %cst_21 {dimension_numbers = #tpu.dot_dimension_numbers<[2], [1], [1], [2], [0, 0, 0, 1, 1, 2], [0], [0]>} : vector<2x8x8xbf16>, vector<2x8x8xbf16>, vector<2x8x8xf32> -> vector<2x8x8xf32>
    "tpu.trace_stop"() : () -> ()
    %63 = vector.shape_cast %62 : vector<2x8x8xf32> to vector<16x8xf32>
    %64 = arith.truncf %63 : vector<16x8xf32> to vector<16x8xbf16>
    %c0_22 = arith.constant 0 : index
    %c8 = arith.constant 8 : index
    %65 = vector.load %arg18[%c0_22, %c8] : memref<16x32xbf16, #tpu.memory_space<vmem>>, vector<16x8xbf16>
    tpu.vector_store %arg18[%c0_22, %c8], %64 {strides = array<i32>} : memref<16x32xbf16, #tpu.memory_space<vmem>>, vector<16x8xbf16>,
    %66 = vector.extract_strided_slice %9 {offsets = [0, 16], sizes = [16, 8], strides = [1, 1]} : vector<16x64xf32> to vector<16x8xf32>
    %67 = vector.shape_cast %66 : vector<16x8xf32> to vector<2x8x8xf32>
    %68 = arith.truncf %67 : vector<2x8x8xf32> to vector<2x8x8xbf16>
    %69 = vector.extract_strided_slice %9 {offsets = [0, 48], sizes = [16, 8], strides = [1, 1]} : vector<16x64xf32> to vector<16x8xf32>
    %70 = vector.shape_cast %69 : vector<16x8xf32> to vector<2x8x8xf32>
    %71 = arith.truncf %70 : vector<2x8x8xf32> to vector<2x8x8xbf16>
    %72 = vector.extract_strided_slice %15 {offsets = [0, 16], sizes = [16, 8], strides = [1, 1]} : vector<16x32xf32> to vector<16x8xf32>
    %73 = vector.shape_cast %72 : vector<16x8xf32> to vector<2x8x8xf32>
    %74 = arith.truncf %73 : vector<2x8x8xf32> to vector<2x8x8xbf16>
    "tpu.trace_start"() <{level = 10 : i32, message = "bqd,bkd->bqk"}> : () -> ()
    %cst_23 = arith.constant dense<0.000000e+00> : vector<2x8x8xf32>
    %75 = tpu.matmul %68, %71, %cst_23 {dimension_numbers = #tpu.dot_dimension_numbers<[2], [2], [1], [1], [0, 0, 0, 1, 1, 1], [0], [0]>} : vector<2x8x8xbf16>, vector<2x8x8xbf16>, vector<2x8x8xf32> -> vector<2x8x8xf32>
    "tpu.trace_stop"() : () -> ()
    %cst_24 = arith.constant dense<0xFF800000> : vector<2x8xf32>
    %76 = vector.multi_reduction <maximumf>, %75, %cst_24 [2] : vector<2x8x8xf32> to vector<2x8xf32>
    %77 = vector.shape_cast %76 : vector<2x8xf32> to vector<2x8x1xf32>
    %78 = vector.broadcast %77 : vector<2x8x1xf32> to vector<2x8x8xf32>
    %79 = arith.subf %75, %78 : vector<2x8x8xf32>
    %80 = math.exp %79 : vector<2x8x8xf32>
    %cst_25 = arith.constant dense<0.000000e+00> : vector<2x8xf32>
    %81 = vector.multi_reduction <add>, %80, %cst_25 [2] : vector<2x8x8xf32> to vector<2x8xf32>
    %82 = vector.shape_cast %81 : vector<2x8xf32> to vector<2x8x1xf32>
    %83 = tpu.reciprocal %82 {approx = true} : vector<2x8x1xf32> -> vector<2x8x1xf32>
    %84 = vector.broadcast %83 : vector<2x8x1xf32> to vector<2x8x8xf32>
    %85 = arith.mulf %80, %84 : vector<2x8x8xf32>
    %86 = arith.truncf %85 : vector<2x8x8xf32> to vector<2x8x8xbf16>
    "tpu.trace_start"() <{level = 10 : i32, message = "bqk,bkd->bqd"}> : () -> ()
    %cst_26 = arith.constant dense<0.000000e+00> : vector<2x8x8xf32>
    %87 = tpu.matmul %86, %74, %cst_26 {dimension_numbers = #tpu.dot_dimension_numbers<[2], [1], [1], [2], [0, 0, 0, 1, 1, 2], [0], [0]>} : vector<2x8x8xbf16>, vector<2x8x8xbf16>, vector<2x8x8xf32> -> vector<2x8x8xf32>
    "tpu.trace_stop"() : () -> ()
    %88 = vector.shape_cast %87 : vector<2x8x8xf32> to vector<16x8xf32>
    %89 = arith.truncf %88 : vector<16x8xf32> to vector<16x8xbf16>
    %c0_27 = arith.constant 0 : index
    %c16 = arith.constant 16 : index
    %90 = vector.load %arg18[%c0_27, %c16] : memref<16x32xbf16, #tpu.memory_space<vmem>>, vector<16x8xbf16>
    tpu.vector_store %arg18[%c0_27, %c16], %89 {strides = array<i32>} : memref<16x32xbf16, #tpu.memory_space<vmem>>, vector<16x8xbf16>,
    %91 = vector.extract_strided_slice %9 {offsets = [0, 24], sizes = [16, 8], strides = [1, 1]} : vector<16x64xf32> to vector<16x8xf32>
    %92 = vector.shape_cast %91 : vector<16x8xf32> to vector<2x8x8xf32>
    %93 = arith.truncf %92 : vector<2x8x8xf32> to vector<2x8x8xbf16>
    %94 = vector.extract_strided_slice %9 {offsets = [0, 56], sizes = [16, 8], strides = [1, 1]} : vector<16x64xf32> to vector<16x8xf32>
    %95 = vector.shape_cast %94 : vector<16x8xf32> to vector<2x8x8xf32>
    %96 = arith.truncf %95 : vector<2x8x8xf32> to vector<2x8x8xbf16>
    %97 = vector.extract_strided_slice %15 {offsets = [0, 24], sizes = [16, 8], strides = [1, 1]} : vector<16x32xf32> to vector<16x8xf32>
    %98 = vector.shape_cast %97 : vector<16x8xf32> to vector<2x8x8xf32>
    %99 = arith.truncf %98 : vector<2x8x8xf32> to vector<2x8x8xbf16>
    "tpu.trace_start"() <{level = 10 : i32, message = "bqd,bkd->bqk"}> : () -> ()
    %cst_28 = arith.constant dense<0.000000e+00> : vector<2x8x8xf32>
    %100 = tpu.matmul %93, %96, %cst_28 {dimension_numbers = #tpu.dot_dimension_numbers<[2], [2], [1], [1], [0, 0, 0, 1, 1, 1], [0], [0]>} : vector<2x8x8xbf16>, vector<2x8x8xbf16>, vector<2x8x8xf32> -> vector<2x8x8xf32>
    "tpu.trace_stop"() : () -> ()
    %cst_29 = arith.constant dense<0xFF800000> : vector<2x8xf32>
    %101 = vector.multi_reduction <maximumf>, %100, %cst_29 [2] : vector<2x8x8xf32> to vector<2x8xf32>
    %102 = vector.shape_cast %101 : vector<2x8xf32> to vector<2x8x1xf32>
    %103 = vector.broadcast %102 : vector<2x8x1xf32> to vector<2x8x8xf32>
    %104 = arith.subf %100, %103 : vector<2x8x8xf32>
    %105 = math.exp %104 : vector<2x8x8xf32>
    %cst_30 = arith.constant dense<0.000000e+00> : vector<2x8xf32>
    %106 = vector.multi_reduction <add>, %105, %cst_30 [2] : vector<2x8x8xf32> to vector<2x8xf32>
    %107 = vector.shape_cast %106 : vector<2x8xf32> to vector<2x8x1xf32>
    %108 = tpu.reciprocal %107 {approx = true} : vector<2x8x1xf32> -> vector<2x8x1xf32>
    %109 = vector.broadcast %108 : vector<2x8x1xf32> to vector<2x8x8xf32>
    %110 = arith.mulf %105, %109 : vector<2x8x8xf32>
    %111 = arith.truncf %110 : vector<2x8x8xf32> to vector<2x8x8xbf16>
    "tpu.trace_start"() <{level = 10 : i32, message = "bqk,bkd->bqd"}> : () -> ()
    %cst_31 = arith.constant dense<0.000000e+00> : vector<2x8x8xf32>
    %112 = tpu.matmul %111, %99, %cst_31 {dimension_numbers = #tpu.dot_dimension_numbers<[2], [1], [1], [2], [0, 0, 0, 1, 1, 2], [0], [0]>} : vector<2x8x8xbf16>, vector<2x8x8xbf16>, vector<2x8x8xf32> -> vector<2x8x8xf32>
    "tpu.trace_stop"() : () -> ()
    %113 = vector.shape_cast %112 : vector<2x8x8xf32> to vector<16x8xf32>
    %114 = arith.truncf %113 : vector<16x8xf32> to vector<16x8xbf16>
    %c0_32 = arith.constant 0 : index
    %c24 = arith.constant 24 : index
    %115 = vector.load %arg18[%c0_32, %c24] : memref<16x32xbf16, #tpu.memory_space<vmem>>, vector<16x8xbf16>
    tpu.vector_store %arg18[%c0_32, %c24], %114 {strides = array<i32>} : memref<16x32xbf16, #tpu.memory_space<vmem>>, vector<16x8xbf16>,
    %c0_33 = arith.constant 0 : index
    %c0_34 = arith.constant 0 : index
    %116 = vector.load %arg18[%c0_33, %c0_34] : memref<16x32xbf16, #tpu.memory_space<vmem>>, vector<16x32xbf16>
    %c0_35 = arith.constant 0 : index
    %c0_36 = arith.constant 0 : index
    %117 = vector.load %arg7[%c0_35, %c0_36] : memref<32x32xbf16, #tpu.memory_space<vmem>>, vector<32x32xbf16>
    %cst_37 = arith.constant dense<0.000000e+00> : vector<16x32xf32>
    %118 = tpu.matmul %116, %117, %cst_37 {dimension_numbers = #tpu.dot_dimension_numbers<[1], [0], [0], [1], [0, 0, 1, 1], [], []>} : vector<16x32xbf16>, vector<32x32xbf16>, vector<16x32xf32> -> vector<16x32xf32>
    %c0_38 = arith.constant 0 : index
    %c0_39 = arith.constant 0 : index
    %119 = vector.load %arg8[%c0_38, %c0_39] : memref<1x32xf32, #tpu.memory_space<vmem>>, vector<1x32xf32>
    %120 = vector.broadcast %119 : vector<1x32xf32> to vector<16x32xf32>
    %121 = arith.addf %118, %120 : vector<16x32xf32>
    %122 = arith.addf %0, %121 : vector<16x32xf32>
    %cst_40 = arith.constant dense<0.000000e+00> : vector<16xf32>
    %123 = vector.multi_reduction <add>, %122, %cst_40 [1] : vector<16x32xf32> to vector<16xf32>
    %124 = vector.shape_cast %123 : vector<16xf32> to vector<16x1xf32>
    %cst_41 = arith.constant 3.200000e+01 : f32
    %125 = vector.broadcast %cst_41 : f32 to vector<16x1xf32>
    %126 = arith.divf %124, %125 : vector<16x1xf32>
    %127 = vector.broadcast %126 : vector<16x1xf32> to vector<16x32xf32>
    %128 = arith.subf %122, %127 : vector<16x32xf32>
    %129 = arith.mulf %128, %128 : vector<16x32xf32>
    %cst_42 = arith.constant dense<0.000000e+00> : vector<16xf32>
    %130 = vector.multi_reduction <add>, %129, %cst_42 [1] : vector<16x32xf32> to vector<16xf32>
    %131 = vector.shape_cast %130 : vector<16xf32> to vector<16x1xf32>
    %cst_43 = arith.constant 3.200000e+01 : f32
    %132 = vector.broadcast %cst_43 : f32 to vector<16x1xf32>
    %133 = arith.divf %131, %132 : vector<16x1xf32>
    %134 = vector.broadcast %126 : vector<16x1xf32> to vector<16x32xf32>
    %135 = arith.subf %122, %134 : vector<16x32xf32>
    %cst_44 = arith.constant 9.99999974E-6 : f32
    %136 = vector.broadcast %cst_44 : f32 to vector<16x1xf32>
    %137 = arith.addf %133, %136 : vector<16x1xf32>
    %138 = math.rsqrt %137 : vector<16x1xf32>
    %139 = vector.broadcast %138 : vector<16x1xf32> to vector<16x32xf32>
    %140 = arith.mulf %135, %139 : vector<16x32xf32>
    %c0_45 = arith.constant 0 : index
    %c0_46 = arith.constant 0 : index
    %141 = vector.load %arg9[%c0_45, %c0_46] : memref<1x32xf32, #tpu.memory_space<vmem>>, vector<1x32xf32>
    %142 = vector.broadcast %141 : vector<1x32xf32> to vector<16x32xf32>
    %143 = arith.mulf %140, %142 : vector<16x32xf32>
    %c0_47 = arith.constant 0 : index
    %c0_48 = arith.constant 0 : index
    %144 = vector.load %arg10[%c0_47, %c0_48] : memref<1x32xf32, #tpu.memory_space<vmem>>, vector<1x32xf32>
    %145 = vector.broadcast %144 : vector<1x32xf32> to vector<16x32xf32>
    %146 = arith.addf %143, %145 : vector<16x32xf32>
    %147 = arith.truncf %146 : vector<16x32xf32> to vector<16x32xbf16>
    %c0_49 = arith.constant 0 : index
    %c0_50 = arith.constant 0 : index
    %148 = vector.load %arg11[%c0_49, %c0_50] : memref<32x64xbf16, #tpu.memory_space<vmem>>, vector<32x64xbf16>
    %cst_51 = arith.constant dense<0.000000e+00> : vector<16x64xf32>
    %149 = tpu.matmul %147, %148, %cst_51 {dimension_numbers = #tpu.dot_dimension_numbers<[1], [0], [0], [1], [0, 0, 1, 1], [], []>} : vector<16x32xbf16>, vector<32x64xbf16>, vector<16x64xf32> -> vector<16x64xf32>
    %c0_52 = arith.constant 0 : index
    %c0_53 = arith.constant 0 : index
    %150 = vector.load %arg12[%c0_52, %c0_53] : memref<1x64xf32, #tpu.memory_space<vmem>>, vector<1x64xf32>
    %151 = vector.broadcast %150 : vector<1x64xf32> to vector<16x64xf32>
    %152 = arith.addf %149, %151 : vector<16x64xf32>
    %cst_54 = arith.constant 0.000000e+00 : f32
    %153 = vector.broadcast %cst_54 : f32 to vector<16x64xf32>
    %154 = arith.maximumf %152, %153 : vector<16x64xf32>
    %155 = arith.truncf %154 : vector<16x64xf32> to vector<16x64xbf16>
    %c0_55 = arith.constant 0 : index
    %c0_56 = arith.constant 0 : index
    %156 = vector.load %arg13[%c0_55, %c0_56] : memref<64x32xbf16, #tpu.memory_space<vmem>>, vector<64x32xbf16>
    %cst_57 = arith.constant dense<0.000000e+00> : vector<16x32xf32>
    %157 = tpu.matmul %155, %156, %cst_57 {dimension_numbers = #tpu.dot_dimension_numbers<[1], [0], [0], [1], [0, 0, 1, 1], [], []>} : vector<16x64xbf16>, vector<64x32xbf16>, vector<16x32xf32> -> vector<16x32xf32>
    %c0_58 = arith.constant 0 : index
    %c0_59 = arith.constant 0 : index
    %158 = vector.load %arg14[%c0_58, %c0_59] : memref<1x32xf32, #tpu.memory_space<vmem>>, vector<1x32xf32>
    %159 = vector.broadcast %158 : vector<1x32xf32> to vector<16x32xf32>
    %160 = arith.addf %157, %159 : vector<16x32xf32>
    %161 = arith.addf %146, %160 : vector<16x32xf32>
    %cst_60 = arith.constant dense<0.000000e+00> : vector<16xf32>
    %162 = vector.multi_reduction <add>, %161, %cst_60 [1] : vector<16x32xf32> to vector<16xf32>
    %163 = vector.shape_cast %162 : vector<16xf32> to vector<16x1xf32>
    %cst_61 = arith.constant 3.200000e+01 : f32
    %164 = vector.broadcast %cst_61 : f32 to vector<16x1xf32>
    %165 = arith.divf %163, %164 : vector<16x1xf32>
    %166 = vector.broadcast %165 : vector<16x1xf32> to vector<16x32xf32>
    %167 = arith.subf %161, %166 : vector<16x32xf32>
    %168 = arith.mulf %167, %167 : vector<16x32xf32>
    %cst_62 = arith.constant dense<0.000000e+00> : vector<16xf32>
    %169 = vector.multi_reduction <add>, %168, %cst_62 [1] : vector<16x32xf32> to vector<16xf32>
    %170 = vector.shape_cast %169 : vector<16xf32> to vector<16x1xf32>
    %cst_63 = arith.constant 3.200000e+01 : f32
    %171 = vector.broadcast %cst_63 : f32 to vector<16x1xf32>
    %172 = arith.divf %170, %171 : vector<16x1xf32>
    %173 = vector.broadcast %165 : vector<16x1xf32> to vector<16x32xf32>
    %174 = arith.subf %161, %173 : vector<16x32xf32>
    %cst_64 = arith.constant 9.99999974E-6 : f32
    %175 = vector.broadcast %cst_64 : f32 to vector<16x1xf32>
    %176 = arith.addf %172, %175 : vector<16x1xf32>
    %177 = math.rsqrt %176 : vector<16x1xf32>
    %178 = vector.broadcast %177 : vector<16x1xf32> to vector<16x32xf32>
    %179 = arith.mulf %174, %178 : vector<16x32xf32>
    %c0_65 = arith.constant 0 : index
    %c0_66 = arith.constant 0 : index
    %180 = vector.load %arg15[%c0_65, %c0_66] : memref<1x32xf32, #tpu.memory_space<vmem>>, vector<1x32xf32>
    %181 = vector.broadcast %180 : vector<1x32xf32> to vector<16x32xf32>
    %182 = arith.mulf %179, %181 : vector<16x32xf32>
    %c0_67 = arith.constant 0 : index
    %c0_68 = arith.constant 0 : index
    %183 = vector.load %arg16[%c0_67, %c0_68] : memref<1x32xf32, #tpu.memory_space<vmem>>, vector<1x32xf32>
    %184 = vector.broadcast %183 : vector<1x32xf32> to vector<16x32xf32>
    %185 = arith.addf %182, %184 : vector<16x32xf32>
    %c0_69 = arith.constant 0 : index
    %c0_70 = arith.constant 0 : index
    %186 = vector.load %arg17[%c0_69, %c0_70] : memref<16x32xf32, #tpu.memory_space<vmem>>, vector<16x32xf32>
    tpu.vector_store %arg17[%c0_69, %c0_70], %185 {strides = array<i32>} : memref<16x32xf32, #tpu.memory_space<vmem>>, vector<16x32xf32>,
    return
  }
  func.func @transform_0(%arg0: i32) -> (i32, i32) {
    %c0_i32 = arith.constant 0 : i32
    %c0_i32_0 = arith.constant 0 : i32
    return %arg0, %c0_i32 : i32, i32
  }
  func.func @transform_1(%arg0: i32) -> (i32, i32) {
    %c0_i32 = arith.constant 0 : i32
    %c0_i32_0 = arith.constant 0 : i32
    return %arg0, %c0_i32 : i32, i32
  }
  func.func @transform_2(%arg0: i32) -> (i32, i32) {
    %c0_i32 = arith.constant 0 : i32
    %c0_i32_0 = arith.constant 0 : i32
    %c0_i32_1 = arith.constant 0 : i32
    return %c0_i32, %c0_i32_0 : i32, i32
  }
  func.func @transform_3(%arg0: i32) -> (i32, i32) {
    %c0_i32 = arith.constant 0 : i32
    %c0_i32_0 = arith.constant 0 : i32
    %c0_i32_1 = arith.constant 0 : i32
    return %c0_i32, %c0_i32_0 : i32, i32
  }
  func.func @transform_4(%arg0: i32) -> (i32, i32) {
    %c0_i32 = arith.constant 0 : i32
    %c0_i32_0 = arith.constant 0 : i32
    %c0_i32_1 = arith.constant 0 : i32
    return %c0_i32, %c0_i32_0 : i32, i32
  }
  func.func @transform_5(%arg0: i32) -> (i32, i32) {
    %c0_i32 = arith.constant 0 : i32
    %c0_i32_0 = arith.constant 0 : i32
    %c0_i32_1 = arith.constant 0 : i32
    return %c0_i32, %c0_i32_0 : i32, i32
  }
  func.func @transform_6(%arg0: i32) -> (i32, i32) {
    %c0_i32 = arith.constant 0 : i32
    %c0_i32_0 = arith.constant 0 : i32
    %c0_i32_1 = arith.constant 0 : i32
    return %c0_i32, %c0_i32_0 : i32, i32
  }
  func.func @transform_7(%arg0: i32) -> (i32, i32) {
    %c0_i32 = arith.constant 0 : i32
    %c0_i32_0 = arith.constant 0 : i32
    %c0_i32_1 = arith.constant 0 : i32
    return %c0_i32, %c0_i32_0 : i32, i32
  }
  func.func @transform_8(%arg0: i32) -> (i32, i32) {
    %c0_i32 = arith.constant 0 : i32
    %c0_i32_0 = arith.constant 0 : i32
    %c0_i32_1 = arith.constant 0 : i32
    return %c0_i32, %c0_i32_0 : i32, i32
  }
  func.func @transform_9(%arg0: i32) -> (i32, i32) {
    %c0_i32 = arith.constant 0 : i32
    %c0_i32_0 = arith.constant 0 : i32
    %c0_i32_1 = arith.constant 0 : i32
    return %c0_i32, %c0_i32_0 : i32, i32
  }
  func.func @transform_10(%arg0: i32) -> (i32, i32) {
    %c0_i32 = arith.constant 0 : i32
    %c0_i32_0 = arith.constant 0 : i32
    %c0_i32_1 = arith.constant 0 : i32
    return %c0_i32, %c0_i32_0 : i32, i32
  }
  func.func @transform_11(%arg0: i32) -> (i32, i32) {
    %c0_i32 = arith.constant 0 : i32
    %c0_i32_0 = arith.constant 0 : i32
    %c0_i32_1 = arith.constant 0 : i32
    return %c0_i32, %c0_i32_0 : i32, i32
  }
  func.func @transform_12(%arg0: i32) -> (i32, i32) {
    %c0_i32 = arith.constant 0 : i32
    %c0_i32_0 = arith.constant 0 : i32
    %c0_i32_1 = arith.constant 0 : i32
    return %c0_i32, %c0_i32_0 : i32, i32
  }
  func.func @transform_13(%arg0: i32) -> (i32, i32) {
    %c0_i32 = arith.constant 0 : i32
    %c0_i32_0 = arith.constant 0 : i32
    %c0_i32_1 = arith.constant 0 : i32
    return %c0_i32, %c0_i32_0 : i32, i32
  }
  func.func @transform_14(%arg0: i32) -> (i32, i32) {
    %c0_i32 = arith.constant 0 : i32
    %c0_i32_0 = arith.constant 0 : i32
    %c0_i32_1 = arith.constant 0 : i32
    return %c0_i32, %c0_i32_0 : i32, i32
  }
  func.func @transform_15(%arg0: i32) -> (i32, i32) {
    %c0_i32 = arith.constant 0 : i32
    %c0_i32_0 = arith.constant 0 : i32
    %c0_i32_1 = arith.constant 0 : i32
    return %c0_i32, %c0_i32_0 : i32, i32
  }
  func.func @transform_16(%arg0: i32) -> (i32, i32) {
    %c0_i32 = arith.constant 0 : i32
    %c0_i32_0 = arith.constant 0 : i32
    return %arg0, %c0_i32 : i32, i32
  }
}

module attributes {stable_mosaic.version = 11 : i64} {
  func.func @encoder_layer_kernel(%arg0: i32, %arg1: memref<16x32xf32, #tpu.memory_space<vmem>>, %arg2: memref<16x32xbf16, #tpu.memory_space<vmem>>, %arg3: memref<32x64xbf16, #tpu.memory_space<vmem>>, %arg4: memref<1x64xf32, #tpu.memory_space<vmem>>, %arg5: memref<32x32xbf16, #tpu.memory_space<vmem>>, %arg6: memref<1x32xf32, #tpu.memory_space<vmem>>, %arg7: memref<32x32xbf16, #tpu.memory_space<vmem>>, %arg8: memref<1x32xf32, #tpu.memory_space<vmem>>, %arg9: memref<1x32xf32, #tpu.memory_space<vmem>>, %arg10: memref<1x32xf32, #tpu.memory_space<vmem>>, %arg11: memref<32x64xbf16, #tpu.memory_space<vmem>>, %arg12: memref<1x64xf32, #tpu.memory_space<vmem>>, %arg13: memref<64x32xbf16, #tpu.memory_space<vmem>>, %arg14: memref<1x32xf32, #tpu.memory_space<vmem>>, %arg15: memref<1x32xf32, #tpu.memory_space<vmem>>, %arg16: memref<1x32xf32, #tpu.memory_space<vmem>>, %arg17: memref<16x32xf32, #tpu.memory_space<vmem>>, %arg18: memref<16x32xbf16, #tpu.memory_space<vmem>>) attributes {dimension_semantics = [#tpu.dimension_semantics<parallel>], iteration_bounds = array<i64: 1>, scalar_prefetch = 0 : i64, scratch_operands = 1 : i64, tpu.core_type = #tpu.core_type<tc>, window_params = [{transform_indices = @transform_0, window_bounds = array<i64: 16, 32>}, {transform_indices = @transform_1, window_bounds = array<i64: 16, 32>}, {pipeline_mode = #tpu.pipeline_mode<synchronous>, transform_indices = @transform_2, window_bounds = array<i64: 32, 64>}, {pipeline_mode = #tpu.pipeline_mode<synchronous>, transform_indices = @transform_3, window_bounds = array<i64: 1, 64>}, {pipeline_mode = #tpu.pipeline_mode<synchronous>, transform_indices = @transform_4, window_bounds = array<i64: 32, 32>}, {pipeline_mode = #tpu.pipeline_mode<synchronous>, transform_indices = @transform_5, window_bounds = array<i64: 1, 32>}, {pipeline_mode = #tpu.pipeline_mode<synchronous>, transform_indices = @transform_6, window_bounds = array<i64: 32, 32>}, {pipeline_mode = #tpu.pipeline_mode<synchronous>, transform_indices = @transform_7, window_bounds = array<i64: 1, 32>}, {pipeline_mode = #tpu.pipeline_mode<synchronous>, transform_indices = @transform_8, window_bounds = array<i64: 1, 32>}, {pipeline_mode = #tpu.pipeline_mode<synchronous>, transform_indices = @transform_9, window_bounds = array<i64: 1, 32>}, {pipeline_mode = #tpu.pipeline_mode<synchronous>, transform_indices = @transform_10, window_bounds = array<i64: 32, 64>}, {pipeline_mode = #tpu.pipeline_mode<synchronous>, transform_indices = @transform_11, window_bounds = array<i64: 1, 64>}, {pipeline_mode = #tpu.pipeline_mode<synchronous>, transform_indices = @transform_12, window_bounds = array<i64: 64, 32>}, {pipeline_mode = #tpu.pipeline_mode<synchronous>, transform_indices = @transform_13, window_bounds = array<i64: 1, 32>}, {pipeline_mode = #tpu.pipeline_mode<synchronous>, transform_indices = @transform_14, window_bounds = array<i64: 1, 32>}, {pipeline_mode = #tpu.pipeline_mode<synchronous>, transform_indices = @transform_15, window_bounds = array<i64: 1, 32>}, {transform_indices = @transform_16, window_bounds = array<i64: 16, 32>}]} {
    %c0 = arith.constant 0 : index
    %c0_0 = arith.constant 0 : index
    %0 = vector.load %arg1[%c0, %c0_0] : memref<16x32xf32, #tpu.memory_space<vmem>>, vector<16x32xf32>
    %c0_1 = arith.constant 0 : index
    %c0_2 = arith.constant 0 : index
    %1 = vector.load %arg2[%c0_1, %c0_2] : memref<16x32xbf16, #tpu.memory_space<vmem>>, vector<16x32xbf16>
    %2 = arith.extf %1 : vector<16x32xbf16> to vector<16x32xf32>
    %3 = arith.addf %0, %2 : vector<16x32xf32>
    %4 = arith.truncf %3 : vector<16x32xf32> to vector<16x32xbf16>
    %c0_3 = arith.constant 0 : index
    %c0_4 = arith.constant 0 : index
    %5 = vector.load %arg3[%c0_3, %c0_4] : memref<32x64xbf16, #tpu.memory_space<vmem>>, vector<32x64xbf16>
    %cst = arith.constant dense<0.000000e+00> : vector<16x64xf32>
    %6 = tpu.matmul %4, %5, %cst {dimension_numbers = #tpu.dot_dimension_numbers<[1], [0], [0], [1], [0, 0, 1, 1], [], []>} : vector<16x32xbf16>, vector<32x64xbf16>, vector<16x64xf32> -> vector<16x64xf32>
    %c0_5 = arith.constant 0 : index
    %c0_6 = arith.constant 0 : index
    %7 = vector.load %arg4[%c0_5, %c0_6] : memref<1x64xf32, #tpu.memory_space<vmem>>, vector<1x64xf32>
    %8 = vector.broadcast %7 : vector<1x64xf32> to vector<16x64xf32>
    %9 = arith.addf %6, %8 : vector<16x64xf32>
    %10 = arith.truncf %0 : vector<16x32xf32> to vector<16x32xbf16>
    %c0_7 = arith.constant 0 : index
    %c0_8 = arith.constant 0 : index
    %11 = vector.load %arg5[%c0_7, %c0_8] : memref<32x32xbf16, #tpu.memory_space<vmem>>, vector<32x32xbf16>
    %cst_9 = arith.constant dense<0.000000e+00> : vector<16x32xf32>
    %12 = tpu.matmul %10, %11, %cst_9 {dimension_numbers = #tpu.dot_dimension_numbers<[1], [0], [0], [1], [0, 0, 1, 1], [], []>} : vector<16x32xbf16>, vector<32x32xbf16>, vector<16x32xf32> -> vector<16x32xf32>
    %c0_10 = arith.constant 0 : index
    %c0_11 = arith.constant 0 : index
    %13 = vector.load %arg6[%c0_10, %c0_11] : memref<1x32xf32, #tpu.memory_space<vmem>>, vector<1x32xf32>
    %14 = vector.broadcast %13 : vector<1x32xf32> to vector<16x32xf32>
    %15 = arith.addf %12, %14 : vector<16x32xf32>
    %16 = vector.extract_strided_slice %9 {offsets = [0, 0], sizes = [16, 8], strides = [1, 1]} : vector<16x64xf32> to vector<16x8xf32>
    %17 = vector.shape_cast %16 : vector<16x8xf32> to vector<2x8x8xf32>
    %18 = arith.truncf %17 : vector<2x8x8xf32> to vector<2x8x8xbf16>
    %19 = vector.extract_strided_slice %9 {offsets = [0, 32], sizes = [16, 8], strides = [1, 1]} : vector<16x64xf32> to vector<16x8xf32>
    %20 = vector.shape_cast %19 : vector<16x8xf32> to vector<2x8x8xf32>
    %21 = arith.truncf %20 : vector<2x8x8xf32> to vector<2x8x8xbf16>
    %22 = vector.extract_strided_slice %15 {offsets = [0, 0], sizes = [16, 8], strides = [1, 1]} : vector<16x32xf32> to vector<16x8xf32>
    %23 = vector.shape_cast %22 : vector<16x8xf32> to vector<2x8x8xf32>
    %24 = arith.truncf %23 : vector<2x8x8xf32> to vector<2x8x8xbf16>
    "tpu.trace_start"() <{level = 10 : i32, message = "bqd,bkd->bqk"}> : () -> ()
    %cst_12 = arith.constant dense<0.000000e+00> : vector<2x8x8xf32>
    %25 = tpu.matmul %18, %21, %cst_12 {dimension_numbers = #tpu.dot_dimension_numbers<[2], [2], [1], [1], [0, 0, 0, 1, 1, 1], [0], [0]>} : vector<2x8x8xbf16>, vector<2x8x8xbf16>, vector<2x8x8xf32> -> vector<2x8x8xf32>
    "tpu.trace_stop"() : () -> ()
    %cst_13 = arith.constant dense<0xFF800000> : vector<2x8xf32>
    %26 = vector.multi_reduction <maximumf>, %25, %cst_13 [2] : vector<2x8x8xf32> to vector<2x8xf32>
    %27 = vector.shape_cast %26 : vector<2x8xf32> to vector<2x8x1xf32>
    %28 = vector.broadcast %27 : vector<2x8x1xf32> to vector<2x8x8xf32>
    %29 = arith.subf %25, %28 : vector<2x8x8xf32>
    %30 = math.exp %29 : vector<2x8x8xf32>
    %cst_14 = arith.constant dense<0.000000e+00> : vector<2x8xf32>
    %31 = vector.multi_reduction <add>, %30, %cst_14 [2] : vector<2x8x8xf32> to vector<2x8xf32>
    %32 = vector.shape_cast %31 : vector<2x8xf32> to vector<2x8x1xf32>
    %33 = tpu.reciprocal %32 {approx = true} : vector<2x8x1xf32> -> vector<2x8x1xf32>
    %34 = vector.broadcast %33 : vector<2x8x1xf32> to vector<2x8x8xf32>
    %35 = arith.mulf %30, %34 : vector<2x8x8xf32>
    %36 = arith.truncf %35 : vector<2x8x8xf32> to vector<2x8x8xbf16>
    "tpu.trace_start"() <{level = 10 : i32, message = "bqk,bkd->bqd"}> : () -> ()
    %cst_15 = arith.constant dense<0.000000e+00> : vector<2x8x8xf32>
    %37 = tpu.matmul %36, %24, %cst_15 {dimension_numbers = #tpu.dot_dimension_numbers<[2], [1], [1], [2], [0, 0, 0, 1, 1, 2], [0], [0]>} : vector<2x8x8xbf16>, vector<2x8x8xbf16>, vector<2x8x8xf32> -> vector<2x8x8xf32>
    "tpu.trace_stop"() : () -> ()
    %38 = vector.shape_cast %37 : vector<2x8x8xf32> to vector<16x8xf32>
    %39 = arith.truncf %38 : vector<16x8xf32> to vector<16x8xbf16>
    %c0_16 = arith.constant 0 : index
    %c0_17 = arith.constant 0 : index
    %40 = vector.load %arg18[%c0_16, %c0_17] : memref<16x32xbf16, #tpu.memory_space<vmem>>, vector<16x8xbf16>
    tpu.vector_store %arg18[%c0_16, %c0_17], %39 {strides = array<i32>} : memref<16x32xbf16, #tpu.memory_space<vmem>>, vector<16x8xbf16>,
    %41 = vector.extract_strided_slice %9 {offsets = [0, 8], sizes = [16, 8], strides = [1, 1]} : vector<16x64xf32> to vector<16x8xf32>
    %42 = vector.shape_cast %41 : vector<16x8xf32> to vector<2x8x8xf32>
    %43 = arith.truncf %42 : vector<2x8x8xf32> to vector<2x8x8xbf16>
    %44 = vector.extract_strided_slice %9 {offsets = [0, 40], sizes = [16, 8], strides = [1, 1]} : vector<16x64xf32> to vector<16x8xf32>
    %45 = vector.shape_cast %44 : vector<16x8xf32> to vector<2x8x8xf32>
    %46 = arith.truncf %45 : vector<2x8x8xf32> to vector<2x8x8xbf16>
    %47 = vector.extract_strided_slice %15 {offsets = [0, 8], sizes = [16, 8], strides = [1, 1]} : vector<16x32xf32> to vector<16x8xf32>
    %48 = vector.shape_cast %47 : vector<16x8xf32> to vector<2x8x8xf32>
    %49 = arith.truncf %48 : vector<2x8x8xf32> to vector<2x8x8xbf16>
    "tpu.trace_start"() <{level = 10 : i32, message = "bqd,bkd->bqk"}> : () -> ()
    %cst_18 = arith.constant dense<0.000000e+00> : vector<2x8x8xf32>
    %50 = tpu.matmul %43, %46, %cst_18 {dimension_numbers = #tpu.dot_dimension_numbers<[2], [2], [1], [1], [0, 0, 0, 1, 1, 1], [0], [0]>} : vector<2x8x8xbf16>, vector<2x8x8xbf16>, vector<2x8x8xf32> -> vector<2x8x8xf32>
    "tpu.trace_stop"() : () -> ()
    %cst_19 = arith.constant dense<0xFF800000> : vector<2x8xf32>
    %51 = vector.multi_reduction <maximumf>, %50, %cst_19 [2] : vector<2x8x8xf32> to vector<2x8xf32>
    %52 = vector.shape_cast %51 : vector<2x8xf32> to vector<2x8x1xf32>
    %53 = vector.broadcast %52 : vector<2x8x1xf32> to vector<2x8x8xf32>
    %54 = arith.subf %50, %53 : vector<2x8x8xf32>
    %55 = math.exp %54 : vector<2x8x8xf32>
    %cst_20 = arith.constant dense<0.000000e+00> : vector<2x8xf32>
    %56 = vector.multi_reduction <add>, %55, %cst_20 [2] : vector<2x8x8xf32> to vector<2x8xf32>
    %57 = vector.shape_cast %56 : vector<2x8xf32> to vector<2x8x1xf32>
    %58 = tpu.reciprocal %57 {approx = true} : vector<2x8x1xf32> -> vector<2x8x1xf32>
    %59 = vector.broadcast %58 : vector<2x8x1xf32> to vector<2x8x8xf32>
    %60 = arith.mulf %55, %59 : vector<2x8x8xf32>
    %61 = arith.truncf %60 : vector<2x8x8xf32> to vector<2x8x8xbf16>
    "tpu.trace_start"() <{level = 10 : i32, message = "bqk,bkd->bqd"}> : () -> ()
    %cst_21 = arith.constant dense<0.000000e+00> : vector<2x8x8xf32>
    %62 = tpu.matmul %61, %49, %cst_21 {dimension_numbers = #tpu.dot_dimension_numbers<[2], [1], [1], [2], [0, 0, 0, 1, 1, 2], [0], [0]>} : vector<2x8x8xbf16>, vector<2x8x8xbf16>, vector<2x8x8xf32> -> vector<2x8x8xf32>
    "tpu.trace_stop"() : () -> ()
    %63 = vector.shape_cast %62 : vector<2x8x8xf32> to vector<16x8xf32>
    %64 = arith.truncf %63 : vector<16x8xf32> to vector<16x8xbf16>
    %c0_22 = arith.constant 0 : index
    %c8 = arith.constant 8 : index
    %65 = vector.load %arg18[%c0_22, %c8] : memref<16x32xbf16, #tpu.memory_space<vmem>>, vector<16x8xbf16>
    tpu.vector_store %arg18[%c0_22, %c8], %64 {strides = array<i32>} : memref<16x32xbf16, #tpu.memory_space<vmem>>, vector<16x8xbf16>,
    %66 = vector.extract_strided_slice %9 {offsets = [0, 16], sizes = [16, 8], strides = [1, 1]} : vector<16x64xf32> to vector<16x8xf32>
    %67 = vector.shape_cast %66 : vector<16x8xf32> to vector<2x8x8xf32>
    %68 = arith.truncf %67 : vector<2x8x8xf32> to vector<2x8x8xbf16>
    %69 = vector.extract_strided_slice %9 {offsets = [0, 48], sizes = [16, 8], strides = [1, 1]} : vector<16x64xf32> to vector<16x8xf32>
    %70 = vector.shape_cast %69 : vector<16x8xf32> to vector<2x8x8xf32>
    %71 = arith.truncf %70 : vector<2x8x8xf32> to vector<2x8x8xbf16>
    %72 = vector.extract_strided_slice %15 {offsets = [0, 16], sizes = [16, 8], strides = [1, 1]} : vector<16x32xf32> to vector<16x8xf32>
    %73 = vector.shape_cast %72 : vector<16x8xf32> to vector<2x8x8xf32>
    %74 = arith.truncf %73 : vector<2x8x8xf32> to vector<2x8x8xbf16>
    "tpu.trace_start"() <{level = 10 : i32, message = "bqd,bkd->bqk"}> : () -> ()
    %cst_23 = arith.constant dense<0.000000e+00> : vector<2x8x8xf32>
    %75 = tpu.matmul %68, %71, %cst_23 {dimension_numbers = #tpu.dot_dimension_numbers<[2], [2], [1], [1], [0, 0, 0, 1, 1, 1], [0], [0]>} : vector<2x8x8xbf16>, vector<2x8x8xbf16>, vector<2x8x8xf32> -> vector<2x8x8xf32>
    "tpu.trace_stop"() : () -> ()
    %cst_24 = arith.constant dense<0xFF800000> : vector<2x8xf32>
    %76 = vector.multi_reduction <maximumf>, %75, %cst_24 [2] : vector<2x8x8xf32> to vector<2x8xf32>
    %77 = vector.shape_cast %76 : vector<2x8xf32> to vector<2x8x1xf32>
    %78 = vector.broadcast %77 : vector<2x8x1xf32> to vector<2x8x8xf32>
    %79 = arith.subf %75, %78 : vector<2x8x8xf32>
    %80 = math.exp %79 : vector<2x8x8xf32>
    %cst_25 = arith.constant dense<0.000000e+00> : vector<2x8xf32>
    %81 = vector.multi_reduction <add>, %80, %cst_25 [2] : vector<2x8x8xf32> to vector<2x8xf32>
    %82 = vector.shape_cast %81 : vector<2x8xf32> to vector<2x8x1xf32>
    %83 = tpu.reciprocal %82 {approx = true} : vector<2x8x1xf32> -> vector<2x8x1xf32>
    %84 = vector.broadcast %83 : vector<2x8x1xf32> to vector<2x8x8xf32>
    %85 = arith.mulf %80, %84 : vector<2x8x8xf32>
    %86 = arith.truncf %85 : vector<2x8x8xf32> to vector<2x8x8xbf16>
    "tpu.trace_start"() <{level = 10 : i32, message = "bqk,bkd->bqd"}> : () -> ()
    %cst_26 = arith.constant dense<0.000000e+00> : vector<2x8x8xf32>
    %87 = tpu.matmul %86, %74, %cst_26 {dimension_numbers = #tpu.dot_dimension_numbers<[2], [1], [1], [2], [0, 0, 0, 1, 1, 2], [0], [0]>} : vector<2x8x8xbf16>, vector<2x8x8xbf16>, vector<2x8x8xf32> -> vector<2x8x8xf32>
    "tpu.trace_stop"() : () -> ()
    %88 = vector.shape_cast %87 : vector<2x8x8xf32> to vector<16x8xf32>
    %89 = arith.truncf %88 : vector<16x8xf32> to vector<16x8xbf16>
    %c0_27 = arith.constant 0 : index
    %c16 = arith.constant 16 : index
    %90 = vector.load %arg18[%c0_27, %c16] : memref<16x32xbf16, #tpu.memory_space<vmem>>, vector<16x8xbf16>
    tpu.vector_store %arg18[%c0_27, %c16], %89 {strides = array<i32>} : memref<16x32xbf16, #tpu.memory_space<vmem>>, vector<16x8xbf16>,
    %91 = vector.extract_strided_slice %9 {offsets = [0, 24], sizes = [16, 8], strides = [1, 1]} : vector<16x64xf32> to vector<16x8xf32>
    %92 = vector.shape_cast %91 : vector<16x8xf32> to vector<2x8x8xf32>
    %93 = arith.truncf %92 : vector<2x8x8xf32> to vector<2x8x8xbf16>
    %94 = vector.extract_strided_slice %9 {offsets = [0, 56], sizes = [16, 8], strides = [1, 1]} : vector<16x64xf32> to vector<16x8xf32>
    %95 = vector.shape_cast %94 : vector<16x8xf32> to vector<2x8x8xf32>
    %96 = arith.truncf %95 : vector<2x8x8xf32> to vector<2x8x8xbf16>
    %97 = vector.extract_strided_slice %15 {offsets = [0, 24], sizes = [16, 8], strides = [1, 1]} : vector<16x32xf32> to vector<16x8xf32>
    %98 = vector.shape_cast %97 : vector<16x8xf32> to vector<2x8x8xf32>
    %99 = arith.truncf %98 : vector<2x8x8xf32> to vector<2x8x8xbf16>
    "tpu.trace_start"() <{level = 10 : i32, message = "bqd,bkd->bqk"}> : () -> ()
    %cst_28 = arith.constant dense<0.000000e+00> : vector<2x8x8xf32>
    %100 = tpu.matmul %93, %96, %cst_28 {dimension_numbers = #tpu.dot_dimension_numbers<[2], [2], [1], [1], [0, 0, 0, 1, 1, 1], [0], [0]>} : vector<2x8x8xbf16>, vector<2x8x8xbf16>, vector<2x8x8xf32> -> vector<2x8x8xf32>
    "tpu.trace_stop"() : () -> ()
    %cst_29 = arith.constant dense<0xFF800000> : vector<2x8xf32>
    %101 = vector.multi_reduction <maximumf>, %100, %cst_29 [2] : vector<2x8x8xf32> to vector<2x8xf32>
    %102 = vector.shape_cast %101 : vector<2x8xf32> to vector<2x8x1xf32>
    %103 = vector.broadcast %102 : vector<2x8x1xf32> to vector<2x8x8xf32>
    %104 = arith.subf %100, %103 : vector<2x8x8xf32>
    %105 = math.exp %104 : vector<2x8x8xf32>
    %cst_30 = arith.constant dense<0.000000e+00> : vector<2x8xf32>
    %106 = vector.multi_reduction <add>, %105, %cst_30 [2] : vector<2x8x8xf32> to vector<2x8xf32>
    %107 = vector.shape_cast %106 : vector<2x8xf32> to vector<2x8x1xf32>
    %108 = tpu.reciprocal %107 {approx = true} : vector<2x8x1xf32> -> vector<2x8x1xf32>
    %109 = vector.broadcast %108 : vector<2x8x1xf32> to vector<2x8x8xf32>
    %110 = arith.mulf %105, %109 : vector<2x8x8xf32>
    %111 = arith.truncf %110 : vector<2x8x8xf32> to vector<2x8x8xbf16>
    "tpu.trace_start"() <{level = 10 : i32, message = "bqk,bkd->bqd"}> : () -> ()
    %cst_31 = arith.constant dense<0.000000e+00> : vector<2x8x8xf32>
    %112 = tpu.matmul %111, %99, %cst_31 {dimension_numbers = #tpu.dot_dimension_numbers<[2], [1], [1], [2], [0, 0, 0, 1, 1, 2], [0], [0]>} : vector<2x8x8xbf16>, vector<2x8x8xbf16>, vector<2x8x8xf32> -> vector<2x8x8xf32>
    "tpu.trace_stop"() : () -> ()
    %113 = vector.shape_cast %112 : vector<2x8x8xf32> to vector<16x8xf32>
    %114 = arith.truncf %113 : vector<16x8xf32> to vector<16x8xbf16>
    %c0_32 = arith.constant 0 : index
    %c24 = arith.constant 24 : index
    %115 = vector.load %arg18[%c0_32, %c24] : memref<16x32xbf16, #tpu.memory_space<vmem>>, vector<16x8xbf16>
    tpu.vector_store %arg18[%c0_32, %c24], %114 {strides = array<i32>} : memref<16x32xbf16, #tpu.memory_space<vmem>>, vector<16x8xbf16>,
    %c0_33 = arith.constant 0 : index
    %c0_34 = arith.constant 0 : index
    %116 = vector.load %arg18[%c0_33, %c0_34] : memref<16x32xbf16, #tpu.memory_space<vmem>>, vector<16x32xbf16>
    %c0_35 = arith.constant 0 : index
    %c0_36 = arith.constant 0 : index
    %117 = vector.load %arg7[%c0_35, %c0_36] : memref<32x32xbf16, #tpu.memory_space<vmem>>, vector<32x32xbf16>
    %cst_37 = arith.constant dense<0.000000e+00> : vector<16x32xf32>
    %118 = tpu.matmul %116, %117, %cst_37 {dimension_numbers = #tpu.dot_dimension_numbers<[1], [0], [0], [1], [0, 0, 1, 1], [], []>} : vector<16x32xbf16>, vector<32x32xbf16>, vector<16x32xf32> -> vector<16x32xf32>
    %c0_38 = arith.constant 0 : index
    %c0_39 = arith.constant 0 : index
    %119 = vector.load %arg8[%c0_38, %c0_39] : memref<1x32xf32, #tpu.memory_space<vmem>>, vector<1x32xf32>
    %120 = vector.broadcast %119 : vector<1x32xf32> to vector<16x32xf32>
    %121 = arith.addf %118, %120 : vector<16x32xf32>
    %122 = arith.addf %0, %121 : vector<16x32xf32>
    %cst_40 = arith.constant dense<0.000000e+00> : vector<16xf32>
    %123 = vector.multi_reduction <add>, %122, %cst_40 [1] : vector<16x32xf32> to vector<16xf32>
    %124 = vector.shape_cast %123 : vector<16xf32> to vector<16x1xf32>
    %cst_41 = arith.constant 3.200000e+01 : f32
    %125 = vector.broadcast %cst_41 : f32 to vector<16x1xf32>
    %126 = arith.divf %124, %125 : vector<16x1xf32>
    %127 = vector.broadcast %126 : vector<16x1xf32> to vector<16x32xf32>
    %128 = arith.subf %122, %127 : vector<16x32xf32>
    %129 = arith.mulf %128, %128 : vector<16x32xf32>
    %cst_42 = arith.constant dense<0.000000e+00> : vector<16xf32>
    %130 = vector.multi_reduction <add>, %129, %cst_42 [1] : vector<16x32xf32> to vector<16xf32>
    %131 = vector.shape_cast %130 : vector<16xf32> to vector<16x1xf32>
    %cst_43 = arith.constant 3.200000e+01 : f32
    %132 = vector.broadcast %cst_43 : f32 to vector<16x1xf32>
    %133 = arith.divf %131, %132 : vector<16x1xf32>
    %134 = vector.broadcast %126 : vector<16x1xf32> to vector<16x32xf32>
    %135 = arith.subf %122, %134 : vector<16x32xf32>
    %cst_44 = arith.constant 9.99999974E-6 : f32
    %136 = vector.broadcast %cst_44 : f32 to vector<16x1xf32>
    %137 = arith.addf %133, %136 : vector<16x1xf32>
    %138 = math.rsqrt %137 : vector<16x1xf32>
    %139 = vector.broadcast %138 : vector<16x1xf32> to vector<16x32xf32>
    %140 = arith.mulf %135, %139 : vector<16x32xf32>
    %c0_45 = arith.constant 0 : index
    %c0_46 = arith.constant 0 : index
    %141 = vector.load %arg9[%c0_45, %c0_46] : memref<1x32xf32, #tpu.memory_space<vmem>>, vector<1x32xf32>
    %142 = vector.broadcast %141 : vector<1x32xf32> to vector<16x32xf32>
    %143 = arith.mulf %140, %142 : vector<16x32xf32>
    %c0_47 = arith.constant 0 : index
    %c0_48 = arith.constant 0 : index
    %144 = vector.load %arg10[%c0_47, %c0_48] : memref<1x32xf32, #tpu.memory_space<vmem>>, vector<1x32xf32>
    %145 = vector.broadcast %144 : vector<1x32xf32> to vector<16x32xf32>
    %146 = arith.addf %143, %145 : vector<16x32xf32>
    %147 = arith.truncf %146 : vector<16x32xf32> to vector<16x32xbf16>
    %c0_49 = arith.constant 0 : index
    %c0_50 = arith.constant 0 : index
    %148 = vector.load %arg11[%c0_49, %c0_50] : memref<32x64xbf16, #tpu.memory_space<vmem>>, vector<32x64xbf16>
    %cst_51 = arith.constant dense<0.000000e+00> : vector<16x64xf32>
    %149 = tpu.matmul %147, %148, %cst_51 {dimension_numbers = #tpu.dot_dimension_numbers<[1], [0], [0], [1], [0, 0, 1, 1], [], []>} : vector<16x32xbf16>, vector<32x64xbf16>, vector<16x64xf32> -> vector<16x64xf32>
    %c0_52 = arith.constant 0 : index
    %c0_53 = arith.constant 0 : index
    %150 = vector.load %arg12[%c0_52, %c0_53] : memref<1x64xf32, #tpu.memory_space<vmem>>, vector<1x64xf32>
    %151 = vector.broadcast %150 : vector<1x64xf32> to vector<16x64xf32>
    %152 = arith.addf %149, %151 : vector<16x64xf32>
    %cst_54 = arith.constant 0.000000e+00 : f32
    %153 = vector.broadcast %cst_54 : f32 to vector<16x64xf32>
    %154 = arith.maximumf %152, %153 : vector<16x64xf32>
    %155 = arith.truncf %154 : vector<16x64xf32> to vector<16x64xbf16>
    %c0_55 = arith.constant 0 : index
    %c0_56 = arith.constant 0 : index
    %156 = vector.load %arg13[%c0_55, %c0_56] : memref<64x32xbf16, #tpu.memory_space<vmem>>, vector<64x32xbf16>
    %cst_57 = arith.constant dense<0.000000e+00> : vector<16x32xf32>
    %157 = tpu.matmul %155, %156, %cst_57 {dimension_numbers = #tpu.dot_dimension_numbers<[1], [0], [0], [1], [0, 0, 1, 1], [], []>} : vector<16x64xbf16>, vector<64x32xbf16>, vector<16x32xf32> -> vector<16x32xf32>
    %c0_58 = arith.constant 0 : index
    %c0_59 = arith.constant 0 : index
    %158 = vector.load %arg14[%c0_58, %c0_59] : memref<1x32xf32, #tpu.memory_space<vmem>>, vector<1x32xf32>
    %159 = vector.broadcast %158 : vector<1x32xf32> to vector<16x32xf32>
    %160 = arith.addf %157, %159 : vector<16x32xf32>
    %161 = arith.addf %146, %160 : vector<16x32xf32>
    %cst_60 = arith.constant dense<0.000000e+00> : vector<16xf32>
    %162 = vector.multi_reduction <add>, %161, %cst_60 [1] : vector<16x32xf32> to vector<16xf32>
    %163 = vector.shape_cast %162 : vector<16xf32> to vector<16x1xf32>
    %cst_61 = arith.constant 3.200000e+01 : f32
    %164 = vector.broadcast %cst_61 : f32 to vector<16x1xf32>
    %165 = arith.divf %163, %164 : vector<16x1xf32>
    %166 = vector.broadcast %165 : vector<16x1xf32> to vector<16x32xf32>
    %167 = arith.subf %161, %166 : vector<16x32xf32>
    %168 = arith.mulf %167, %167 : vector<16x32xf32>
    %cst_62 = arith.constant dense<0.000000e+00> : vector<16xf32>
    %169 = vector.multi_reduction <add>, %168, %cst_62 [1] : vector<16x32xf32> to vector<16xf32>
    %170 = vector.shape_cast %169 : vector<16xf32> to vector<16x1xf32>
    %cst_63 = arith.constant 3.200000e+01 : f32
    %171 = vector.broadcast %cst_63 : f32 to vector<16x1xf32>
    %172 = arith.divf %170, %171 : vector<16x1xf32>
    %173 = vector.broadcast %165 : vector<16x1xf32> to vector<16x32xf32>
    %174 = arith.subf %161, %173 : vector<16x32xf32>
    %cst_64 = arith.constant 9.99999974E-6 : f32
    %175 = vector.broadcast %cst_64 : f32 to vector<16x1xf32>
    %176 = arith.addf %172, %175 : vector<16x1xf32>
    %177 = math.rsqrt %176 : vector<16x1xf32>
    %178 = vector.broadcast %177 : vector<16x1xf32> to vector<16x32xf32>
    %179 = arith.mulf %174, %178 : vector<16x32xf32>
    %c0_65 = arith.constant 0 : index
    %c0_66 = arith.constant 0 : index
    %180 = vector.load %arg15[%c0_65, %c0_66] : memref<1x32xf32, #tpu.memory_space<vmem>>, vector<1x32xf32>
    %181 = vector.broadcast %180 : vector<1x32xf32> to vector<16x32xf32>
    %182 = arith.mulf %179, %181 : vector<16x32xf32>
    %c0_67 = arith.constant 0 : index
    %c0_68 = arith.constant 0 : index
    %183 = vector.load %arg16[%c0_67, %c0_68] : memref<1x32xf32, #tpu.memory_space<vmem>>, vector<1x32xf32>
    %184 = vector.broadcast %183 : vector<1x32xf32> to vector<16x32xf32>
    %185 = arith.addf %182, %184 : vector<16x32xf32>
    %c0_69 = arith.constant 0 : index
    %c0_70 = arith.constant 0 : index
    %186 = vector.load %arg17[%c0_69, %c0_70] : memref<16x32xf32, #tpu.memory_space<vmem>>, vector<16x32xf32>
    tpu.vector_store %arg17[%c0_69, %c0_70], %185 {strides = array<i32>} : memref<16x32xf32, #tpu.memory_space<vmem>>, vector<16x32xf32>,
    return
  }
  func.func @transform_0(%arg0: i32) -> (i32, i32) {
    %c0_i32 = arith.constant 0 : i32
    %c0_i32_0 = arith.constant 0 : i32
    return %arg0, %c0_i32 : i32, i32
  }
  func.func @transform_1(%arg0: i32) -> (i32, i32) {
    %c0_i32 = arith.constant 0 : i32
    %c0_i32_0 = arith.constant 0 : i32
    return %arg0, %c0_i32 : i32, i32
  }
  func.func @transform_2(%arg0: i32) -> (i32, i32) {
    %c0_i32 = arith.constant 0 : i32
    %c0_i32_0 = arith.constant 0 : i32
    %c0_i32_1 = arith.constant 0 : i32
    return %c0_i32, %c0_i32_0 : i32, i32
  }
  func.func @transform_3(%arg0: i32) -> (i32, i32) {
    %c0_i32 = arith.constant 0 : i32
    %c0_i32_0 = arith.constant 0 : i32
    %c0_i32_1 = arith.constant 0 : i32
    return %c0_i32, %c0_i32_0 : i32, i32
  }
  func.func @transform_4(%arg0: i32) -> (i32, i32) {
    %c0_i32 = arith.constant 0 : i32
    %c0_i32_0 = arith.constant 0 : i32
    %c0_i32_1 = arith.constant 0 : i32
    return %c0_i32, %c0_i32_0 : i32, i32
  }
  func.func @transform_5(%arg0: i32) -> (i32, i32) {
    %c0_i32 = arith.constant 0 : i32
    %c0_i32_0 = arith.constant 0 : i32
    %c0_i32_1 = arith.constant 0 : i32
    return %c0_i32, %c0_i32_0 : i32, i32
  }
  func.func @transform_6(%arg0: i32) -> (i32, i32) {
    %c0_i32 = arith.constant 0 : i32
    %c0_i32_0 = arith.constant 0 : i32
    %c0_i32_1 = arith.constant 0 : i32
    return %c0_i32, %c0_i32_0 : i32, i32
  }
  func.func @transform_7(%arg0: i32) -> (i32, i32) {
    %c0_i32 = arith.constant 0 : i32
    %c0_i32_0 = arith.constant 0 : i32
    %c0_i32_1 = arith.constant 0 : i32
    return %c0_i32, %c0_i32_0 : i32, i32
  }
  func.func @transform_8(%arg0: i32) -> (i32, i32) {
    %c0_i32 = arith.constant 0 : i32
    %c0_i32_0 = arith.constant 0 : i32
    %c0_i32_1 = arith.constant 0 : i32
    return %c0_i32, %c0_i32_0 : i32, i32
  }
  func.func @transform_9(%arg0: i32) -> (i32, i32) {
    %c0_i32 = arith.constant 0 : i32
    %c0_i32_0 = arith.constant 0 : i32
    %c0_i32_1 = arith.constant 0 : i32
    return %c0_i32, %c0_i32_0 : i32, i32
  }
  func.func @transform_10(%arg0: i32) -> (i32, i32) {
    %c0_i32 = arith.constant 0 : i32
    %c0_i32_0 = arith.constant 0 : i32
    %c0_i32_1 = arith.constant 0 : i32
    return %c0_i32, %c0_i32_0 : i32, i32
  }
  func.func @transform_11(%arg0: i32) -> (i32, i32) {
    %c0_i32 = arith.constant 0 : i32
    %c0_i32_0 = arith.constant 0 : i32
    %c0_i32_1 = arith.constant 0 : i32
    return %c0_i32, %c0_i32_0 : i32, i32
  }
  func.func @transform_12(%arg0: i32) -> (i32, i32) {
    %c0_i32 = arith.constant 0 : i32
    %c0_i32_0 = arith.constant 0 : i32
    %c0_i32_1 = arith.constant 0 : i32
    return %c0_i32, %c0_i32_0 : i32, i32
  }
  func.func @transform_13(%arg0: i32) -> (i32, i32) {
    %c0_i32 = arith.constant 0 : i32
    %c0_i32_0 = arith.constant 0 : i32
    %c0_i32_1 = arith.constant 0 : i32
    return %c0_i32, %c0_i32_0 : i32, i32
  }
  func.func @transform_14(%arg0: i32) -> (i32, i32) {
    %c0_i32 = arith.constant 0 : i32
    %c0_i32_0 = arith.constant 0 : i32
    %c0_i32_1 = arith.constant 0 : i32
    return %c0_i32, %c0_i32_0 : i32, i32
  }
  func.func @transform_15(%arg0: i32) -> (i32, i32) {
    %c0_i32 = arith.constant 0 : i32
    %c0_i32_0 = arith.constant 0 : i32
    %c0_i32_1 = arith.constant 0 : i32
    return %c0_i32, %c0_i32_0 : i32, i32
  }
  func.func @transform_16(%arg0: i32) -> (i32, i32) {
    %c0_i32 = arith.constant 0 : i32
    %c0_i32_0 = arith.constant 0 : i32
    return %arg0, %c0_i32 : i32, i32
  }
}

</mosaic_0001>

<llo_original>
// kernel: tpu_custom_call.1
$region0: #{tpu_custom_call.1}
  #allocation0 [shape = 'u32[]', space=smem, size = 0x4, offset = 0x4, fixed_abs, tag = 'smem constant byte address 0x4 - core index']
  #allocation1 [shape = 'u32[144,128]{1,0:T(1,128)}', space=vmem, size = 0x12000, scoped, tag = 'internal scratch']
  #allocation2 [shape = 'bf16[16,32]{1,0:T(16,128)(2,1)}', space=vmem, size = 0x1000, scoped, tag = 'scratch operand']
  %s0 = inlined_call_operand.hbm [shape: f32[16,32], index: 0, kind: input, shape index: {}]
  %s1 = inlined_call_operand.hbm [shape: bf16[16,32], index: 1, kind: input, shape index: {}]
  %s2 = inlined_call_operand.hbm [shape: bf16[32,64], index: 2, kind: input, shape index: {}]
  %s3 = inlined_call_operand.hbm [shape: f32[1,64], index: 3, kind: input, shape index: {}]
  %s4 = inlined_call_operand.hbm [shape: bf16[32,32], index: 4, kind: input, shape index: {}]
  %s5 = inlined_call_operand.hbm [shape: f32[1,32], index: 5, kind: input, shape index: {}]
  %s6 = inlined_call_operand.hbm [shape: bf16[32,32], index: 6, kind: input, shape index: {}]
  %s7 = inlined_call_operand.hbm [shape: f32[1,32], index: 7, kind: input, shape index: {}]
  %s8 = inlined_call_operand.hbm [shape: f32[1,32], index: 8, kind: input, shape index: {}]
  %s9 = inlined_call_operand.hbm [shape: f32[1,32], index: 9, kind: input, shape index: {}]
  %s10 = inlined_call_operand.hbm [shape: bf16[32,64], index: 10, kind: input, shape index: {}]
  %s11 = inlined_call_operand.hbm [shape: f32[1,64], index: 11, kind: input, shape index: {}]
  %s12 = inlined_call_operand.hbm [shape: bf16[64,32], index: 12, kind: input, shape index: {}]
  %s13 = inlined_call_operand.hbm [shape: f32[1,32], index: 13, kind: input, shape index: {}]
  %s14 = inlined_call_operand.hbm [shape: f32[1,32], index: 14, kind: input, shape index: {}]
  %s15 = inlined_call_operand.hbm [shape: f32[1,32], index: 15, kind: input, shape index: {}]
  %s16 = inlined_call_operand.hbm [shape: f32[16,32], index: 16, kind: output, shape index: {}]
  %s17 = sld [smem:[#allocation0]]
  $region138: #{tpu_custom_call.1} parent=0
    _
  %s19 = ssub.s32 1, %s17
  %s20 = scalar_select 0, %s19, %s17
  $region1: #{tpu_custom_call.1} parent=0
    #allocation3 [shape = 'u8[8192]{0}', space=vmem, size = 0x2000, scoped, tag = 'input window, operand 0, single buffered']
    #allocation4 [shape = 's32[1]{0}', space=sflag, size = 0x4, scoped, tag = 'scoped memory for tpu_custom_call.1']
    #allocation5 [shape = 's32[1]{0}', space=sflag, size = 0x4, scoped, tag = 'scoped memory for tpu_custom_call.1']
    #allocation6 [shape = 'u8[4096]{0}', space=vmem, size = 0x1000, scoped, tag = 'input window, operand 1, single buffered']
    #allocation7 [shape = 's32[1]{0}', space=sflag, size = 0x4, scoped, tag = 'scoped memory for tpu_custom_call.1']
    #allocation8 [shape = 'u8[8192]{0}', space=vmem, size = 0x2000, scoped, tag = 'input window, operand 2, single buffered']
    #allocation9 [shape = 'u8[512]{0}', space=vmem, size = 0x400, scoped, tag = 'input window, operand 3, single buffered']
    #allocation10 [shape = 's32[1]{0}', space=sflag, size = 0x4, scoped, tag = 'scoped memory for tpu_custom_call.1']
    #allocation11 [shape = 'u8[8192]{0}', space=vmem, size = 0x2000, scoped, tag = 'input window, operand 4, single buffered']
    #allocation12 [shape = 'u8[512]{0}', space=vmem, size = 0x400, scoped, tag = 'input window, operand 5, single buffered']
    #allocation13 [shape = 's32[1]{0}', space=sflag, size = 0x4, scoped, tag = 'scoped memory for tpu_custom_call.1']
    #allocation14 [shape = 'u8[8192]{0}', space=vmem, size = 0x2000, scoped, tag = 'input window, operand 6, single buffered']
    #allocation15 [shape = 'u8[512]{0}', space=vmem, size = 0x400, scoped, tag = 'input window, operand 7, single buffered']
    #allocation16 [shape = 's32[1]{0}', space=sflag, size = 0x4, scoped, tag = 'scoped memory for tpu_custom_call.1']
    #allocation17 [shape = 'u8[512]{0}', space=vmem, size = 0x400, scoped, tag = 'input window, operand 8, single buffered']
    #allocation18 [shape = 'u8[512]{0}', space=vmem, size = 0x400, scoped, tag = 'input window, operand 9, single buffered']
    #allocation19 [shape = 's32[1]{0}', space=sflag, size = 0x4, scoped, tag = 'scoped memory for tpu_custom_call.1']
    #allocation20 [shape = 'u8[8192]{0}', space=vmem, size = 0x2000, scoped, tag = 'input window, operand 10, single buffered']
    #allocation21 [shape = 'u8[512]{0}', space=vmem, size = 0x400, scoped, tag = 'input window, operand 11, single buffered']
    #allocation22 [shape = 's32[1]{0}', space=sflag, size = 0x4, scoped, tag = 'scoped memory for tpu_custom_call.1']
    #allocation23 [shape = 'u8[16384]{0}', space=vmem, size = 0x4000, scoped, tag = 'input window, operand 12, single buffered']
    #allocation24 [shape = 'u8[512]{0}', space=vmem, size = 0x400, scoped, tag = 'input window, operand 13, single buffered']
    #allocation25 [shape = 's32[1]{0}', space=sflag, size = 0x4, scoped, tag = 'scoped memory for tpu_custom_call.1']
    #allocation26 [shape = 'u8[512]{0}', space=vmem, size = 0x400, scoped, tag = 'input window, operand 14, single buffered']
    #allocation27 [shape = 'u8[512]{0}', space=vmem, size = 0x400, scoped, tag = 'input window, operand 15, single buffered']
    #allocation28 [shape = 's32[1]{0}', space=sflag, size = 0x4, scoped, tag = 'scoped memory for tpu_custom_call.1']
    #allocation29 [shape = 'u8[8192]{0}', space=vmem, size = 0x2000, scoped, tag = 'output window, operand 0, single buffered']
    %21 = vsyncpa [#allocation4], 0
    %22 = vsyncpa [#allocation7], 0
    %23 = vsyncpa [#allocation10], 0
    %24 = vsyncpa [#allocation13], 0
    %25 = vsyncpa [#allocation16], 0
    %26 = vsyncpa [#allocation19], 0
    %27 = vsyncpa [#allocation22], 0
    %28 = vsyncpa [#allocation25], 0
    %29 = vsyncpa [#allocation28], 0
    %30 = vsyncpa [#allocation5], 0
    // Predicated region
    $region2: #{tpu_custom_call.1} parent=1 // pred_check
      _
    $region3: #{tpu_custom_call.1} parent=1 // pred_check_branch
      %32 = sbr.rel (0) target = $region5
    $region4: #{tpu_custom_call.1} parent=1 // pred_region
      %s34 = ssub.s32 256, 256
      %35 = vsyncadd [#allocation4], %s34
      %s36 = sshll.u32 [#allocation3], 4
      %s37 = int_to_ptr.vmem [resolvable:$true] %s36
      %42 = dma.hbm_to_vmem [thread:$0]  %s0, 256, %s37, [#allocation4], 128, 128, 8
    $region5: #{tpu_custom_call.1} parent=1 // pred_fallthru
      _
    // Predicated region
    $region6: #{tpu_custom_call.1} parent=1 // pred_check
      _
    $region7: #{tpu_custom_call.1} parent=1 // pred_check_branch
      %44 = sbr.rel (0) target = $region9
    $region8: #{tpu_custom_call.1} parent=1 // pred_region
      %s46 = ssub.s32 128, 128
      %47 = vsyncadd [#allocation7], %s46
      %s48 = sshll.u32 [#allocation6], 4
      %s49 = int_to_ptr.vmem [resolvable:$true] %s48
      %54 = dma.hbm_to_vmem [thread:$0]  %s1, 128, %s49, [#allocation7], 64, 64, 4
    $region9: #{tpu_custom_call.1} parent=1 // pred_fallthru
      _
    // Predicated region
    $region10: #{tpu_custom_call.1} parent=1 // pred_check
      _
    $region11: #{tpu_custom_call.1} parent=1 // pred_check_branch
      %56 = sbr.rel (0) target = $region13
    $region12: #{tpu_custom_call.1} parent=1 // pred_region
      %s58 = ssub.s32 256, 256
      %59 = vsyncadd [#allocation7], %s58
      %s60 = sshll.u32 [#allocation8], 4
      %s61 = int_to_ptr.vmem [resolvable:$true] %s60
      %66 = dma.hbm_to_vmem [thread:$0]  %s2, 256, %s61, [#allocation7], 64, 64, 4
    $region13: #{tpu_custom_call.1} parent=1 // pred_fallthru
      _
    // Predicated region
    $region14: #{tpu_custom_call.1} parent=1 // pred_check
      _
    $region15: #{tpu_custom_call.1} parent=1 // pred_check_branch
      %68 = sbr.rel (0) target = $region17
    $region16: #{tpu_custom_call.1} parent=1 // pred_region
      %s70 = ssub.s32 16, 16
      %71 = vsyncadd [#allocation10], %s70
      %s73 = sshll.u32 [#allocation9], 4
      %s74 = int_to_ptr.vmem [resolvable:$true] %s73
      %76 = dma.hbm_to_vmem [thread:$0]  %s3, 16, %s74, [#allocation10]
    $region17: #{tpu_custom_call.1} parent=1 // pred_fallthru
      _
    // Predicated region
    $region18: #{tpu_custom_call.1} parent=1 // pred_check
      _
    $region19: #{tpu_custom_call.1} parent=1 // pred_check_branch
      %78 = sbr.rel (0) target = $region21
    $region20: #{tpu_custom_call.1} parent=1 // pred_region
      %s80 = ssub.s32 256, 256
      %81 = vsyncadd [#allocation10], %s80
      %s82 = sshll.u32 [#allocation11], 4
      %s83 = int_to_ptr.vmem [resolvable:$true] %s82
      %88 = dma.hbm_to_vmem [thread:$0]  %s4, 256, %s83, [#allocation10], 64, 64, 4
    $region21: #{tpu_custom_call.1} parent=1 // pred_fallthru
      _
    // Predicated region
    $region22: #{tpu_custom_call.1} parent=1 // pred_check
      _
    $region23: #{tpu_custom_call.1} parent=1 // pred_check_branch
      %90 = sbr.rel (0) target = $region25
    $region24: #{tpu_custom_call.1} parent=1 // pred_region
      %s92 = ssub.s32 16, 16
      %93 = vsyncadd [#allocation13], %s92
      %s95 = sshll.u32 [#allocation12], 4
      %s96 = int_to_ptr.vmem [resolvable:$true] %s95
      %98 = dma.hbm_to_vmem [thread:$0]  %s5, 16, %s96, [#allocation13]
    $region25: #{tpu_custom_call.1} parent=1 // pred_fallthru
      _
    // Predicated region
    $region26: #{tpu_custom_call.1} parent=1 // pred_check
      _
    $region27: #{tpu_custom_call.1} parent=1 // pred_check_branch
      %100 = sbr.rel (0) target = $region29
    $region28: #{tpu_custom_call.1} parent=1 // pred_region
      %s102 = ssub.s32 256, 256
      %103 = vsyncadd [#allocation13], %s102
      %s104 = sshll.u32 [#allocation14], 4
      %s105 = int_to_ptr.vmem [resolvable:$true] %s104
      %110 = dma.hbm_to_vmem [thread:$0]  %s6, 256, %s105, [#allocation13], 64, 64, 4
    $region29: #{tpu_custom_call.1} parent=1 // pred_fallthru
      _
    // Predicated region
    $region30: #{tpu_custom_call.1} parent=1 // pred_check
      _
    $region31: #{tpu_custom_call.1} parent=1 // pred_check_branch
      %112 = sbr.rel (0) target = $region33
    $region32: #{tpu_custom_call.1} parent=1 // pred_region
      %s114 = ssub.s32 16, 16
      %115 = vsyncadd [#allocation16], %s114
      %s117 = sshll.u32 [#allocation15], 4
      %s118 = int_to_ptr.vmem [resolvable:$true] %s117
      %120 = dma.hbm_to_vmem [thread:$0]  %s7, 16, %s118, [#allocation16]
    $region33: #{tpu_custom_call.1} parent=1 // pred_fallthru
      _
    // Predicated region
    $region34: #{tpu_custom_call.1} parent=1 // pred_check
      _
    $region35: #{tpu_custom_call.1} parent=1 // pred_check_branch
      %122 = sbr.rel (0) target = $region37
    $region36: #{tpu_custom_call.1} parent=1 // pred_region
      %s124 = ssub.s32 16, 16
      %125 = vsyncadd [#allocation16], %s124
      %s127 = sshll.u32 [#allocation17], 4
      %s128 = int_to_ptr.vmem [resolvable:$true] %s127
      %130 = dma.hbm_to_vmem [thread:$0]  %s8, 16, %s128, [#allocation16]
    $region37: #{tpu_custom_call.1} parent=1 // pred_fallthru
      _
    // Predicated region
    $region38: #{tpu_custom_call.1} parent=1 // pred_check
      _
    $region39: #{tpu_custom_call.1} parent=1 // pred_check_branch
      %132 = sbr.rel (0) target = $region41
    $region40: #{tpu_custom_call.1} parent=1 // pred_region
      %s134 = ssub.s32 16, 16
      %135 = vsyncadd [#allocation19], %s134
      %s137 = sshll.u32 [#allocation18], 4
      %s138 = int_to_ptr.vmem [resolvable:$true] %s137
      %140 = dma.hbm_to_vmem [thread:$0]  %s9, 16, %s138, [#allocation19]
    $region41: #{tpu_custom_call.1} parent=1 // pred_fallthru
      _
    // Predicated region
    $region42: #{tpu_custom_call.1} parent=1 // pred_check
      _
    $region43: #{tpu_custom_call.1} parent=1 // pred_check_branch
      %142 = sbr.rel (0) target = $region45
    $region44: #{tpu_custom_call.1} parent=1 // pred_region
      %s144 = ssub.s32 256, 256
      %145 = vsyncadd [#allocation19], %s144
      %s146 = sshll.u32 [#allocation20], 4
      %s147 = int_to_ptr.vmem [resolvable:$true] %s146
      %152 = dma.hbm_to_vmem [thread:$0]  %s10, 256, %s147, [#allocation19], 64, 64, 4
    $region45: #{tpu_custom_call.1} parent=1 // pred_fallthru
      _
    // Predicated region
    $region46: #{tpu_custom_call.1} parent=1 // pred_check
      _
    $region47: #{tpu_custom_call.1} parent=1 // pred_check_branch
      %154 = sbr.rel (0) target = $region49
    $region48: #{tpu_custom_call.1} parent=1 // pred_region
      %s156 = ssub.s32 16, 16
      %157 = vsyncadd [#allocation22], %s156
      %s159 = sshll.u32 [#allocation21], 4
      %s160 = int_to_ptr.vmem [resolvable:$true] %s159
      %162 = dma.hbm_to_vmem [thread:$0]  %s11, 16, %s160, [#allocation22]
    $region49: #{tpu_custom_call.1} parent=1 // pred_fallthru
      _
    // Predicated region
    $region50: #{tpu_custom_call.1} parent=1 // pred_check
      _
    $region51: #{tpu_custom_call.1} parent=1 // pred_check_branch
      %164 = sbr.rel (0) target = $region53
    $region52: #{tpu_custom_call.1} parent=1 // pred_region
      %s166 = ssub.s32 512, 512
      %167 = vsyncadd [#allocation22], %s166
      %s168 = sshll.u32 [#allocation23], 4
      %s169 = int_to_ptr.vmem [resolvable:$true] %s168
      %174 = dma.hbm_to_vmem [thread:$0]  %s12, 512, %s169, [#allocation22], 64, 64, 4
    $region53: #{tpu_custom_call.1} parent=1 // pred_fallthru
      _
    // Predicated region
    $region54: #{tpu_custom_call.1} parent=1 // pred_check
      _
    $region55: #{tpu_custom_call.1} parent=1 // pred_check_branch
      %176 = sbr.rel (0) target = $region57
    $region56: #{tpu_custom_call.1} parent=1 // pred_region
      %s178 = ssub.s32 16, 16
      %179 = vsyncadd [#allocation25], %s178
      %s181 = sshll.u32 [#allocation24], 4
      %s182 = int_to_ptr.vmem [resolvable:$true] %s181
      %184 = dma.hbm_to_vmem [thread:$0]  %s13, 16, %s182, [#allocation25]
    $region57: #{tpu_custom_call.1} parent=1 // pred_fallthru
      _
    // Predicated region
    $region58: #{tpu_custom_call.1} parent=1 // pred_check
      _
    $region59: #{tpu_custom_call.1} parent=1 // pred_check_branch
      %186 = sbr.rel (0) target = $region61
    $region60: #{tpu_custom_call.1} parent=1 // pred_region
      %s188 = ssub.s32 16, 16
      %189 = vsyncadd [#allocation25], %s188
      %s191 = sshll.u32 [#allocation26], 4
      %s192 = int_to_ptr.vmem [resolvable:$true] %s191
      %194 = dma.hbm_to_vmem [thread:$0]  %s14, 16, %s192, [#allocation25]
    $region61: #{tpu_custom_call.1} parent=1 // pred_fallthru
      _
    // Predicated region
    $region62: #{tpu_custom_call.1} parent=1 // pred_check
      _
    $region63: #{tpu_custom_call.1} parent=1 // pred_check_branch
      %196 = sbr.rel (0) target = $region65
    $region64: #{tpu_custom_call.1} parent=1 // pred_region
      %s198 = ssub.s32 16, 16
      %199 = vsyncadd [#allocation28], %s198
      %s201 = sshll.u32 [#allocation27], 4
      %s202 = int_to_ptr.vmem [resolvable:$true] %s201
      %204 = dma.hbm_to_vmem [thread:$0]  %s15, 16, %s202, [#allocation28]
    $region65: #{tpu_custom_call.1} parent=1 // pred_fallthru
      _
    // Predicated region
    $region66: #{tpu_custom_call.1} parent=1 // pred_check
      _
    $region67: #{tpu_custom_call.1} parent=1 // pred_check_branch
      %206 = sbr.rel (0) target = $region69
    $region68: #{tpu_custom_call.1} parent=1 // pred_region
      %207 = dma.done [#allocation4], 256
    $region69: #{tpu_custom_call.1} parent=1 // pred_fallthru
      _
    // Predicated region
    $region70: #{tpu_custom_call.1} parent=1 // pred_check
      _
    $region71: #{tpu_custom_call.1} parent=1 // pred_check_branch
      %209 = sbr.rel (0) target = $region73
    $region72: #{tpu_custom_call.1} parent=1 // pred_region
      %210 = dma.done [#allocation7], 128
    $region73: #{tpu_custom_call.1} parent=1 // pred_fallthru
      _
    // Predicated region
    $region74: #{tpu_custom_call.1} parent=1 // pred_check
      _
    $region75: #{tpu_custom_call.1} parent=1 // pred_check_branch
      %212 = sbr.rel (0) target = $region77
    $region76: #{tpu_custom_call.1} parent=1 // pred_region
      %213 = dma.done [#allocation7], 256
    $region77: #{tpu_custom_call.1} parent=1 // pred_fallthru
      _
    // Predicated region
    $region78: #{tpu_custom_call.1} parent=1 // pred_check
      _
    $region79: #{tpu_custom_call.1} parent=1 // pred_check_branch
      %215 = sbr.rel (0) target = $region81
    $region80: #{tpu_custom_call.1} parent=1 // pred_region
      %216 = dma.done [#allocation10], 16
    $region81: #{tpu_custom_call.1} parent=1 // pred_fallthru
      _
    // Predicated region
    $region82: #{tpu_custom_call.1} parent=1 // pred_check
      _
    $region83: #{tpu_custom_call.1} parent=1 // pred_check_branch
      %218 = sbr.rel (0) target = $region85
    $region84: #{tpu_custom_call.1} parent=1 // pred_region
      %219 = dma.done [#allocation10], 256
    $region85: #{tpu_custom_call.1} parent=1 // pred_fallthru
      _
    // Predicated region
    $region86: #{tpu_custom_call.1} parent=1 // pred_check
      _
    $region87: #{tpu_custom_call.1} parent=1 // pred_check_branch
      %221 = sbr.rel (0) target = $region89
    $region88: #{tpu_custom_call.1} parent=1 // pred_region
      %222 = dma.done [#allocation13], 16
    $region89: #{tpu_custom_call.1} parent=1 // pred_fallthru
      _
    // Predicated region
    $region90: #{tpu_custom_call.1} parent=1 // pred_check
      _
    $region91: #{tpu_custom_call.1} parent=1 // pred_check_branch
      %224 = sbr.rel (0) target = $region93
    $region92: #{tpu_custom_call.1} parent=1 // pred_region
      %225 = dma.done [#allocation13], 256
    $region93: #{tpu_custom_call.1} parent=1 // pred_fallthru
      _
    // Predicated region
    $region94: #{tpu_custom_call.1} parent=1 // pred_check
      _
    $region95: #{tpu_custom_call.1} parent=1 // pred_check_branch
      %227 = sbr.rel (0) target = $region97
    $region96: #{tpu_custom_call.1} parent=1 // pred_region
      %228 = dma.done [#allocation16], 16
    $region97: #{tpu_custom_call.1} parent=1 // pred_fallthru
      _
    // Predicated region
    $region98: #{tpu_custom_call.1} parent=1 // pred_check
      _
    $region99: #{tpu_custom_call.1} parent=1 // pred_check_branch
      %230 = sbr.rel (0) target = $region101
    $region100: #{tpu_custom_call.1} parent=1 // pred_region
      %231 = dma.done [#allocation16], 16
    $region101: #{tpu_custom_call.1} parent=1 // pred_fallthru
      _
    // Predicated region
    $region102: #{tpu_custom_call.1} parent=1 // pred_check
      _
    $region103: #{tpu_custom_call.1} parent=1 // pred_check_branch
      %233 = sbr.rel (0) target = $region105
    $region104: #{tpu_custom_call.1} parent=1 // pred_region
      %234 = dma.done [#allocation19], 16
    $region105: #{tpu_custom_call.1} parent=1 // pred_fallthru
      _
    // Predicated region
    $region106: #{tpu_custom_call.1} parent=1 // pred_check
      _
    $region107: #{tpu_custom_call.1} parent=1 // pred_check_branch
      %236 = sbr.rel (0) target = $region109
    $region108: #{tpu_custom_call.1} parent=1 // pred_region
      %237 = dma.done [#allocation19], 256
    $region109: #{tpu_custom_call.1} parent=1 // pred_fallthru
      _
    // Predicated region
    $region110: #{tpu_custom_call.1} parent=1 // pred_check
      _
    $region111: #{tpu_custom_call.1} parent=1 // pred_check_branch
      %239 = sbr.rel (0) target = $region113
    $region112: #{tpu_custom_call.1} parent=1 // pred_region
      %240 = dma.done [#allocation22], 16
    $region113: #{tpu_custom_call.1} parent=1 // pred_fallthru
      _
    // Predicated region
    $region114: #{tpu_custom_call.1} parent=1 // pred_check
      _
    $region115: #{tpu_custom_call.1} parent=1 // pred_check_branch
      %242 = sbr.rel (0) target = $region117
    $region116: #{tpu_custom_call.1} parent=1 // pred_region
      %243 = dma.done [#allocation22], 512
    $region117: #{tpu_custom_call.1} parent=1 // pred_fallthru
      _
    // Predicated region
    $region118: #{tpu_custom_call.1} parent=1 // pred_check
      _
    $region119: #{tpu_custom_call.1} parent=1 // pred_check_branch
      %245 = sbr.rel (0) target = $region121
    $region120: #{tpu_custom_call.1} parent=1 // pred_region
      %246 = dma.done [#allocation25], 16
    $region121: #{tpu_custom_call.1} parent=1 // pred_fallthru
      _
    // Predicated region
    $region122: #{tpu_custom_call.1} parent=1 // pred_check
      _
    $region123: #{tpu_custom_call.1} parent=1 // pred_check_branch
      %248 = sbr.rel (0) target = $region125
    $region124: #{tpu_custom_call.1} parent=1 // pred_region
      %249 = dma.done [#allocation25], 16
    $region125: #{tpu_custom_call.1} parent=1 // pred_fallthru
      _
    // Predicated region
    $region126: #{tpu_custom_call.1} parent=1 // pred_check
      _
    $region127: #{tpu_custom_call.1} parent=1 // pred_check_branch
      %251 = sbr.rel (0) target = $region129
    $region128: #{tpu_custom_call.1} parent=1 // pred_region
      %252 = dma.done [#allocation28], 16
    $region129: #{tpu_custom_call.1} parent=1 // pred_fallthru
      _
    %v254 = vld [vmem:[#allocation3] sm:$0xff]
    %v255 = vld [vmem:[#allocation3 + $0x8] sm:$0xff]
    %v256 = vld [vmem:[#allocation6] sm:$0xf]
    %v257 = vld [vmem:[#allocation6 + $0x4] sm:$0xf]
    %v258 = vunpack.c.l.bf16 %v256
    %v259 = vunpack.c.l.bf16 %v257
    %v260 = vadd.f32 %v254, %v258
    %v261 = vadd.f32 %v255, %v259
    %v262 = vpack.c.bf16 %v261, %v260
    %v263 = vld [vmem:[#allocation8] sm:$0xf]
    %v264 = vld [vmem:[#allocation8 + $0x4] sm:$0xf]
    %v265 = vld [vmem:[#allocation8 + $0x8] sm:$0xf]
    %v266 = vld [vmem:[#allocation8 + $0xc] sm:$0xf]
    %v267 = vld [vmem:[#allocation9] sm:$0x1]
    %v269 = vlaneseq
    %v270 = vshrl.u32 %v269, 7
    %v271 = vsub.s32 0, %v270
    %v272 = vrot.slane %v267, %v271
    %v278 = vunpack.c.l.b16 %v263
    %v279 = vunpack.c.l.b16 %v264
    %v280 = vunpack.c.l.b16 %v265
    %v281 = vunpack.c.l.b16 %v266
    %v282 = vpack.c.b16 %v279, %v278
    %v283 = vpack.c.b16 %v281, %v280
    %vm286 = vcmask 261120
    %v288 = vsel %vm286, %v262, 0
    %290 = vmatprep.subr.bf16.mxu0 0
    %291 = vmatpush1.bf16.msra.mxu0 %v282
    %292 = vmatprep.subr.bf16.mxu0 0
    %293 = vmatpush1.bf16.msra.mxu0 %v283
    %294 = vmatprep.subr.bf16.mxu0 0
    %295 = vmatpush1.bf16.msra.mxu0 0
    %296 = vmatprep.subr.bf16.mxu0 0
    %297 = vmatpush1.bf16.msra.mxu0 0
    %298 = vmatprep.subr.bf16.mxu0 0
    %299 = vmatpush1.bf16.msra.mxu0 0
    %300 = vmatprep.subr.bf16.mxu0 0
    %301 = vmatpush1.bf16.msra.mxu0 0
    %302 = vmatprep.subr.bf16.mxu0 0
    %303 = vmatpush1.bf16.msra.mxu0 0
    %304 = vmatprep.subr.bf16.mxu0 0
    %305 = vmatpush1.bf16.msra.mxu0 0
    %306 = vmatprep.subr.bf16.mxu0 0
    %307 = vmatpush1.bf16.msra.mxu0 0
    %308 = vmatprep.subr.bf16.mxu0 0
    %309 = vmatpush1.bf16.msra.mxu0 0
    %310 = vmatprep.subr.bf16.mxu0 0
    %311 = vmatpush1.bf16.msra.mxu0 0
    %312 = vmatprep.subr.bf16.mxu0 0
    %313 = vmatpush1.bf16.msra.mxu0 0
    %314 = vmatprep.subr.bf16.mxu0 0
    %315 = vmatpush1.bf16.msra.mxu0 0
    %316 = vmatprep.subr.bf16.mxu0 0
    %317 = vmatpush1.bf16.msra.mxu0 0
    %318 = vmatprep.subr.bf16.mxu0 0
    %319 = vmatpush1.bf16.msra.mxu0 0
    %320 = vmatprep.subr.bf16.mxu0 0
    %321 = vmatpush1.bf16.msra.mxu0 0
    %322 = vmatprep.mubr.bf16.mxu0 0
    %323 = vmatmul.mubr.bf16.gmra.mrb[0].mxu0 %v288
    %v324 = vpop.f32.mrb[0].mxu0
    %v325 = vadd.f32 %v272, %v324
    %v326 = vpop.f32.mrb[0].mxu0
    %v327 = vpop.f32.mrb[0].mxu0
    %v328 = vadd.f32 %v272, %v327
    %v329 = vpop.f32.mrb[0].mxu0
    %330 = vdwg.mxu0
    %v331 = vpack.c.bf16 %v255, %v254
    %v332 = vld [vmem:[#allocation11] sm:$0xf]
    %v333 = vld [vmem:[#allocation11 + $0x4] sm:$0xf]
    %v334 = vld [vmem:[#allocation11 + $0x8] sm:$0xf]
    %v335 = vld [vmem:[#allocation11 + $0xc] sm:$0xf]
    %v336 = vld [vmem:[#allocation12] sm:$0x1]
    %v338 = vlaneseq
    %v339 = vshrl.u32 %v338, 7
    %v340 = vsub.s32 0, %v339
    %v341 = vrot.slane %v336, %v340
    %v347 = vunpack.c.l.b16 %v332
    %v348 = vunpack.c.l.b16 %v333
    %v349 = vunpack.c.l.b16 %v334
    %v350 = vunpack.c.l.b16 %v335
    %v351 = vpack.c.b16 %v348, %v347
    %v352 = vpack.c.b16 %v350, %v349
    %v356 = vsel %vm286, %v331, 0
    %358 = vmatprep.subr.bf16.mxu0 0
    %359 = vmatpush1.bf16.msra.mxu0 %v351
    %360 = vmatprep.subr.bf16.mxu0 0
    %361 = vmatpush1.bf16.msra.mxu0 %v352
    %362 = vmatprep.subr.bf16.mxu0 0
    %363 = vmatpush1.bf16.msra.mxu0 0
    %364 = vmatprep.subr.bf16.mxu0 0
    %365 = vmatpush1.bf16.msra.mxu0 0
    %366 = vmatprep.subr.bf16.mxu0 0
    %367 = vmatpush1.bf16.msra.mxu0 0
    %368 = vmatprep.subr.bf16.mxu0 0
    %369 = vmatpush1.bf16.msra.mxu0 0
    %370 = vmatprep.subr.bf16.mxu0 0
    %371 = vmatpush1.bf16.msra.mxu0 0
    %372 = vmatprep.subr.bf16.mxu0 0
    %373 = vmatpush1.bf16.msra.mxu0 0
    %374 = vmatprep.subr.bf16.mxu0 0
    %375 = vmatpush1.bf16.msra.mxu0 0
    %376 = vmatprep.subr.bf16.mxu0 0
    %377 = vmatpush1.bf16.msra.mxu0 0
    %378 = vmatprep.subr.bf16.mxu0 0
    %379 = vmatpush1.bf16.msra.mxu0 0
    %380 = vmatprep.subr.bf16.mxu0 0
    %381 = vmatpush1.bf16.msra.mxu0 0
    %382 = vmatprep.subr.bf16.mxu0 0
    %383 = vmatpush1.bf16.msra.mxu0 0
    %384 = vmatprep.subr.bf16.mxu0 0
    %385 = vmatpush1.bf16.msra.mxu0 0
    %386 = vmatprep.subr.bf16.mxu0 0
    %387 = vmatpush1.bf16.msra.mxu0 0
    %388 = vmatprep.subr.bf16.mxu0 0
    %389 = vmatpush1.bf16.msra.mxu0 0
    %390 = vmatprep.mubr.bf16.mxu0 0
    %391 = vmatmul.mubr.bf16.gmra.mrb[0].mxu0 %v356
    %v392 = vpop.f32.mrb[0].mxu0
    %v393 = vadd.f32 %v341, %v392
    %v394 = vpop.f32.mrb[0].mxu0
    %v395 = vpop.f32.mrb[0].mxu0
    %v396 = vadd.f32 %v341, %v395
    %v397 = vpop.f32.mrb[0].mxu0
    %398 = vdwg.mxu0
    %v399 = vpack.c.bf16 %v325, %v325
    %v400 = vpack.c.bf16 %v328, %v328
    %v401 = vpack.c.bf16 %v393, %v393
    %v402 = vpack.c.bf16 %v396, %v396
    %404 = vrot.lane.b32.xlu0 %v399, 96
    %v405 = vpop.permute.xlu0 %404
    %vm406 = vcmask 64512
    %v408 = vsel %vm406, %v399, 0
    %v411 = vsel %vm406, %v405, 0
    %413 = vmatprep.subr.bf16.mxu0 0
    %414 = vmatpush1.bf16.xpose.msra.mxu0 %v411
    %415 = vmatprep.subr.bf16.mxu0 0
    %416 = vmatpush1.bf16.xpose.msra.mxu0 0
    %417 = vmatprep.subr.bf16.mxu0 0
    %418 = vmatpush1.bf16.xpose.msra.mxu0 0
    %419 = vmatprep.subr.bf16.mxu0 0
    %420 = vmatpush1.bf16.xpose.msra.mxu0 0
    %421 = vmatprep.subr.bf16.mxu0 0
    %422 = vmatpush1.bf16.xpose.msra.mxu0 0
    %423 = vmatprep.subr.bf16.mxu0 0
    %424 = vmatpush1.bf16.xpose.msra.mxu0 0
    %425 = vmatprep.subr.bf16.mxu0 0
    %426 = vmatpush1.bf16.xpose.msra.mxu0 0
    %427 = vmatprep.subr.bf16.mxu0 0
    %428 = vmatpush1.bf16.xpose.msra.mxu0 0
    %429 = vmatprep.subr.bf16.mxu0 0
    %430 = vmatpush1.bf16.xpose.msra.mxu0 0
    %431 = vmatprep.subr.bf16.mxu0 0
    %432 = vmatpush1.bf16.xpose.msra.mxu0 0
    %433 = vmatprep.subr.bf16.mxu0 0
    %434 = vmatpush1.bf16.xpose.msra.mxu0 0
    %435 = vmatprep.subr.bf16.mxu0 0
    %436 = vmatpush1.bf16.xpose.msra.mxu0 0
    %437 = vmatprep.subr.bf16.mxu0 0
    %438 = vmatpush1.bf16.xpose.msra.mxu0 0
    %439 = vmatprep.subr.bf16.mxu0 0
    %440 = vmatpush1.bf16.xpose.msra.mxu0 0
    %441 = vmatprep.subr.bf16.mxu0 0
    %442 = vmatpush1.bf16.xpose.msra.mxu0 0
    %443 = vmatprep.subr.bf16.mxu0 0
    %444 = vmatpush1.bf16.xpose.msra.mxu0 0
    %445 = vmatprep.mubr.bf16.mxu0 0
    %446 = vmatmul.mubr.bf16.gmra.mrb[0].mxu0 %v408
    %v447 = vpop.f32.mrb[0].mxu0
    %v448 = vadd.f32 0.0, %v447
    %v449 = vpop.f32.mrb[0].mxu0
    %v450 = vpop.f32.mrb[0].mxu0
    %v451 = vpop.f32.mrb[0].mxu0
    %452 = vdwg.mxu0
    %454 = vrot.lane.b32.xlu0 %v400, 96
    %v455 = vpop.permute.xlu0 %454
    %v457 = vsel %vm406, %v400, 0
    %v460 = vsel %vm406, %v455, 0
    %462 = vmatprep.subr.bf16.mxu0 0
    %463 = vmatpush1.bf16.xpose.msra.mxu0 %v460
    %464 = vmatprep.subr.bf16.mxu0 0
    %465 = vmatpush1.bf16.xpose.msra.mxu0 0
    %466 = vmatprep.subr.bf16.mxu0 0
    %467 = vmatpush1.bf16.xpose.msra.mxu0 0
    %468 = vmatprep.subr.bf16.mxu0 0
    %469 = vmatpush1.bf16.xpose.msra.mxu0 0
    %470 = vmatprep.subr.bf16.mxu0 0
    %471 = vmatpush1.bf16.xpose.msra.mxu0 0
    %472 = vmatprep.subr.bf16.mxu0 0
    %473 = vmatpush1.bf16.xpose.msra.mxu0 0
    %474 = vmatprep.subr.bf16.mxu0 0
    %475 = vmatpush1.bf16.xpose.msra.mxu0 0
    %476 = vmatprep.subr.bf16.mxu0 0
    %477 = vmatpush1.bf16.xpose.msra.mxu0 0
    %478 = vmatprep.subr.bf16.mxu0 0
    %479 = vmatpush1.bf16.xpose.msra.mxu0 0
    %480 = vmatprep.subr.bf16.mxu0 0
    %481 = vmatpush1.bf16.xpose.msra.mxu0 0
    %482 = vmatprep.subr.bf16.mxu0 0
    %483 = vmatpush1.bf16.xpose.msra.mxu0 0
    %484 = vmatprep.subr.bf16.mxu0 0
    %485 = vmatpush1.bf16.xpose.msra.mxu0 0
    %486 = vmatprep.subr.bf16.mxu0 0
    %487 = vmatpush1.bf16.xpose.msra.mxu0 0
    %488 = vmatprep.subr.bf16.mxu0 0
    %489 = vmatpush1.bf16.xpose.msra.mxu0 0
    %490 = vmatprep.subr.bf16.mxu0 0
    %491 = vmatpush1.bf16.xpose.msra.mxu0 0
    %492 = vmatprep.subr.bf16.mxu0 0
    %493 = vmatpush1.bf16.xpose.msra.mxu0 0
    %494 = vmatprep.mubr.bf16.mxu0 0
    %495 = vmatmul.mubr.bf16.gmra.mrb[0].mxu0 %v457
    %v496 = vpop.f32.mrb[0].mxu0
    %v497 = vadd.f32 0.0, %v496
    %v498 = vpop.f32.mrb[0].mxu0
    %v499 = vpop.f32.mrb[0].mxu0
    %v500 = vpop.f32.mrb[0].mxu0
    %501 = vdwg.mxu0
    %v502 = vsel %vm406, %v448, -inf
    %503 = vmax.xlane.f32.xlu0 %v502
    %v504 = vpop.xlane.xlu0 %503
    %v505 = vsel %vm406, %v497, -inf
    %506 = vmax.xlane.f32.xlu0 %v505
    %v507 = vpop.xlane.xlu0 %506
    %v508 = vsub.f32 %v448, %v504
    %v509 = vsub.f32 %v497, %v507
    %v510 = vmul.f32 %v508, 1.442695
    %v511 = vpow.pop %v510
    %v512 = vmul.f32 %v509, 1.442695
    %v513 = vpow.pop %v512
    %v514 = vsel %vm406, %v511, 0.0
    %515 = vadd.xlane.f32.xlu0 %v514
    %v516 = vpop.xlane.xlu0 %515
    %v517 = vsel %vm406, %v513, 0.0
    %518 = vadd.xlane.f32.xlu0 %v517
    %v519 = vpop.xlane.xlu0 %518
    %v520 = vrcp.pop %v516
    %v521 = vrcp.pop %v519
    %v522 = vmul.f32 %v511, %v520
    %v523 = vmul.f32 %v513, %v521
    %v524 = vpack.c.bf16 %v522, %v522
    %v525 = vpack.c.bf16 %v523, %v523
    %v527 = vsel %vm406, %v524, 0
    %vm529 = vcmask 1043456
    %v531 = vsel %vm529, %v401, 0
    %533 = vmatprep.subr.bf16.mxu0 0
    %534 = vmatpush1.bf16.msra.mxu0 %v531
    %535 = vmatprep.subr.bf16.mxu0 0
    %536 = vmatpush1.bf16.msra.mxu0 0
    %537 = vmatprep.subr.bf16.mxu0 0
    %538 = vmatpush1.bf16.msra.mxu0 0
    %539 = vmatprep.subr.bf16.mxu0 0
    %540 = vmatpush1.bf16.msra.mxu0 0
    %541 = vmatprep.subr.bf16.mxu0 0
    %542 = vmatpush1.bf16.msra.mxu0 0
    %543 = vmatprep.subr.bf16.mxu0 0
    %544 = vmatpush1.bf16.msra.mxu0 0
    %545 = vmatprep.subr.bf16.mxu0 0
    %546 = vmatpush1.bf16.msra.mxu0 0
    %547 = vmatprep.subr.bf16.mxu0 0
    %548 = vmatpush1.bf16.msra.mxu0 0
    %549 = vmatprep.subr.bf16.mxu0 0
    %550 = vmatpush1.bf16.msra.mxu0 0
    %551 = vmatprep.subr.bf16.mxu0 0
    %552 = vmatpush1.bf16.msra.mxu0 0
    %553 = vmatprep.subr.bf16.mxu0 0
    %554 = vmatpush1.bf16.msra.mxu0 0
    %555 = vmatprep.subr.bf16.mxu0 0
    %556 = vmatpush1.bf16.msra.mxu0 0
    %557 = vmatprep.subr.bf16.mxu0 0
    %558 = vmatpush1.bf16.msra.mxu0 0
    %559 = vmatprep.subr.bf16.mxu0 0
    %560 = vmatpush1.bf16.msra.mxu0 0
    %561 = vmatprep.subr.bf16.mxu0 0
    %562 = vmatpush1.bf16.msra.mxu0 0
    %563 = vmatprep.subr.bf16.mxu0 0
    %564 = vmatpush1.bf16.msra.mxu0 0
    %565 = vmatprep.mubr.bf16.mxu0 0
    %566 = vmatmul.mubr.bf16.gmra.mrb[0].mxu0 %v527
    %v567 = vpop.f32.mrb[0].mxu0
    %v568 = vadd.f32 0.0, %v567
    %v569 = vpop.f32.mrb[0].mxu0
    %v570 = vpop.f32.mrb[0].mxu0
    %v571 = vpop.f32.mrb[0].mxu0
    %572 = vdwg.mxu0
    %v574 = vsel %vm406, %v525, 0
    %v577 = vsel %vm529, %v402, 0
    %579 = vmatprep.subr.bf16.mxu0 0
    %580 = vmatpush1.bf16.msra.mxu0 %v577
    %581 = vmatprep.subr.bf16.mxu0 0
    %582 = vmatpush1.bf16.msra.mxu0 0
    %583 = vmatprep.subr.bf16.mxu0 0
    %584 = vmatpush1.bf16.msra.mxu0 0
    %585 = vmatprep.subr.bf16.mxu0 0
    %586 = vmatpush1.bf16.msra.mxu0 0
    %587 = vmatprep.subr.bf16.mxu0 0
    %588 = vmatpush1.bf16.msra.mxu0 0
    %589 = vmatprep.subr.bf16.mxu0 0
    %590 = vmatpush1.bf16.msra.mxu0 0
    %591 = vmatprep.subr.bf16.mxu0 0
    %592 = vmatpush1.bf16.msra.mxu0 0
    %593 = vmatprep.subr.bf16.mxu0 0
    %594 = vmatpush1.bf16.msra.mxu0 0
    %595 = vmatprep.subr.bf16.mxu0 0
    %596 = vmatpush1.bf16.msra.mxu0 0
    %597 = vmatprep.subr.bf16.mxu0 0
    %598 = vmatpush1.bf16.msra.mxu0 0
    %599 = vmatprep.subr.bf16.mxu0 0
    %600 = vmatpush1.bf16.msra.mxu0 0
    %601 = vmatprep.subr.bf16.mxu0 0
    %602 = vmatpush1.bf16.msra.mxu0 0
    %603 = vmatprep.subr.bf16.mxu0 0
    %604 = vmatpush1.bf16.msra.mxu0 0
    %605 = vmatprep.subr.bf16.mxu0 0
    %606 = vmatpush1.bf16.msra.mxu0 0
    %607 = vmatprep.subr.bf16.mxu0 0
    %608 = vmatpush1.bf16.msra.mxu0 0
    %609 = vmatprep.subr.bf16.mxu0 0
    %610 = vmatpush1.bf16.msra.mxu0 0
    %611 = vmatprep.mubr.bf16.mxu0 0
    %612 = vmatmul.mubr.bf16.gmra.mrb[0].mxu0 %v574
    %v613 = vpop.f32.mrb[0].mxu0
    %v614 = vadd.f32 0.0, %v613
    %v615 = vpop.f32.mrb[0].mxu0
    %v616 = vpop.f32.mrb[0].mxu0
    %v617 = vpop.f32.mrb[0].mxu0
    %618 = vdwg.mxu0
    %v619 = vpack.c.bf16 %v614, %v568
    %620 = vst.msk [vmem:[#allocation2] sm:$0xff] %vm406, %v619
    %621 = vrot.lane.b32.xlu0 %v399, 120
    %v622 = vpop.permute.xlu0 %621
    %623 = vrot.lane.b32.xlu0 %v399, 88
    %v624 = vpop.permute.xlu0 %623
    %v626 = vsel %vm406, %v622, 0
    %v629 = vsel %vm406, %v624, 0
    %631 = vmatprep.subr.bf16.mxu0 0
    %632 = vmatpush1.bf16.xpose.msra.mxu0 %v629
    %633 = vmatprep.subr.bf16.mxu0 0
    %634 = vmatpush1.bf16.xpose.msra.mxu0 0
    %635 = vmatprep.subr.bf16.mxu0 0
    %636 = vmatpush1.bf16.xpose.msra.mxu0 0
    %637 = vmatprep.subr.bf16.mxu0 0
    %638 = vmatpush1.bf16.xpose.msra.mxu0 0
    %639 = vmatprep.subr.bf16.mxu0 0
    %640 = vmatpush1.bf16.xpose.msra.mxu0 0
    %641 = vmatprep.subr.bf16.mxu0 0
    %642 = vmatpush1.bf16.xpose.msra.mxu0 0
    %643 = vmatprep.subr.bf16.mxu0 0
    %644 = vmatpush1.bf16.xpose.msra.mxu0 0
    %645 = vmatprep.subr.bf16.mxu0 0
    %646 = vmatpush1.bf16.xpose.msra.mxu0 0
    %647 = vmatprep.subr.bf16.mxu0 0
    %648 = vmatpush1.bf16.xpose.msra.mxu0 0
    %649 = vmatprep.subr.bf16.mxu0 0
    %650 = vmatpush1.bf16.xpose.msra.mxu0 0
    %651 = vmatprep.subr.bf16.mxu0 0
    %652 = vmatpush1.bf16.xpose.msra.mxu0 0
    %653 = vmatprep.subr.bf16.mxu0 0
    %654 = vmatpush1.bf16.xpose.msra.mxu0 0
    %655 = vmatprep.subr.bf16.mxu0 0
    %656 = vmatpush1.bf16.xpose.msra.mxu0 0
    %657 = vmatprep.subr.bf16.mxu0 0
    %658 = vmatpush1.bf16.xpose.msra.mxu0 0
    %659 = vmatprep.subr.bf16.mxu0 0
    %660 = vmatpush1.bf16.xpose.msra.mxu0 0
    %661 = vmatprep.subr.bf16.mxu0 0
    %662 = vmatpush1.bf16.xpose.msra.mxu0 0
    %663 = vmatprep.mubr.bf16.mxu0 0
    %664 = vmatmul.mubr.bf16.gmra.mrb[0].mxu0 %v626
    %v665 = vpop.f32.mrb[0].mxu0
    %v666 = vadd.f32 0.0, %v665
    %v667 = vpop.f32.mrb[0].mxu0
    %v668 = vpop.f32.mrb[0].mxu0
    %v669 = vpop.f32.mrb[0].mxu0
    %670 = vdwg.mxu0
    %671 = vrot.lane.b32.xlu0 %v400, 120
    %v672 = vpop.permute.xlu0 %671
    %673 = vrot.lane.b32.xlu0 %v400, 88
    %v674 = vpop.permute.xlu0 %673
    %v676 = vsel %vm406, %v672, 0
    %v679 = vsel %vm406, %v674, 0
    %681 = vmatprep.subr.bf16.mxu0 0
    %682 = vmatpush1.bf16.xpose.msra.mxu0 %v679
    %683 = vmatprep.subr.bf16.mxu0 0
    %684 = vmatpush1.bf16.xpose.msra.mxu0 0
    %685 = vmatprep.subr.bf16.mxu0 0
    %686 = vmatpush1.bf16.xpose.msra.mxu0 0
    %687 = vmatprep.subr.bf16.mxu0 0
    %688 = vmatpush1.bf16.xpose.msra.mxu0 0
    %689 = vmatprep.subr.bf16.mxu0 0
    %690 = vmatpush1.bf16.xpose.msra.mxu0 0
    %691 = vmatprep.subr.bf16.mxu0 0
    %692 = vmatpush1.bf16.xpose.msra.mxu0 0
    %693 = vmatprep.subr.bf16.mxu0 0
    %694 = vmatpush1.bf16.xpose.msra.mxu0 0
    %695 = vmatprep.subr.bf16.mxu0 0
    %696 = vmatpush1.bf16.xpose.msra.mxu0 0
    %697 = vmatprep.subr.bf16.mxu0 0
    %698 = vmatpush1.bf16.xpose.msra.mxu0 0
    %699 = vmatprep.subr.bf16.mxu0 0
    %700 = vmatpush1.bf16.xpose.msra.mxu0 0
    %701 = vmatprep.subr.bf16.mxu0 0
    %702 = vmatpush1.bf16.xpose.msra.mxu0 0
    %703 = vmatprep.subr.bf16.mxu0 0
    %704 = vmatpush1.bf16.xpose.msra.mxu0 0
    %705 = vmatprep.subr.bf16.mxu0 0
    %706 = vmatpush1.bf16.xpose.msra.mxu0 0
    %707 = vmatprep.subr.bf16.mxu0 0
    %708 = vmatpush1.bf16.xpose.msra.mxu0 0
    %709 = vmatprep.subr.bf16.mxu0 0
    %710 = vmatpush1.bf16.xpose.msra.mxu0 0
    %711 = vmatprep.subr.bf16.mxu0 0
    %712 = vmatpush1.bf16.xpose.msra.mxu0 0
    %713 = vmatprep.mubr.bf16.mxu0 0
    %714 = vmatmul.mubr.bf16.gmra.mrb[0].mxu0 %v676
    %v715 = vpop.f32.mrb[0].mxu0
    %v716 = vadd.f32 0.0, %v715
    %v717 = vpop.f32.mrb[0].mxu0
    %v718 = vpop.f32.mrb[0].mxu0
    %v719 = vpop.f32.mrb[0].mxu0
    %720 = vdwg.mxu0
    %v721 = vsel %vm406, %v666, -inf
    %722 = vmax.xlane.f32.xlu0 %v721
    %v723 = vpop.xlane.xlu0 %722
    %v724 = vsel %vm406, %v716, -inf
    %725 = vmax.xlane.f32.xlu0 %v724
    %v726 = vpop.xlane.xlu0 %725
    %v727 = vsub.f32 %v666, %v723
    %v728 = vsub.f32 %v716, %v726
    %v729 = vmul.f32 %v727, 1.442695
    %v730 = vpow.pop %v729
    %v731 = vmul.f32 %v728, 1.442695
    %v732 = vpow.pop %v731
    %v733 = vsel %vm406, %v730, 0.0
    %734 = vadd.xlane.f32.xlu0 %v733
    %v735 = vpop.xlane.xlu0 %734
    %v736 = vsel %vm406, %v732, 0.0
    %737 = vadd.xlane.f32.xlu0 %v736
    %v738 = vpop.xlane.xlu0 %737
    %v739 = vrcp.pop %v735
    %v740 = vrcp.pop %v738
    %v741 = vmul.f32 %v730, %v739
    %v742 = vmul.f32 %v732, %v740
    %v743 = vpack.c.bf16 %v741, %v741
    %v744 = vpack.c.bf16 %v742, %v742
    %746 = vrot.lane.b32.xlu0 %v401, 120
    %v747 = vpop.permute.xlu0 %746
    %v749 = vsel %vm406, %v743, 0
    %v752 = vsel %vm529, %v747, 0
    %754 = vmatprep.subr.bf16.mxu0 0
    %755 = vmatpush1.bf16.msra.mxu0 %v752
    %756 = vmatprep.subr.bf16.mxu0 0
    %757 = vmatpush1.bf16.msra.mxu0 0
    %758 = vmatprep.subr.bf16.mxu0 0
    %759 = vmatpush1.bf16.msra.mxu0 0
    %760 = vmatprep.subr.bf16.mxu0 0
    %761 = vmatpush1.bf16.msra.mxu0 0
    %762 = vmatprep.subr.bf16.mxu0 0
    %763 = vmatpush1.bf16.msra.mxu0 0
    %764 = vmatprep.subr.bf16.mxu0 0
    %765 = vmatpush1.bf16.msra.mxu0 0
    %766 = vmatprep.subr.bf16.mxu0 0
    %767 = vmatpush1.bf16.msra.mxu0 0
    %768 = vmatprep.subr.bf16.mxu0 0
    %769 = vmatpush1.bf16.msra.mxu0 0
    %770 = vmatprep.subr.bf16.mxu0 0
    %771 = vmatpush1.bf16.msra.mxu0 0
    %772 = vmatprep.subr.bf16.mxu0 0
    %773 = vmatpush1.bf16.msra.mxu0 0
    %774 = vmatprep.subr.bf16.mxu0 0
    %775 = vmatpush1.bf16.msra.mxu0 0
    %776 = vmatprep.subr.bf16.mxu0 0
    %777 = vmatpush1.bf16.msra.mxu0 0
    %778 = vmatprep.subr.bf16.mxu0 0
    %779 = vmatpush1.bf16.msra.mxu0 0
    %780 = vmatprep.subr.bf16.mxu0 0
    %781 = vmatpush1.bf16.msra.mxu0 0
    %782 = vmatprep.subr.bf16.mxu0 0
    %783 = vmatpush1.bf16.msra.mxu0 0
    %784 = vmatprep.subr.bf16.mxu0 0
    %785 = vmatpush1.bf16.msra.mxu0 0
    %786 = vmatprep.mubr.bf16.mxu0 0
    %787 = vmatmul.mubr.bf16.gmra.mrb[0].mxu0 %v749
    %v788 = vpop.f32.mrb[0].mxu0
    %v789 = vadd.f32 0.0, %v788
    %v790 = vpop.f32.mrb[0].mxu0
    %v791 = vpop.f32.mrb[0].mxu0
    %v792 = vpop.f32.mrb[0].mxu0
    %793 = vdwg.mxu0
    %795 = vrot.lane.b32.xlu0 %v402, 120
    %v796 = vpop.permute.xlu0 %795
    %v798 = vsel %vm406, %v744, 0
    %v801 = vsel %vm529, %v796, 0
    %803 = vmatprep.subr.bf16.mxu0 0
    %804 = vmatpush1.bf16.msra.mxu0 %v801
    %805 = vmatprep.subr.bf16.mxu0 0
    %806 = vmatpush1.bf16.msra.mxu0 0
    %807 = vmatprep.subr.bf16.mxu0 0
    %808 = vmatpush1.bf16.msra.mxu0 0
    %809 = vmatprep.subr.bf16.mxu0 0
    %810 = vmatpush1.bf16.msra.mxu0 0
    %811 = vmatprep.subr.bf16.mxu0 0
    %812 = vmatpush1.bf16.msra.mxu0 0
    %813 = vmatprep.subr.bf16.mxu0 0
    %814 = vmatpush1.bf16.msra.mxu0 0
    %815 = vmatprep.subr.bf16.mxu0 0
    %816 = vmatpush1.bf16.msra.mxu0 0
    %817 = vmatprep.subr.bf16.mxu0 0
    %818 = vmatpush1.bf16.msra.mxu0 0
    %819 = vmatprep.subr.bf16.mxu0 0
    %820 = vmatpush1.bf16.msra.mxu0 0
    %821 = vmatprep.subr.bf16.mxu0 0
    %822 = vmatpush1.bf16.msra.mxu0 0
    %823 = vmatprep.subr.bf16.mxu0 0
    %824 = vmatpush1.bf16.msra.mxu0 0
    %825 = vmatprep.subr.bf16.mxu0 0
    %826 = vmatpush1.bf16.msra.mxu0 0
    %827 = vmatprep.subr.bf16.mxu0 0
    %828 = vmatpush1.bf16.msra.mxu0 0
    %829 = vmatprep.subr.bf16.mxu0 0
    %830 = vmatpush1.bf16.msra.mxu0 0
    %831 = vmatprep.subr.bf16.mxu0 0
    %832 = vmatpush1.bf16.msra.mxu0 0
    %833 = vmatprep.subr.bf16.mxu0 0
    %834 = vmatpush1.bf16.msra.mxu0 0
    %835 = vmatprep.mubr.bf16.mxu0 0
    %836 = vmatmul.mubr.bf16.gmra.mrb[0].mxu0 %v798
    %v837 = vpop.f32.mrb[0].mxu0
    %v838 = vadd.f32 0.0, %v837
    %v839 = vpop.f32.mrb[0].mxu0
    %v840 = vpop.f32.mrb[0].mxu0
    %v841 = vpop.f32.mrb[0].mxu0
    %842 = vdwg.mxu0
    %v843 = vpack.c.bf16 %v838, %v789
    %845 = vrot.lane.b32.xlu0 %v843, 8
    %v846 = vpop.permute.xlu0 %845
    %vm848 = vcmask 130112
    %849 = vst.msk [vmem:[#allocation2] sm:$0xff] %vm848, %v846
    %850 = vrot.lane.b32.xlu0 %v399, 112
    %v851 = vpop.permute.xlu0 %850
    %852 = vrot.lane.b32.xlu0 %v399, 80
    %v853 = vpop.permute.xlu0 %852
    %v855 = vsel %vm406, %v851, 0
    %v858 = vsel %vm406, %v853, 0
    %860 = vmatprep.subr.bf16.mxu0 0
    %861 = vmatpush1.bf16.xpose.msra.mxu0 %v858
    %862 = vmatprep.subr.bf16.mxu0 0
    %863 = vmatpush1.bf16.xpose.msra.mxu0 0
    %864 = vmatprep.subr.bf16.mxu0 0
    %865 = vmatpush1.bf16.xpose.msra.mxu0 0
    %866 = vmatprep.subr.bf16.mxu0 0
    %867 = vmatpush1.bf16.xpose.msra.mxu0 0
    %868 = vmatprep.subr.bf16.mxu0 0
    %869 = vmatpush1.bf16.xpose.msra.mxu0 0
    %870 = vmatprep.subr.bf16.mxu0 0
    %871 = vmatpush1.bf16.xpose.msra.mxu0 0
    %872 = vmatprep.subr.bf16.mxu0 0
    %873 = vmatpush1.bf16.xpose.msra.mxu0 0
    %874 = vmatprep.subr.bf16.mxu0 0
    %875 = vmatpush1.bf16.xpose.msra.mxu0 0
    %876 = vmatprep.subr.bf16.mxu0 0
    %877 = vmatpush1.bf16.xpose.msra.mxu0 0
    %878 = vmatprep.subr.bf16.mxu0 0
    %879 = vmatpush1.bf16.xpose.msra.mxu0 0
    %880 = vmatprep.subr.bf16.mxu0 0
    %881 = vmatpush1.bf16.xpose.msra.mxu0 0
    %882 = vmatprep.subr.bf16.mxu0 0
    %883 = vmatpush1.bf16.xpose.msra.mxu0 0
    %884 = vmatprep.subr.bf16.mxu0 0
    %885 = vmatpush1.bf16.xpose.msra.mxu0 0
    %886 = vmatprep.subr.bf16.mxu0 0
    %887 = vmatpush1.bf16.xpose.msra.mxu0 0
    %888 = vmatprep.subr.bf16.mxu0 0
    %889 = vmatpush1.bf16.xpose.msra.mxu0 0
    %890 = vmatprep.subr.bf16.mxu0 0
    %891 = vmatpush1.bf16.xpose.msra.mxu0 0
    %892 = vmatprep.mubr.bf16.mxu0 0
    %893 = vmatmul.mubr.bf16.gmra.mrb[0].mxu0 %v855
    %v894 = vpop.f32.mrb[0].mxu0
    %v895 = vadd.f32 0.0, %v894
    %v896 = vpop.f32.mrb[0].mxu0
    %v897 = vpop.f32.mrb[0].mxu0
    %v898 = vpop.f32.mrb[0].mxu0
    %899 = vdwg.mxu0
    %900 = vrot.lane.b32.xlu0 %v400, 112
    %v901 = vpop.permute.xlu0 %900
    %902 = vrot.lane.b32.xlu0 %v400, 80
    %v903 = vpop.permute.xlu0 %902
    %v905 = vsel %vm406, %v901, 0
    %v908 = vsel %vm406, %v903, 0
    %910 = vmatprep.subr.bf16.mxu0 0
    %911 = vmatpush1.bf16.xpose.msra.mxu0 %v908
    %912 = vmatprep.subr.bf16.mxu0 0
    %913 = vmatpush1.bf16.xpose.msra.mxu0 0
    %914 = vmatprep.subr.bf16.mxu0 0
    %915 = vmatpush1.bf16.xpose.msra.mxu0 0
    %916 = vmatprep.subr.bf16.mxu0 0
    %917 = vmatpush1.bf16.xpose.msra.mxu0 0
    %918 = vmatprep.subr.bf16.mxu0 0
    %919 = vmatpush1.bf16.xpose.msra.mxu0 0
    %920 = vmatprep.subr.bf16.mxu0 0
    %921 = vmatpush1.bf16.xpose.msra.mxu0 0
    %922 = vmatprep.subr.bf16.mxu0 0
    %923 = vmatpush1.bf16.xpose.msra.mxu0 0
    %924 = vmatprep.subr.bf16.mxu0 0
    %925 = vmatpush1.bf16.xpose.msra.mxu0 0
    %926 = vmatprep.subr.bf16.mxu0 0
    %927 = vmatpush1.bf16.xpose.msra.mxu0 0
    %928 = vmatprep.subr.bf16.mxu0 0
    %929 = vmatpush1.bf16.xpose.msra.mxu0 0
    %930 = vmatprep.subr.bf16.mxu0 0
    %931 = vmatpush1.bf16.xpose.msra.mxu0 0
    %932 = vmatprep.subr.bf16.mxu0 0
    %933 = vmatpush1.bf16.xpose.msra.mxu0 0
    %934 = vmatprep.subr.bf16.mxu0 0
    %935 = vmatpush1.bf16.xpose.msra.mxu0 0
    %936 = vmatprep.subr.bf16.mxu0 0
    %937 = vmatpush1.bf16.xpose.msra.mxu0 0
    %938 = vmatprep.subr.bf16.mxu0 0
    %939 = vmatpush1.bf16.xpose.msra.mxu0 0
    %940 = vmatprep.subr.bf16.mxu0 0
    %941 = vmatpush1.bf16.xpose.msra.mxu0 0
    %942 = vmatprep.mubr.bf16.mxu0 0
    %943 = vmatmul.mubr.bf16.gmra.mrb[0].mxu0 %v905
    %v944 = vpop.f32.mrb[0].mxu0
    %v945 = vadd.f32 0.0, %v944
    %v946 = vpop.f32.mrb[0].mxu0
    %v947 = vpop.f32.mrb[0].mxu0
    %v948 = vpop.f32.mrb[0].mxu0
    %949 = vdwg.mxu0
    %v950 = vsel %vm406, %v895, -inf
    %951 = vmax.xlane.f32.xlu0 %v950
    %v952 = vpop.xlane.xlu0 %951
    %v953 = vsel %vm406, %v945, -inf
    %954 = vmax.xlane.f32.xlu0 %v953
    %v955 = vpop.xlane.xlu0 %954
    %v956 = vsub.f32 %v895, %v952
    %v957 = vsub.f32 %v945, %v955
    %v958 = vmul.f32 %v956, 1.442695
    %v959 = vpow.pop %v958
    %v960 = vmul.f32 %v957, 1.442695
    %v961 = vpow.pop %v960
    %v962 = vsel %vm406, %v959, 0.0
    %963 = vadd.xlane.f32.xlu0 %v962
    %v964 = vpop.xlane.xlu0 %963
    %v965 = vsel %vm406, %v961, 0.0
    %966 = vadd.xlane.f32.xlu0 %v965
    %v967 = vpop.xlane.xlu0 %966
    %v968 = vrcp.pop %v964
    %v969 = vrcp.pop %v967
    %v970 = vmul.f32 %v959, %v968
    %v971 = vmul.f32 %v961, %v969
    %v972 = vpack.c.bf16 %v970, %v970
    %v973 = vpack.c.bf16 %v971, %v971
    %974 = vrot.lane.b32.xlu0 %v401, 112
    %v975 = vpop.permute.xlu0 %974
    %v977 = vsel %vm406, %v972, 0
    %v980 = vsel %vm529, %v975, 0
    %982 = vmatprep.subr.bf16.mxu0 0
    %983 = vmatpush1.bf16.msra.mxu0 %v980
    %984 = vmatprep.subr.bf16.mxu0 0
    %985 = vmatpush1.bf16.msra.mxu0 0
    %986 = vmatprep.subr.bf16.mxu0 0
    %987 = vmatpush1.bf16.msra.mxu0 0
    %988 = vmatprep.subr.bf16.mxu0 0
    %989 = vmatpush1.bf16.msra.mxu0 0
    %990 = vmatprep.subr.bf16.mxu0 0
    %991 = vmatpush1.bf16.msra.mxu0 0
    %992 = vmatprep.subr.bf16.mxu0 0
    %993 = vmatpush1.bf16.msra.mxu0 0
    %994 = vmatprep.subr.bf16.mxu0 0
    %995 = vmatpush1.bf16.msra.mxu0 0
    %996 = vmatprep.subr.bf16.mxu0 0
    %997 = vmatpush1.bf16.msra.mxu0 0
    %998 = vmatprep.subr.bf16.mxu0 0
    %999 = vmatpush1.bf16.msra.mxu0 0
    %1000 = vmatprep.subr.bf16.mxu0 0
    %1001 = vmatpush1.bf16.msra.mxu0 0
    %1002 = vmatprep.subr.bf16.mxu0 0
    %1003 = vmatpush1.bf16.msra.mxu0 0
    %1004 = vmatprep.subr.bf16.mxu0 0
    %1005 = vmatpush1.bf16.msra.mxu0 0
    %1006 = vmatprep.subr.bf16.mxu0 0
    %1007 = vmatpush1.bf16.msra.mxu0 0
    %1008 = vmatprep.subr.bf16.mxu0 0
    %1009 = vmatpush1.bf16.msra.mxu0 0
    %1010 = vmatprep.subr.bf16.mxu0 0
    %1011 = vmatpush1.bf16.msra.mxu0 0
    %1012 = vmatprep.subr.bf16.mxu0 0
    %1013 = vmatpush1.bf16.msra.mxu0 0
    %1014 = vmatprep.mubr.bf16.mxu0 0
    %1015 = vmatmul.mubr.bf16.gmra.mrb[0].mxu0 %v977
    %v1016 = vpop.f32.mrb[0].mxu0
    %v1017 = vadd.f32 0.0, %v1016
    %v1018 = vpop.f32.mrb[0].mxu0
    %v1019 = vpop.f32.mrb[0].mxu0
    %v1020 = vpop.f32.mrb[0].mxu0
    %1021 = vdwg.mxu0
    %1022 = vrot.lane.b32.xlu0 %v402, 112
    %v1023 = vpop.permute.xlu0 %1022
    %v1025 = vsel %vm406, %v973, 0
    %v1028 = vsel %vm529, %v1023, 0
    %1030 = vmatprep.subr.bf16.mxu0 0
    %1031 = vmatpush1.bf16.msra.mxu0 %v1028
    %1032 = vmatprep.subr.bf16.mxu0 0
    %1033 = vmatpush1.bf16.msra.mxu0 0
    %1034 = vmatprep.subr.bf16.mxu0 0
    %1035 = vmatpush1.bf16.msra.mxu0 0
    %1036 = vmatprep.subr.bf16.mxu0 0
    %1037 = vmatpush1.bf16.msra.mxu0 0
    %1038 = vmatprep.subr.bf16.mxu0 0
    %1039 = vmatpush1.bf16.msra.mxu0 0
    %1040 = vmatprep.subr.bf16.mxu0 0
    %1041 = vmatpush1.bf16.msra.mxu0 0
    %1042 = vmatprep.subr.bf16.mxu0 0
    %1043 = vmatpush1.bf16.msra.mxu0 0
    %1044 = vmatprep.subr.bf16.mxu0 0
    %1045 = vmatpush1.bf16.msra.mxu0 0
    %1046 = vmatprep.subr.bf16.mxu0 0
    %1047 = vmatpush1.bf16.msra.mxu0 0
    %1048 = vmatprep.subr.bf16.mxu0 0
    %1049 = vmatpush1.bf16.msra.mxu0 0
    %1050 = vmatprep.subr.bf16.mxu0 0
    %1051 = vmatpush1.bf16.msra.mxu0 0
    %1052 = vmatprep.subr.bf16.mxu0 0
    %1053 = vmatpush1.bf16.msra.mxu0 0
    %1054 = vmatprep.subr.bf16.mxu0 0
    %1055 = vmatpush1.bf16.msra.mxu0 0
    %1056 = vmatprep.subr.bf16.mxu0 0
    %1057 = vmatpush1.bf16.msra.mxu0 0
    %1058 = vmatprep.subr.bf16.mxu0 0
    %1059 = vmatpush1.bf16.msra.mxu0 0
    %1060 = vmatprep.subr.bf16.mxu0 0
    %1061 = vmatpush1.bf16.msra.mxu0 0
    %1062 = vmatprep.mubr.bf16.mxu0 0
    %1063 = vmatmul.mubr.bf16.gmra.mrb[0].mxu0 %v1025
    %v1064 = vpop.f32.mrb[0].mxu0
    %v1065 = vadd.f32 0.0, %v1064
    %v1066 = vpop.f32.mrb[0].mxu0
    %v1067 = vpop.f32.mrb[0].mxu0
    %v1068 = vpop.f32.mrb[0].mxu0
    %1069 = vdwg.mxu0
    %v1070 = vpack.c.bf16 %v1065, %v1017
    %1072 = vrot.lane.b32.xlu0 %v1070, 16
    %v1073 = vpop.permute.xlu0 %1072
    %vm1075 = vcmask 195712
    %1076 = vst.msk [vmem:[#allocation2] sm:$0xff] %vm1075, %v1073
    %1077 = vrot.lane.b32.xlu0 %v399, 104
    %v1078 = vpop.permute.xlu0 %1077
    %1079 = vrot.lane.b32.xlu0 %v399, 72
    %v1080 = vpop.permute.xlu0 %1079
    %v1082 = vsel %vm406, %v1078, 0
    %v1085 = vsel %vm406, %v1080, 0
    %1087 = vmatprep.subr.bf16.mxu0 0
    %1088 = vmatpush1.bf16.xpose.msra.mxu0 %v1085
    %1089 = vmatprep.subr.bf16.mxu0 0
    %1090 = vmatpush1.bf16.xpose.msra.mxu0 0
    %1091 = vmatprep.subr.bf16.mxu0 0
    %1092 = vmatpush1.bf16.xpose.msra.mxu0 0
    %1093 = vmatprep.subr.bf16.mxu0 0
    %1094 = vmatpush1.bf16.xpose.msra.mxu0 0
    %1095 = vmatprep.subr.bf16.mxu0 0
    %1096 = vmatpush1.bf16.xpose.msra.mxu0 0
    %1097 = vmatprep.subr.bf16.mxu0 0
    %1098 = vmatpush1.bf16.xpose.msra.mxu0 0
    %1099 = vmatprep.subr.bf16.mxu0 0
    %1100 = vmatpush1.bf16.xpose.msra.mxu0 0
    %1101 = vmatprep.subr.bf16.mxu0 0
    %1102 = vmatpush1.bf16.xpose.msra.mxu0 0
    %1103 = vmatprep.subr.bf16.mxu0 0
    %1104 = vmatpush1.bf16.xpose.msra.mxu0 0
    %1105 = vmatprep.subr.bf16.mxu0 0
    %1106 = vmatpush1.bf16.xpose.msra.mxu0 0
    %1107 = vmatprep.subr.bf16.mxu0 0
    %1108 = vmatpush1.bf16.xpose.msra.mxu0 0
    %1109 = vmatprep.subr.bf16.mxu0 0
    %1110 = vmatpush1.bf16.xpose.msra.mxu0 0
    %1111 = vmatprep.subr.bf16.mxu0 0
    %1112 = vmatpush1.bf16.xpose.msra.mxu0 0
    %1113 = vmatprep.subr.bf16.mxu0 0
    %1114 = vmatpush1.bf16.xpose.msra.mxu0 0
    %1115 = vmatprep.subr.bf16.mxu0 0
    %1116 = vmatpush1.bf16.xpose.msra.mxu0 0
    %1117 = vmatprep.subr.bf16.mxu0 0
    %1118 = vmatpush1.bf16.xpose.msra.mxu0 0
    %1119 = vmatprep.mubr.bf16.mxu0 0
    %1120 = vmatmul.mubr.bf16.gmra.mrb[0].mxu0 %v1082
    %v1121 = vpop.f32.mrb[0].mxu0
    %v1122 = vadd.f32 0.0, %v1121
    %v1123 = vpop.f32.mrb[0].mxu0
    %v1124 = vpop.f32.mrb[0].mxu0
    %v1125 = vpop.f32.mrb[0].mxu0
    %1126 = vdwg.mxu0
    %1127 = vrot.lane.b32.xlu0 %v400, 104
    %v1128 = vpop.permute.xlu0 %1127
    %1129 = vrot.lane.b32.xlu0 %v400, 72
    %v1130 = vpop.permute.xlu0 %1129
    %v1132 = vsel %vm406, %v1128, 0
    %v1135 = vsel %vm406, %v1130, 0
    %1137 = vmatprep.subr.bf16.mxu0 0
    %1138 = vmatpush1.bf16.xpose.msra.mxu0 %v1135
    %1139 = vmatprep.subr.bf16.mxu0 0
    %1140 = vmatpush1.bf16.xpose.msra.mxu0 0
    %1141 = vmatprep.subr.bf16.mxu0 0
    %1142 = vmatpush1.bf16.xpose.msra.mxu0 0
    %1143 = vmatprep.subr.bf16.mxu0 0
    %1144 = vmatpush1.bf16.xpose.msra.mxu0 0
    %1145 = vmatprep.subr.bf16.mxu0 0
    %1146 = vmatpush1.bf16.xpose.msra.mxu0 0
    %1147 = vmatprep.subr.bf16.mxu0 0
    %1148 = vmatpush1.bf16.xpose.msra.mxu0 0
    %1149 = vmatprep.subr.bf16.mxu0 0
    %1150 = vmatpush1.bf16.xpose.msra.mxu0 0
    %1151 = vmatprep.subr.bf16.mxu0 0
    %1152 = vmatpush1.bf16.xpose.msra.mxu0 0
    %1153 = vmatprep.subr.bf16.mxu0 0
    %1154 = vmatpush1.bf16.xpose.msra.mxu0 0
    %1155 = vmatprep.subr.bf16.mxu0 0
    %1156 = vmatpush1.bf16.xpose.msra.mxu0 0
    %1157 = vmatprep.subr.bf16.mxu0 0
    %1158 = vmatpush1.bf16.xpose.msra.mxu0 0
    %1159 = vmatprep.subr.bf16.mxu0 0
    %1160 = vmatpush1.bf16.xpose.msra.mxu0 0
    %1161 = vmatprep.subr.bf16.mxu0 0
    %1162 = vmatpush1.bf16.xpose.msra.mxu0 0
    %1163 = vmatprep.subr.bf16.mxu0 0
    %1164 = vmatpush1.bf16.xpose.msra.mxu0 0
    %1165 = vmatprep.subr.bf16.mxu0 0
    %1166 = vmatpush1.bf16.xpose.msra.mxu0 0
    %1167 = vmatprep.subr.bf16.mxu0 0
    %1168 = vmatpush1.bf16.xpose.msra.mxu0 0
    %1169 = vmatprep.mubr.bf16.mxu0 0
    %1170 = vmatmul.mubr.bf16.gmra.mrb[0].mxu0 %v1132
    %v1171 = vpop.f32.mrb[0].mxu0
    %v1172 = vadd.f32 0.0, %v1171
    %v1173 = vpop.f32.mrb[0].mxu0
    %v1174 = vpop.f32.mrb[0].mxu0
    %v1175 = vpop.f32.mrb[0].mxu0
    %1176 = vdwg.mxu0
    %v1177 = vsel %vm406, %v1122, -inf
    %1178 = vmax.xlane.f32.xlu0 %v1177
    %v1179 = vpop.xlane.xlu0 %1178
    %v1180 = vsel %vm406, %v1172, -inf
    %1181 = vmax.xlane.f32.xlu0 %v1180
    %v1182 = vpop.xlane.xlu0 %1181
    %v1183 = vsub.f32 %v1122, %v1179
    %v1184 = vsub.f32 %v1172, %v1182
    %v1185 = vmul.f32 %v1183, 1.442695
    %v1186 = vpow.pop %v1185
    %v1187 = vmul.f32 %v1184, 1.442695
    %v1188 = vpow.pop %v1187
    %v1189 = vsel %vm406, %v1186, 0.0
    %1190 = vadd.xlane.f32.xlu0 %v1189
    %v1191 = vpop.xlane.xlu0 %1190
    %v1192 = vsel %vm406, %v1188, 0.0
    %1193 = vadd.xlane.f32.xlu0 %v1192
    %v1194 = vpop.xlane.xlu0 %1193
    %v1195 = vrcp.pop %v1191
    %v1196 = vrcp.pop %v1194
    %v1197 = vmul.f32 %v1186, %v1195
    %v1198 = vmul.f32 %v1188, %v1196
    %v1199 = vpack.c.bf16 %v1197, %v1197
    %v1200 = vpack.c.bf16 %v1198, %v1198
    %1201 = vrot.lane.b32.xlu0 %v401, 104
    %v1202 = vpop.permute.xlu0 %1201
    %v1204 = vsel %vm406, %v1199, 0
    %v1207 = vsel %vm529, %v1202, 0
    %1209 = vmatprep.subr.bf16.mxu0 0
    %1210 = vmatpush1.bf16.msra.mxu0 %v1207
    %1211 = vmatprep.subr.bf16.mxu0 0
    %1212 = vmatpush1.bf16.msra.mxu0 0
    %1213 = vmatprep.subr.bf16.mxu0 0
    %1214 = vmatpush1.bf16.msra.mxu0 0
    %1215 = vmatprep.subr.bf16.mxu0 0
    %1216 = vmatpush1.bf16.msra.mxu0 0
    %1217 = vmatprep.subr.bf16.mxu0 0
    %1218 = vmatpush1.bf16.msra.mxu0 0
    %1219 = vmatprep.subr.bf16.mxu0 0
    %1220 = vmatpush1.bf16.msra.mxu0 0
    %1221 = vmatprep.subr.bf16.mxu0 0
    %1222 = vmatpush1.bf16.msra.mxu0 0
    %1223 = vmatprep.subr.bf16.mxu0 0
    %1224 = vmatpush1.bf16.msra.mxu0 0
    %1225 = vmatprep.subr.bf16.mxu0 0
    %1226 = vmatpush1.bf16.msra.mxu0 0
    %1227 = vmatprep.subr.bf16.mxu0 0
    %1228 = vmatpush1.bf16.msra.mxu0 0
    %1229 = vmatprep.subr.bf16.mxu0 0
    %1230 = vmatpush1.bf16.msra.mxu0 0
    %1231 = vmatprep.subr.bf16.mxu0 0
    %1232 = vmatpush1.bf16.msra.mxu0 0
    %1233 = vmatprep.subr.bf16.mxu0 0
    %1234 = vmatpush1.bf16.msra.mxu0 0
    %1235 = vmatprep.subr.bf16.mxu0 0
    %1236 = vmatpush1.bf16.msra.mxu0 0
    %1237 = vmatprep.subr.bf16.mxu0 0
    %1238 = vmatpush1.bf16.msra.mxu0 0
    %1239 = vmatprep.subr.bf16.mxu0 0
    %1240 = vmatpush1.bf16.msra.mxu0 0
    %1241 = vmatprep.mubr.bf16.mxu0 0
    %1242 = vmatmul.mubr.bf16.gmra.mrb[0].mxu0 %v1204
    %v1243 = vpop.f32.mrb[0].mxu0
    %v1244 = vadd.f32 0.0, %v1243
    %v1245 = vpop.f32.mrb[0].mxu0
    %v1246 = vpop.f32.mrb[0].mxu0
    %v1247 = vpop.f32.mrb[0].mxu0
    %1248 = vdwg.mxu0
    %1249 = vrot.lane.b32.xlu0 %v402, 104
    %v1250 = vpop.permute.xlu0 %1249
    %v1252 = vsel %vm406, %v1200, 0
    %v1255 = vsel %vm529, %v1250, 0
    %1257 = vmatprep.subr.bf16.mxu0 0
    %1258 = vmatpush1.bf16.msra.mxu0 %v1255
    %1259 = vmatprep.subr.bf16.mxu0 0
    %1260 = vmatpush1.bf16.msra.mxu0 0
    %1261 = vmatprep.subr.bf16.mxu0 0
    %1262 = vmatpush1.bf16.msra.mxu0 0
    %1263 = vmatprep.subr.bf16.mxu0 0
    %1264 = vmatpush1.bf16.msra.mxu0 0
    %1265 = vmatprep.subr.bf16.mxu0 0
    %1266 = vmatpush1.bf16.msra.mxu0 0
    %1267 = vmatprep.subr.bf16.mxu0 0
    %1268 = vmatpush1.bf16.msra.mxu0 0
    %1269 = vmatprep.subr.bf16.mxu0 0
    %1270 = vmatpush1.bf16.msra.mxu0 0
    %1271 = vmatprep.subr.bf16.mxu0 0
    %1272 = vmatpush1.bf16.msra.mxu0 0
    %1273 = vmatprep.subr.bf16.mxu0 0
    %1274 = vmatpush1.bf16.msra.mxu0 0
    %1275 = vmatprep.subr.bf16.mxu0 0
    %1276 = vmatpush1.bf16.msra.mxu0 0
    %1277 = vmatprep.subr.bf16.mxu0 0
    %1278 = vmatpush1.bf16.msra.mxu0 0
    %1279 = vmatprep.subr.bf16.mxu0 0
    %1280 = vmatpush1.bf16.msra.mxu0 0
    %1281 = vmatprep.subr.bf16.mxu0 0
    %1282 = vmatpush1.bf16.msra.mxu0 0
    %1283 = vmatprep.subr.bf16.mxu0 0
    %1284 = vmatpush1.bf16.msra.mxu0 0
    %1285 = vmatprep.subr.bf16.mxu0 0
    %1286 = vmatpush1.bf16.msra.mxu0 0
    %1287 = vmatprep.subr.bf16.mxu0 0
    %1288 = vmatpush1.bf16.msra.mxu0 0
    %1289 = vmatprep.mubr.bf16.mxu0 0
    %1290 = vmatmul.mubr.bf16.gmra.mrb[0].mxu0 %v1252
    %v1291 = vpop.f32.mrb[0].mxu0
    %v1292 = vadd.f32 0.0, %v1291
    %v1293 = vpop.f32.mrb[0].mxu0
    %v1294 = vpop.f32.mrb[0].mxu0
    %v1295 = vpop.f32.mrb[0].mxu0
    %1296 = vdwg.mxu0
    %v1297 = vpack.c.bf16 %v1292, %v1244
    %1299 = vrot.lane.b32.xlu0 %v1297, 24
    %v1300 = vpop.permute.xlu0 %1299
    %vm1302 = vcmask 261312
    %1303 = vst.msk [vmem:[#allocation2] sm:$0xff] %vm1302, %v1300
    %v1304 = vld [vmem:[#allocation2] sm:$0xff]
    %v1305 = vld [vmem:[#allocation14] sm:$0xf]
    %v1306 = vld [vmem:[#allocation14 + $0x4] sm:$0xf]
    %v1307 = vld [vmem:[#allocation14 + $0x8] sm:$0xf]
    %v1308 = vld [vmem:[#allocation14 + $0xc] sm:$0xf]
    %v1309 = vld [vmem:[#allocation15] sm:$0x1]
    %v1311 = vlaneseq
    %v1312 = vshrl.u32 %v1311, 7
    %v1313 = vsub.s32 0, %v1312
    %v1314 = vrot.slane %v1309, %v1313
    %v1320 = vunpack.c.l.b16 %v1305
    %v1321 = vunpack.c.l.b16 %v1306
    %v1322 = vunpack.c.l.b16 %v1307
    %v1323 = vunpack.c.l.b16 %v1308
    %v1324 = vpack.c.b16 %v1321, %v1320
    %v1325 = vpack.c.b16 %v1323, %v1322
    %v1329 = vsel %vm286, %v1304, 0
    %1331 = vmatprep.subr.bf16.mxu0 0
    %1332 = vmatpush1.bf16.msra.mxu0 %v1324
    %1333 = vmatprep.subr.bf16.mxu0 0
    %1334 = vmatpush1.bf16.msra.mxu0 %v1325
    %1335 = vmatprep.subr.bf16.mxu0 0
    %1336 = vmatpush1.bf16.msra.mxu0 0
    %1337 = vmatprep.subr.bf16.mxu0 0
    %1338 = vmatpush1.bf16.msra.mxu0 0
    %1339 = vmatprep.subr.bf16.mxu0 0
    %1340 = vmatpush1.bf16.msra.mxu0 0
    %1341 = vmatprep.subr.bf16.mxu0 0
    %1342 = vmatpush1.bf16.msra.mxu0 0
    %1343 = vmatprep.subr.bf16.mxu0 0
    %1344 = vmatpush1.bf16.msra.mxu0 0
    %1345 = vmatprep.subr.bf16.mxu0 0
    %1346 = vmatpush1.bf16.msra.mxu0 0
    %1347 = vmatprep.subr.bf16.mxu0 0
    %1348 = vmatpush1.bf16.msra.mxu0 0
    %1349 = vmatprep.subr.bf16.mxu0 0
    %1350 = vmatpush1.bf16.msra.mxu0 0
    %1351 = vmatprep.subr.bf16.mxu0 0
    %1352 = vmatpush1.bf16.msra.mxu0 0
    %1353 = vmatprep.subr.bf16.mxu0 0
    %1354 = vmatpush1.bf16.msra.mxu0 0
    %1355 = vmatprep.subr.bf16.mxu0 0
    %1356 = vmatpush1.bf16.msra.mxu0 0
    %1357 = vmatprep.subr.bf16.mxu0 0
    %1358 = vmatpush1.bf16.msra.mxu0 0
    %1359 = vmatprep.subr.bf16.mxu0 0
    %1360 = vmatpush1.bf16.msra.mxu0 0
    %1361 = vmatprep.subr.bf16.mxu0 0
    %1362 = vmatpush1.bf16.msra.mxu0 0
    %1363 = vmatprep.mubr.bf16.mxu0 0
    %1364 = vmatmul.mubr.bf16.gmra.mrb[0].mxu0 %v1329
    %v1365 = vpop.f32.mrb[0].mxu0
    %v1366 = vadd.f32 %v1314, %v1365
    %v1367 = vpop.f32.mrb[0].mxu0
    %v1368 = vpop.f32.mrb[0].mxu0
    %v1369 = vadd.f32 %v1314, %v1368
    %v1370 = vpop.f32.mrb[0].mxu0
    %1371 = vdwg.mxu0
    %v1372 = vadd.f32 %v254, %v1366
    %v1373 = vadd.f32 %v255, %v1369
    %v1374 = vsel %vm286, %v1372, 0.0
    %1375 = vadd.xlane.f32.xlu0 %v1374
    %v1376 = vpop.xlane.xlu0 %1375
    %v1377 = vsel %vm286, %v1373, 0.0
    %1378 = vadd.xlane.f32.xlu0 %v1377
    %v1379 = vpop.xlane.xlu0 %1378
    %v1380 = vrcp.pop 32.0
    %v1381 = vmul.f32 %v1376, %v1380
    %v1382 = vmul.f32 %v1379, %v1380
    %v1383 = vsub.f32 %v1372, %v1381
    %v1384 = vsub.f32 %v1373, %v1382
    %v1385 = vmul.f32 %v1383, %v1383
    %v1386 = vmul.f32 %v1384, %v1384
    %v1387 = vsel %vm286, %v1385, 0.0
    %1388 = vadd.xlane.f32.xlu0 %v1387
    %v1389 = vpop.xlane.xlu0 %1388
    %v1390 = vsel %vm286, %v1386, 0.0
    %1391 = vadd.xlane.f32.xlu0 %v1390
    %v1392 = vpop.xlane.xlu0 %1391
    %v1393 = vmul.f32 %v1389, %v1380
    %v1394 = vmul.f32 %v1392, %v1380
    %v1395 = vadd.f32 %v1393, 1e-05
    %v1396 = vadd.f32 %v1394, 1e-05
    %v1397 = vrsqrt.pop %v1395
    %v1398 = vrsqrt.pop %v1396
    %v1399 = vmul.f32 %v1383, %v1397
    %v1400 = vmul.f32 %v1384, %v1398
    %v1401 = vld [vmem:[#allocation17] sm:$0x1]
    %v1403 = vlaneseq
    %v1404 = vshrl.u32 %v1403, 7
    %v1405 = vsub.s32 0, %v1404
    %v1406 = vrot.slane %v1401, %v1405
    %v1408 = vmul.f32 %v1399, %v1406
    %v1409 = vmul.f32 %v1400, %v1406
    %v1410 = vld [vmem:[#allocation18] sm:$0x1]
    %v1412 = vlaneseq
    %v1413 = vshrl.u32 %v1412, 7
    %v1414 = vsub.s32 0, %v1413
    %v1415 = vrot.slane %v1410, %v1414
    %v1417 = vadd.f32 %v1408, %v1415
    %v1418 = vadd.f32 %v1409, %v1415
    %v1419 = vpack.c.bf16 %v1418, %v1417
    %v1420 = vld [vmem:[#allocation20] sm:$0xf]
    %v1421 = vld [vmem:[#allocation20 + $0x4] sm:$0xf]
    %v1422 = vld [vmem:[#allocation20 + $0x8] sm:$0xf]
    %v1423 = vld [vmem:[#allocation20 + $0xc] sm:$0xf]
    %v1424 = vld [vmem:[#allocation21] sm:$0x1]
    %v1426 = vlaneseq
    %v1427 = vshrl.u32 %v1426, 7
    %v1428 = vsub.s32 0, %v1427
    %v1429 = vrot.slane %v1424, %v1428
    %v1435 = vunpack.c.l.b16 %v1420
    %v1436 = vunpack.c.l.b16 %v1421
    %v1437 = vunpack.c.l.b16 %v1422
    %v1438 = vunpack.c.l.b16 %v1423
    %v1439 = vpack.c.b16 %v1436, %v1435
    %v1440 = vpack.c.b16 %v1438, %v1437
    %v1444 = vsel %vm286, %v1419, 0
    %1446 = vmatprep.subr.bf16.mxu0 0
    %1447 = vmatpush1.bf16.msra.mxu0 %v1439
    %1448 = vmatprep.subr.bf16.mxu0 0
    %1449 = vmatpush1.bf16.msra.mxu0 %v1440
    %1450 = vmatprep.subr.bf16.mxu0 0
    %1451 = vmatpush1.bf16.msra.mxu0 0
    %1452 = vmatprep.subr.bf16.mxu0 0
    %1453 = vmatpush1.bf16.msra.mxu0 0
    %1454 = vmatprep.subr.bf16.mxu0 0
    %1455 = vmatpush1.bf16.msra.mxu0 0
    %1456 = vmatprep.subr.bf16.mxu0 0
    %1457 = vmatpush1.bf16.msra.mxu0 0
    %1458 = vmatprep.subr.bf16.mxu0 0
    %1459 = vmatpush1.bf16.msra.mxu0 0
    %1460 = vmatprep.subr.bf16.mxu0 0
    %1461 = vmatpush1.bf16.msra.mxu0 0
    %1462 = vmatprep.subr.bf16.mxu0 0
    %1463 = vmatpush1.bf16.msra.mxu0 0
    %1464 = vmatprep.subr.bf16.mxu0 0
    %1465 = vmatpush1.bf16.msra.mxu0 0
    %1466 = vmatprep.subr.bf16.mxu0 0
    %1467 = vmatpush1.bf16.msra.mxu0 0
    %1468 = vmatprep.subr.bf16.mxu0 0
    %1469 = vmatpush1.bf16.msra.mxu0 0
    %1470 = vmatprep.subr.bf16.mxu0 0
    %1471 = vmatpush1.bf16.msra.mxu0 0
    %1472 = vmatprep.subr.bf16.mxu0 0
    %1473 = vmatpush1.bf16.msra.mxu0 0
    %1474 = vmatprep.subr.bf16.mxu0 0
    %1475 = vmatpush1.bf16.msra.mxu0 0
    %1476 = vmatprep.subr.bf16.mxu0 0
    %1477 = vmatpush1.bf16.msra.mxu0 0
    %1478 = vmatprep.mubr.bf16.mxu0 0
    %1479 = vmatmul.mubr.bf16.gmra.mrb[0].mxu0 %v1444
    %v1480 = vpop.f32.mrb[0].mxu0
    %v1481 = vadd.f32 %v1429, %v1480
    %v1482 = vpop.f32.mrb[0].mxu0
    %v1483 = vpop.f32.mrb[0].mxu0
    %v1484 = vadd.f32 %v1429, %v1483
    %v1485 = vpop.f32.mrb[0].mxu0
    %1486 = vdwg.mxu0
    %v1487 = vmax.f32 %v1481, 0.0
    %v1488 = vmax.f32 %v1484, 0.0
    %v1489 = vpack.c.bf16 %v1488, %v1487
    %v1490 = vld [vmem:[#allocation23] sm:$0xf]
    %v1491 = vld [vmem:[#allocation23 + $0x4] sm:$0xf]
    %v1492 = vld [vmem:[#allocation23 + $0x8] sm:$0xf]
    %v1493 = vld [vmem:[#allocation23 + $0xc] sm:$0xf]
    %v1494 = vld [vmem:[#allocation23 + $0x10] sm:$0xf]
    %v1495 = vld [vmem:[#allocation23 + $0x14] sm:$0xf]
    %v1496 = vld [vmem:[#allocation23 + $0x18] sm:$0xf]
    %v1497 = vld [vmem:[#allocation23 + $0x1c] sm:$0xf]
    %v1498 = vld [vmem:[#allocation24] sm:$0x1]
    %v1500 = vlaneseq
    %v1501 = vshrl.u32 %v1500, 7
    %v1502 = vsub.s32 0, %v1501
    %v1503 = vrot.slane %v1498, %v1502
    %v1513 = vunpack.c.l.b16 %v1490
    %v1514 = vunpack.c.l.b16 %v1491
    %v1515 = vunpack.c.l.b16 %v1492
    %v1516 = vunpack.c.l.b16 %v1493
    %v1517 = vunpack.c.l.b16 %v1494
    %v1518 = vunpack.c.l.b16 %v1495
    %v1519 = vunpack.c.l.b16 %v1496
    %v1520 = vunpack.c.l.b16 %v1497
    %v1521 = vpack.c.b16 %v1514, %v1513
    %v1522 = vpack.c.b16 %v1516, %v1515
    %v1523 = vpack.c.b16 %v1518, %v1517
    %v1524 = vpack.c.b16 %v1520, %v1519
    %vm1529 = vcmask 523264
    %v1531 = vsel %vm1529, %v1489, 0
    %1533 = vmatprep.subr.bf16.mxu0 0
    %1534 = vmatpush1.bf16.msra.mxu0 %v1521
    %1535 = vmatprep.subr.bf16.mxu0 0
    %1536 = vmatpush1.bf16.msra.mxu0 %v1522
    %1537 = vmatprep.subr.bf16.mxu0 0
    %1538 = vmatpush1.bf16.msra.mxu0 %v1523
    %1539 = vmatprep.subr.bf16.mxu0 0
    %1540 = vmatpush1.bf16.msra.mxu0 %v1524
    %1541 = vmatprep.subr.bf16.mxu0 0
    %1542 = vmatpush1.bf16.msra.mxu0 0
    %1543 = vmatprep.subr.bf16.mxu0 0
    %1544 = vmatpush1.bf16.msra.mxu0 0
    %1545 = vmatprep.subr.bf16.mxu0 0
    %1546 = vmatpush1.bf16.msra.mxu0 0
    %1547 = vmatprep.subr.bf16.mxu0 0
    %1548 = vmatpush1.bf16.msra.mxu0 0
    %1549 = vmatprep.subr.bf16.mxu0 0
    %1550 = vmatpush1.bf16.msra.mxu0 0
    %1551 = vmatprep.subr.bf16.mxu0 0
    %1552 = vmatpush1.bf16.msra.mxu0 0
    %1553 = vmatprep.subr.bf16.mxu0 0
    %1554 = vmatpush1.bf16.msra.mxu0 0
    %1555 = vmatprep.subr.bf16.mxu0 0
    %1556 = vmatpush1.bf16.msra.mxu0 0
    %1557 = vmatprep.subr.bf16.mxu0 0
    %1558 = vmatpush1.bf16.msra.mxu0 0
    %1559 = vmatprep.subr.bf16.mxu0 0
    %1560 = vmatpush1.bf16.msra.mxu0 0
    %1561 = vmatprep.subr.bf16.mxu0 0
    %1562 = vmatpush1.bf16.msra.mxu0 0
    %1563 = vmatprep.subr.bf16.mxu0 0
    %1564 = vmatpush1.bf16.msra.mxu0 0
    %1565 = vmatprep.mubr.bf16.mxu0 0
    %1566 = vmatmul.mubr.bf16.gmra.mrb[0].mxu0 %v1531
    %v1567 = vpop.f32.mrb[0].mxu0
    %v1568 = vadd.f32 %v1503, %v1567
    %v1569 = vpop.f32.mrb[0].mxu0
    %v1570 = vpop.f32.mrb[0].mxu0
    %v1571 = vadd.f32 %v1503, %v1570
    %v1572 = vpop.f32.mrb[0].mxu0
    %1573 = vdwg.mxu0
    %v1574 = vadd.f32 %v1417, %v1568
    %v1575 = vadd.f32 %v1418, %v1571
    %v1576 = vsel %vm286, %v1574, 0.0
    %1577 = vadd.xlane.f32.xlu0 %v1576
    %v1578 = vpop.xlane.xlu0 %1577
    %v1579 = vsel %vm286, %v1575, 0.0
    %1580 = vadd.xlane.f32.xlu0 %v1579
    %v1581 = vpop.xlane.xlu0 %1580
    %v1582 = vmul.f32 %v1578, %v1380
    %v1583 = vmul.f32 %v1581, %v1380
    %v1584 = vsub.f32 %v1574, %v1582
    %v1585 = vsub.f32 %v1575, %v1583
    %v1586 = vmul.f32 %v1584, %v1584
    %v1587 = vmul.f32 %v1585, %v1585
    %v1588 = vsel %vm286, %v1586, 0.0
    %1589 = vadd.xlane.f32.xlu0 %v1588
    %v1590 = vpop.xlane.xlu0 %1589
    %v1591 = vsel %vm286, %v1587, 0.0
    %1592 = vadd.xlane.f32.xlu0 %v1591
    %v1593 = vpop.xlane.xlu0 %1592
    %v1594 = vmul.f32 %v1590, %v1380
    %v1595 = vmul.f32 %v1593, %v1380
    %v1596 = vadd.f32 %v1594, 1e-05
    %v1597 = vadd.f32 %v1595, 1e-05
    %v1598 = vrsqrt.pop %v1596
    %v1599 = vrsqrt.pop %v1597
    %v1600 = vmul.f32 %v1584, %v1598
    %v1601 = vmul.f32 %v1585, %v1599
    %v1602 = vld [vmem:[#allocation26] sm:$0x1]
    %v1604 = vlaneseq
    %v1605 = vshrl.u32 %v1604, 7
    %v1606 = vsub.s32 0, %v1605
    %v1607 = vrot.slane %v1602, %v1606
    %v1609 = vmul.f32 %v1600, %v1607
    %v1610 = vmul.f32 %v1601, %v1607
    %v1611 = vld [vmem:[#allocation27] sm:$0x1]
    %v1613 = vlaneseq
    %v1614 = vshrl.u32 %v1613, 7
    %v1615 = vsub.s32 0, %v1614
    %v1616 = vrot.slane %v1611, %v1615
    %v1618 = vadd.f32 %v1609, %v1616
    %v1619 = vadd.f32 %v1610, %v1616
    %1620 = vst.msk [vmem:[#allocation29] sm:$0xff] %vm286, %v1618
    %1621 = vst.msk [vmem:[#allocation29 + $0x8] sm:$0xff] %vm286, %v1619
    // Predicated region
    $region130: #{tpu_custom_call.1} parent=1 // pred_check
      _
    $region131: #{tpu_custom_call.1} parent=1 // pred_check_branch
      %1623 = sbr.rel (0) target = $region133
    $region132: #{tpu_custom_call.1} parent=1 // pred_region
      %s1625 = ssub.s32 256, 256
      %1626 = vsyncadd [#allocation5], %s1625
      %s1627 = sshll.u32 [#allocation29], 4
      %s1628 = int_to_ptr.vmem [resolvable:$true] %s1627
      %1633 = dma.vmem_to_hbm [thread:$0]  %s1628, 256, %s16, [#allocation5], 128, 128, 8
    $region133: #{tpu_custom_call.1} parent=1 // pred_fallthru
      _
    // Predicated region
    $region134: #{tpu_custom_call.1} parent=1 // pred_check
      _
    $region135: #{tpu_custom_call.1} parent=1 // pred_check_branch
      %1635 = sbr.rel (0) target = $region137
    $region136: #{tpu_custom_call.1} parent=1 // pred_region
      %1636 = dma.done [#allocation5], 256
    $region137: #{tpu_custom_call.1} parent=1 // pred_fallthru
      _
    %1637 = vsyncpa [#allocation4], 1
    %1638 = vsyncpa [#allocation7], 1
    %1639 = vsyncpa [#allocation10], 1
    %1640 = vsyncpa [#allocation13], 1
    %1641 = vsyncpa [#allocation16], 1
    %1642 = vsyncpa [#allocation19], 1
    %1643 = vsyncpa [#allocation22], 1
    %1644 = vsyncpa [#allocation25], 1
    %1645 = vsyncpa [#allocation28], 1
    %1646 = vsyncpa [#allocation5], 1

// kernel: tpu_custom_call.1
$region0: #{tpu_custom_call.1}
  #allocation0 [shape = 'u32[]', space=smem, size = 0x4, offset = 0x4, fixed_abs, tag = 'smem constant byte address 0x4 - core index']
  #allocation1 [shape = 'u32[144,128]{1,0:T(1,128)}', space=vmem, size = 0x12000, scoped, tag = 'internal scratch']
  #allocation2 [shape = 'bf16[16,32]{1,0:T(16,128)(2,1)}', space=vmem, size = 0x1000, scoped, tag = 'scratch operand']
  %s0 = inlined_call_operand.hbm [shape: f32[16,32], index: 0, kind: input, shape index: {}]
  %s1 = inlined_call_operand.hbm [shape: bf16[16,32], index: 1, kind: input, shape index: {}]
  %s2 = inlined_call_operand.hbm [shape: bf16[32,64], index: 2, kind: input, shape index: {}]
  %s3 = inlined_call_operand.hbm [shape: f32[1,64], index: 3, kind: input, shape index: {}]
  %s4 = inlined_call_operand.hbm [shape: bf16[32,32], index: 4, kind: input, shape index: {}]
  %s5 = inlined_call_operand.hbm [shape: f32[1,32], index: 5, kind: input, shape index: {}]
  %s6 = inlined_call_operand.hbm [shape: bf16[32,32], index: 6, kind: input, shape index: {}]
  %s7 = inlined_call_operand.hbm [shape: f32[1,32], index: 7, kind: input, shape index: {}]
  %s8 = inlined_call_operand.hbm [shape: f32[1,32], index: 8, kind: input, shape index: {}]
  %s9 = inlined_call_operand.hbm [shape: f32[1,32], index: 9, kind: input, shape index: {}]
  %s10 = inlined_call_operand.hbm [shape: bf16[32,64], index: 10, kind: input, shape index: {}]
  %s11 = inlined_call_operand.hbm [shape: f32[1,64], index: 11, kind: input, shape index: {}]
  %s12 = inlined_call_operand.hbm [shape: bf16[64,32], index: 12, kind: input, shape index: {}]
  %s13 = inlined_call_operand.hbm [shape: f32[1,32], index: 13, kind: input, shape index: {}]
  %s14 = inlined_call_operand.hbm [shape: f32[1,32], index: 14, kind: input, shape index: {}]
  %s15 = inlined_call_operand.hbm [shape: f32[1,32], index: 15, kind: input, shape index: {}]
  %s16 = inlined_call_operand.hbm [shape: f32[16,32], index: 16, kind: output, shape index: {}]
  %s17 = sld [smem:[#allocation0]]
  $region138: #{tpu_custom_call.1} parent=0
    _
  %s19 = ssub.s32 1, %s17
  %s20 = scalar_select 0, %s19, %s17
  $region1: #{tpu_custom_call.1} parent=0
    #allocation3 [shape = 'u8[8192]{0}', space=vmem, size = 0x2000, scoped, tag = 'input window, operand 0, single buffered']
    #allocation4 [shape = 's32[1]{0}', space=sflag, size = 0x4, scoped, tag = 'scoped memory for tpu_custom_call.1']
    #allocation5 [shape = 's32[1]{0}', space=sflag, size = 0x4, scoped, tag = 'scoped memory for tpu_custom_call.1']
    #allocation6 [shape = 'u8[4096]{0}', space=vmem, size = 0x1000, scoped, tag = 'input window, operand 1, single buffered']
    #allocation7 [shape = 's32[1]{0}', space=sflag, size = 0x4, scoped, tag = 'scoped memory for tpu_custom_call.1']
    #allocation8 [shape = 'u8[8192]{0}', space=vmem, size = 0x2000, scoped, tag = 'input window, operand 2, single buffered']
    #allocation9 [shape = 'u8[512]{0}', space=vmem, size = 0x400, scoped, tag = 'input window, operand 3, single buffered']
    #allocation10 [shape = 's32[1]{0}', space=sflag, size = 0x4, scoped, tag = 'scoped memory for tpu_custom_call.1']
    #allocation11 [shape = 'u8[8192]{0}', space=vmem, size = 0x2000, scoped, tag = 'input window, operand 4, single buffered']
    #allocation12 [shape = 'u8[512]{0}', space=vmem, size = 0x400, scoped, tag = 'input window, operand 5, single buffered']
    #allocation13 [shape = 's32[1]{0}', space=sflag, size = 0x4, scoped, tag = 'scoped memory for tpu_custom_call.1']
    #allocation14 [shape = 'u8[8192]{0}', space=vmem, size = 0x2000, scoped, tag = 'input window, operand 6, single buffered']
    #allocation15 [shape = 'u8[512]{0}', space=vmem, size = 0x400, scoped, tag = 'input window, operand 7, single buffered']
    #allocation16 [shape = 's32[1]{0}', space=sflag, size = 0x4, scoped, tag = 'scoped memory for tpu_custom_call.1']
    #allocation17 [shape = 'u8[512]{0}', space=vmem, size = 0x400, scoped, tag = 'input window, operand 8, single buffered']
    #allocation18 [shape = 'u8[512]{0}', space=vmem, size = 0x400, scoped, tag = 'input window, operand 9, single buffered']
    #allocation19 [shape = 's32[1]{0}', space=sflag, size = 0x4, scoped, tag = 'scoped memory for tpu_custom_call.1']
    #allocation20 [shape = 'u8[8192]{0}', space=vmem, size = 0x2000, scoped, tag = 'input window, operand 10, single buffered']
    #allocation21 [shape = 'u8[512]{0}', space=vmem, size = 0x400, scoped, tag = 'input window, operand 11, single buffered']
    #allocation22 [shape = 's32[1]{0}', space=sflag, size = 0x4, scoped, tag = 'scoped memory for tpu_custom_call.1']
    #allocation23 [shape = 'u8[16384]{0}', space=vmem, size = 0x4000, scoped, tag = 'input window, operand 12, single buffered']
    #allocation24 [shape = 'u8[512]{0}', space=vmem, size = 0x400, scoped, tag = 'input window, operand 13, single buffered']
    #allocation25 [shape = 's32[1]{0}', space=sflag, size = 0x4, scoped, tag = 'scoped memory for tpu_custom_call.1']
    #allocation26 [shape = 'u8[512]{0}', space=vmem, size = 0x400, scoped, tag = 'input window, operand 14, single buffered']
    #allocation27 [shape = 'u8[512]{0}', space=vmem, size = 0x400, scoped, tag = 'input window, operand 15, single buffered']
    #allocation28 [shape = 's32[1]{0}', space=sflag, size = 0x4, scoped, tag = 'scoped memory for tpu_custom_call.1']
    #allocation29 [shape = 'u8[8192]{0}', space=vmem, size = 0x2000, scoped, tag = 'output window, operand 0, single buffered']
    %21 = vsyncpa [#allocation4], 0
    %22 = vsyncpa [#allocation7], 0
    %23 = vsyncpa [#allocation10], 0
    %24 = vsyncpa [#allocation13], 0
    %25 = vsyncpa [#allocation16], 0
    %26 = vsyncpa [#allocation19], 0
    %27 = vsyncpa [#allocation22], 0
    %28 = vsyncpa [#allocation25], 0
    %29 = vsyncpa [#allocation28], 0
    %30 = vsyncpa [#allocation5], 0
    // Predicated region
    $region2: #{tpu_custom_call.1} parent=1 // pred_check
      _
    $region3: #{tpu_custom_call.1} parent=1 // pred_check_branch
      %32 = sbr.rel (0) target = $region5
    $region4: #{tpu_custom_call.1} parent=1 // pred_region
      %s34 = ssub.s32 256, 256
      %35 = vsyncadd [#allocation4], %s34
      %s36 = sshll.u32 [#allocation3], 4
      %s37 = int_to_ptr.vmem [resolvable:$true] %s36
      %42 = dma.hbm_to_vmem [thread:$0]  %s0, 256, %s37, [#allocation4], 128, 128, 8
    $region5: #{tpu_custom_call.1} parent=1 // pred_fallthru
      _
    // Predicated region
    $region6: #{tpu_custom_call.1} parent=1 // pred_check
      _
    $region7: #{tpu_custom_call.1} parent=1 // pred_check_branch
      %44 = sbr.rel (0) target = $region9
    $region8: #{tpu_custom_call.1} parent=1 // pred_region
      %s46 = ssub.s32 128, 128
      %47 = vsyncadd [#allocation7], %s46
      %s48 = sshll.u32 [#allocation6], 4
      %s49 = int_to_ptr.vmem [resolvable:$true] %s48
      %54 = dma.hbm_to_vmem [thread:$0]  %s1, 128, %s49, [#allocation7], 64, 64, 4
    $region9: #{tpu_custom_call.1} parent=1 // pred_fallthru
      _
    // Predicated region
    $region10: #{tpu_custom_call.1} parent=1 // pred_check
      _
    $region11: #{tpu_custom_call.1} parent=1 // pred_check_branch
      %56 = sbr.rel (0) target = $region13
    $region12: #{tpu_custom_call.1} parent=1 // pred_region
      %s58 = ssub.s32 256, 256
      %59 = vsyncadd [#allocation7], %s58
      %s60 = sshll.u32 [#allocation8], 4
      %s61 = int_to_ptr.vmem [resolvable:$true] %s60
      %66 = dma.hbm_to_vmem [thread:$0]  %s2, 256, %s61, [#allocation7], 64, 64, 4
    $region13: #{tpu_custom_call.1} parent=1 // pred_fallthru
      _
    // Predicated region
    $region14: #{tpu_custom_call.1} parent=1 // pred_check
      _
    $region15: #{tpu_custom_call.1} parent=1 // pred_check_branch
      %68 = sbr.rel (0) target = $region17
    $region16: #{tpu_custom_call.1} parent=1 // pred_region
      %s70 = ssub.s32 16, 16
      %71 = vsyncadd [#allocation10], %s70
      %s73 = sshll.u32 [#allocation9], 4
      %s74 = int_to_ptr.vmem [resolvable:$true] %s73
      %76 = dma.hbm_to_vmem [thread:$0]  %s3, 16, %s74, [#allocation10]
    $region17: #{tpu_custom_call.1} parent=1 // pred_fallthru
      _
    // Predicated region
    $region18: #{tpu_custom_call.1} parent=1 // pred_check
      _
    $region19: #{tpu_custom_call.1} parent=1 // pred_check_branch
      %78 = sbr.rel (0) target = $region21
    $region20: #{tpu_custom_call.1} parent=1 // pred_region
      %s80 = ssub.s32 256, 256
      %81 = vsyncadd [#allocation10], %s80
      %s82 = sshll.u32 [#allocation11], 4
      %s83 = int_to_ptr.vmem [resolvable:$true] %s82
      %88 = dma.hbm_to_vmem [thread:$0]  %s4, 256, %s83, [#allocation10], 64, 64, 4
    $region21: #{tpu_custom_call.1} parent=1 // pred_fallthru
      _
    // Predicated region
    $region22: #{tpu_custom_call.1} parent=1 // pred_check
      _
    $region23: #{tpu_custom_call.1} parent=1 // pred_check_branch
      %90 = sbr.rel (0) target = $region25
    $region24: #{tpu_custom_call.1} parent=1 // pred_region
      %s92 = ssub.s32 16, 16
      %93 = vsyncadd [#allocation13], %s92
      %s95 = sshll.u32 [#allocation12], 4
      %s96 = int_to_ptr.vmem [resolvable:$true] %s95
      %98 = dma.hbm_to_vmem [thread:$0]  %s5, 16, %s96, [#allocation13]
    $region25: #{tpu_custom_call.1} parent=1 // pred_fallthru
      _
    // Predicated region
    $region26: #{tpu_custom_call.1} parent=1 // pred_check
      _
    $region27: #{tpu_custom_call.1} parent=1 // pred_check_branch
      %100 = sbr.rel (0) target = $region29
    $region28: #{tpu_custom_call.1} parent=1 // pred_region
      %s102 = ssub.s32 256, 256
      %103 = vsyncadd [#allocation13], %s102
      %s104 = sshll.u32 [#allocation14], 4
      %s105 = int_to_ptr.vmem [resolvable:$true] %s104
      %110 = dma.hbm_to_vmem [thread:$0]  %s6, 256, %s105, [#allocation13], 64, 64, 4
    $region29: #{tpu_custom_call.1} parent=1 // pred_fallthru
      _
    // Predicated region
    $region30: #{tpu_custom_call.1} parent=1 // pred_check
      _
    $region31: #{tpu_custom_call.1} parent=1 // pred_check_branch
      %112 = sbr.rel (0) target = $region33
    $region32: #{tpu_custom_call.1} parent=1 // pred_region
      %s114 = ssub.s32 16, 16
      %115 = vsyncadd [#allocation16], %s114
      %s117 = sshll.u32 [#allocation15], 4
      %s118 = int_to_ptr.vmem [resolvable:$true] %s117
      %120 = dma.hbm_to_vmem [thread:$0]  %s7, 16, %s118, [#allocation16]
    $region33: #{tpu_custom_call.1} parent=1 // pred_fallthru
      _
    // Predicated region
    $region34: #{tpu_custom_call.1} parent=1 // pred_check
      _
    $region35: #{tpu_custom_call.1} parent=1 // pred_check_branch
      %122 = sbr.rel (0) target = $region37
    $region36: #{tpu_custom_call.1} parent=1 // pred_region
      %s124 = ssub.s32 16, 16
      %125 = vsyncadd [#allocation16], %s124
      %s127 = sshll.u32 [#allocation17], 4
      %s128 = int_to_ptr.vmem [resolvable:$true] %s127
      %130 = dma.hbm_to_vmem [thread:$0]  %s8, 16, %s128, [#allocation16]
    $region37: #{tpu_custom_call.1} parent=1 // pred_fallthru
      _
    // Predicated region
    $region38: #{tpu_custom_call.1} parent=1 // pred_check
      _
    $region39: #{tpu_custom_call.1} parent=1 // pred_check_branch
      %132 = sbr.rel (0) target = $region41
    $region40: #{tpu_custom_call.1} parent=1 // pred_region
      %s134 = ssub.s32 16, 16
      %135 = vsyncadd [#allocation19], %s134
      %s137 = sshll.u32 [#allocation18], 4
      %s138 = int_to_ptr.vmem [resolvable:$true] %s137
      %140 = dma.hbm_to_vmem [thread:$0]  %s9, 16, %s138, [#allocation19]
    $region41: #{tpu_custom_call.1} parent=1 // pred_fallthru
      _
    // Predicated region
    $region42: #{tpu_custom_call.1} parent=1 // pred_check
      _
    $region43: #{tpu_custom_call.1} parent=1 // pred_check_branch
      %142 = sbr.rel (0) target = $region45
    $region44: #{tpu_custom_call.1} parent=1 // pred_region
      %s144 = ssub.s32 256, 256
      %145 = vsyncadd [#allocation19], %s144
      %s146 = sshll.u32 [#allocation20], 4
      %s147 = int_to_ptr.vmem [resolvable:$true] %s146
      %152 = dma.hbm_to_vmem [thread:$0]  %s10, 256, %s147, [#allocation19], 64, 64, 4
    $region45: #{tpu_custom_call.1} parent=1 // pred_fallthru
      _
    // Predicated region
    $region46: #{tpu_custom_call.1} parent=1 // pred_check
      _
    $region47: #{tpu_custom_call.1} parent=1 // pred_check_branch
      %154 = sbr.rel (0) target = $region49
    $region48: #{tpu_custom_call.1} parent=1 // pred_region
      %s156 = ssub.s32 16, 16
      %157 = vsyncadd [#allocation22], %s156
      %s159 = sshll.u32 [#allocation21], 4
      %s160 = int_to_ptr.vmem [resolvable:$true] %s159
      %162 = dma.hbm_to_vmem [thread:$0]  %s11, 16, %s160, [#allocation22]
    $region49: #{tpu_custom_call.1} parent=1 // pred_fallthru
      _
    // Predicated region
    $region50: #{tpu_custom_call.1} parent=1 // pred_check
      _
    $region51: #{tpu_custom_call.1} parent=1 // pred_check_branch
      %164 = sbr.rel (0) target = $region53
    $region52: #{tpu_custom_call.1} parent=1 // pred_region
      %s166 = ssub.s32 512, 512
      %167 = vsyncadd [#allocation22], %s166
      %s168 = sshll.u32 [#allocation23], 4
      %s169 = int_to_ptr.vmem [resolvable:$true] %s168
      %174 = dma.hbm_to_vmem [thread:$0]  %s12, 512, %s169, [#allocation22], 64, 64, 4
    $region53: #{tpu_custom_call.1} parent=1 // pred_fallthru
      _
    // Predicated region
    $region54: #{tpu_custom_call.1} parent=1 // pred_check
      _
    $region55: #{tpu_custom_call.1} parent=1 // pred_check_branch
      %176 = sbr.rel (0) target = $region57
    $region56: #{tpu_custom_call.1} parent=1 // pred_region
      %s178 = ssub.s32 16, 16
      %179 = vsyncadd [#allocation25], %s178
      %s181 = sshll.u32 [#allocation24], 4
      %s182 = int_to_ptr.vmem [resolvable:$true] %s181
      %184 = dma.hbm_to_vmem [thread:$0]  %s13, 16, %s182, [#allocation25]
    $region57: #{tpu_custom_call.1} parent=1 // pred_fallthru
      _
    // Predicated region
    $region58: #{tpu_custom_call.1} parent=1 // pred_check
      _
    $region59: #{tpu_custom_call.1} parent=1 // pred_check_branch
      %186 = sbr.rel (0) target = $region61
    $region60: #{tpu_custom_call.1} parent=1 // pred_region
      %s188 = ssub.s32 16, 16
      %189 = vsyncadd [#allocation25], %s188
      %s191 = sshll.u32 [#allocation26], 4
      %s192 = int_to_ptr.vmem [resolvable:$true] %s191
      %194 = dma.hbm_to_vmem [thread:$0]  %s14, 16, %s192, [#allocation25]
    $region61: #{tpu_custom_call.1} parent=1 // pred_fallthru
      _
    // Predicated region
    $region62: #{tpu_custom_call.1} parent=1 // pred_check
      _
    $region63: #{tpu_custom_call.1} parent=1 // pred_check_branch
      %196 = sbr.rel (0) target = $region65
    $region64: #{tpu_custom_call.1} parent=1 // pred_region
      %s198 = ssub.s32 16, 16
      %199 = vsyncadd [#allocation28], %s198
      %s201 = sshll.u32 [#allocation27], 4
      %s202 = int_to_ptr.vmem [resolvable:$true] %s201
      %204 = dma.hbm_to_vmem [thread:$0]  %s15, 16, %s202, [#allocation28]
    $region65: #{tpu_custom_call.1} parent=1 // pred_fallthru
      _
    // Predicated region
    $region66: #{tpu_custom_call.1} parent=1 // pred_check
      _
    $region67: #{tpu_custom_call.1} parent=1 // pred_check_branch
      %206 = sbr.rel (0) target = $region69
    $region68: #{tpu_custom_call.1} parent=1 // pred_region
      %207 = dma.done [#allocation4], 256
    $region69: #{tpu_custom_call.1} parent=1 // pred_fallthru
      _
    // Predicated region
    $region70: #{tpu_custom_call.1} parent=1 // pred_check
      _
    $region71: #{tpu_custom_call.1} parent=1 // pred_check_branch
      %209 = sbr.rel (0) target = $region73
    $region72: #{tpu_custom_call.1} parent=1 // pred_region
      %210 = dma.done [#allocation7], 128
    $region73: #{tpu_custom_call.1} parent=1 // pred_fallthru
      _
    // Predicated region
    $region74: #{tpu_custom_call.1} parent=1 // pred_check
      _
    $region75: #{tpu_custom_call.1} parent=1 // pred_check_branch
      %212 = sbr.rel (0) target = $region77
    $region76: #{tpu_custom_call.1} parent=1 // pred_region
      %213 = dma.done [#allocation7], 256
    $region77: #{tpu_custom_call.1} parent=1 // pred_fallthru
      _
    // Predicated region
    $region78: #{tpu_custom_call.1} parent=1 // pred_check
      _
    $region79: #{tpu_custom_call.1} parent=1 // pred_check_branch
      %215 = sbr.rel (0) target = $region81
    $region80: #{tpu_custom_call.1} parent=1 // pred_region
      %216 = dma.done [#allocation10], 16
    $region81: #{tpu_custom_call.1} parent=1 // pred_fallthru
      _
    // Predicated region
    $region82: #{tpu_custom_call.1} parent=1 // pred_check
      _
    $region83: #{tpu_custom_call.1} parent=1 // pred_check_branch
      %218 = sbr.rel (0) target = $region85
    $region84: #{tpu_custom_call.1} parent=1 // pred_region
      %219 = dma.done [#allocation10], 256
    $region85: #{tpu_custom_call.1} parent=1 // pred_fallthru
      _
    // Predicated region
    $region86: #{tpu_custom_call.1} parent=1 // pred_check
      _
    $region87: #{tpu_custom_call.1} parent=1 // pred_check_branch
      %221 = sbr.rel (0) target = $region89
    $region88: #{tpu_custom_call.1} parent=1 // pred_region
      %222 = dma.done [#allocation13], 16
    $region89: #{tpu_custom_call.1} parent=1 // pred_fallthru
      _
    // Predicated region
    $region90: #{tpu_custom_call.1} parent=1 // pred_check
      _
    $region91: #{tpu_custom_call.1} parent=1 // pred_check_branch
      %224 = sbr.rel (0) target = $region93
    $region92: #{tpu_custom_call.1} parent=1 // pred_region
      %225 = dma.done [#allocation13], 256
    $region93: #{tpu_custom_call.1} parent=1 // pred_fallthru
      _
    // Predicated region
    $region94: #{tpu_custom_call.1} parent=1 // pred_check
      _
    $region95: #{tpu_custom_call.1} parent=1 // pred_check_branch
      %227 = sbr.rel (0) target = $region97
    $region96: #{tpu_custom_call.1} parent=1 // pred_region
      %228 = dma.done [#allocation16], 16
    $region97: #{tpu_custom_call.1} parent=1 // pred_fallthru
      _
    // Predicated region
    $region98: #{tpu_custom_call.1} parent=1 // pred_check
      _
    $region99: #{tpu_custom_call.1} parent=1 // pred_check_branch
      %230 = sbr.rel (0) target = $region101
    $region100: #{tpu_custom_call.1} parent=1 // pred_region
      %231 = dma.done [#allocation16], 16
    $region101: #{tpu_custom_call.1} parent=1 // pred_fallthru
      _
    // Predicated region
    $region102: #{tpu_custom_call.1} parent=1 // pred_check
      _
    $region103: #{tpu_custom_call.1} parent=1 // pred_check_branch
      %233 = sbr.rel (0) target = $region105
    $region104: #{tpu_custom_call.1} parent=1 // pred_region
      %234 = dma.done [#allocation19], 16
    $region105: #{tpu_custom_call.1} parent=1 // pred_fallthru
      _
    // Predicated region
    $region106: #{tpu_custom_call.1} parent=1 // pred_check
      _
    $region107: #{tpu_custom_call.1} parent=1 // pred_check_branch
      %236 = sbr.rel (0) target = $region109
    $region108: #{tpu_custom_call.1} parent=1 // pred_region
      %237 = dma.done [#allocation19], 256
    $region109: #{tpu_custom_call.1} parent=1 // pred_fallthru
      _
    // Predicated region
    $region110: #{tpu_custom_call.1} parent=1 // pred_check
      _
    $region111: #{tpu_custom_call.1} parent=1 // pred_check_branch
      %239 = sbr.rel (0) target = $region113
    $region112: #{tpu_custom_call.1} parent=1 // pred_region
      %240 = dma.done [#allocation22], 16
    $region113: #{tpu_custom_call.1} parent=1 // pred_fallthru
      _
    // Predicated region
    $region114: #{tpu_custom_call.1} parent=1 // pred_check
      _
    $region115: #{tpu_custom_call.1} parent=1 // pred_check_branch
      %242 = sbr.rel (0) target = $region117
    $region116: #{tpu_custom_call.1} parent=1 // pred_region
      %243 = dma.done [#allocation22], 512
    $region117: #{tpu_custom_call.1} parent=1 // pred_fallthru
      _
    // Predicated region
    $region118: #{tpu_custom_call.1} parent=1 // pred_check
      _
    $region119: #{tpu_custom_call.1} parent=1 // pred_check_branch
      %245 = sbr.rel (0) target = $region121
    $region120: #{tpu_custom_call.1} parent=1 // pred_region
      %246 = dma.done [#allocation25], 16
    $region121: #{tpu_custom_call.1} parent=1 // pred_fallthru
      _
    // Predicated region
    $region122: #{tpu_custom_call.1} parent=1 // pred_check
      _
    $region123: #{tpu_custom_call.1} parent=1 // pred_check_branch
      %248 = sbr.rel (0) target = $region125
    $region124: #{tpu_custom_call.1} parent=1 // pred_region
      %249 = dma.done [#allocation25], 16
    $region125: #{tpu_custom_call.1} parent=1 // pred_fallthru
      _
    // Predicated region
    $region126: #{tpu_custom_call.1} parent=1 // pred_check
      _
    $region127: #{tpu_custom_call.1} parent=1 // pred_check_branch
      %251 = sbr.rel (0) target = $region129
    $region128: #{tpu_custom_call.1} parent=1 // pred_region
      %252 = dma.done [#allocation28], 16
    $region129: #{tpu_custom_call.1} parent=1 // pred_fallthru
      _
    %v254 = vld [vmem:[#allocation3] sm:$0xff]
    %v255 = vld [vmem:[#allocation3 + $0x8] sm:$0xff]
    %v256 = vld [vmem:[#allocation6] sm:$0xf]
    %v257 = vld [vmem:[#allocation6 + $0x4] sm:$0xf]
    %v258 = vunpack.c.l.bf16 %v256
    %v259 = vunpack.c.l.bf16 %v257
    %v260 = vadd.f32 %v254, %v258
    %v261 = vadd.f32 %v255, %v259
    %v262 = vpack.c.bf16 %v261, %v260
    %v263 = vld [vmem:[#allocation8] sm:$0xf]
    %v264 = vld [vmem:[#allocation8 + $0x4] sm:$0xf]
    %v265 = vld [vmem:[#allocation8 + $0x8] sm:$0xf]
    %v266 = vld [vmem:[#allocation8 + $0xc] sm:$0xf]
    %v267 = vld [vmem:[#allocation9] sm:$0x1]
    %v269 = vlaneseq
    %v270 = vshrl.u32 %v269, 7
    %v271 = vsub.s32 0, %v270
    %v272 = vrot.slane %v267, %v271
    %v278 = vunpack.c.l.b16 %v263
    %v279 = vunpack.c.l.b16 %v264
    %v280 = vunpack.c.l.b16 %v265
    %v281 = vunpack.c.l.b16 %v266
    %v282 = vpack.c.b16 %v279, %v278
    %v283 = vpack.c.b16 %v281, %v280
    %vm286 = vcmask 261120
    %v288 = vsel %vm286, %v262, 0
    %290 = vmatprep.subr.bf16.mxu0 0
    %291 = vmatpush1.bf16.msra.mxu0 %v282
    %292 = vmatprep.subr.bf16.mxu0 0
    %293 = vmatpush1.bf16.msra.mxu0 %v283
    %294 = vmatprep.subr.bf16.mxu0 0
    %295 = vmatpush1.bf16.msra.mxu0 0
    %296 = vmatprep.subr.bf16.mxu0 0
    %297 = vmatpush1.bf16.msra.mxu0 0
    %298 = vmatprep.subr.bf16.mxu0 0
    %299 = vmatpush1.bf16.msra.mxu0 0
    %300 = vmatprep.subr.bf16.mxu0 0
    %301 = vmatpush1.bf16.msra.mxu0 0
    %302 = vmatprep.subr.bf16.mxu0 0
    %303 = vmatpush1.bf16.msra.mxu0 0
    %304 = vmatprep.subr.bf16.mxu0 0
    %305 = vmatpush1.bf16.msra.mxu0 0
    %306 = vmatprep.subr.bf16.mxu0 0
    %307 = vmatpush1.bf16.msra.mxu0 0
    %308 = vmatprep.subr.bf16.mxu0 0
    %309 = vmatpush1.bf16.msra.mxu0 0
    %310 = vmatprep.subr.bf16.mxu0 0
    %311 = vmatpush1.bf16.msra.mxu0 0
    %312 = vmatprep.subr.bf16.mxu0 0
    %313 = vmatpush1.bf16.msra.mxu0 0
    %314 = vmatprep.subr.bf16.mxu0 0
    %315 = vmatpush1.bf16.msra.mxu0 0
    %316 = vmatprep.subr.bf16.mxu0 0
    %317 = vmatpush1.bf16.msra.mxu0 0
    %318 = vmatprep.subr.bf16.mxu0 0
    %319 = vmatpush1.bf16.msra.mxu0 0
    %320 = vmatprep.subr.bf16.mxu0 0
    %321 = vmatpush1.bf16.msra.mxu0 0
    %322 = vmatprep.mubr.bf16.mxu0 0
    %323 = vmatmul.mubr.bf16.gmra.mrb[0].mxu0 %v288
    %v324 = vpop.f32.mrb[0].mxu0
    %v325 = vadd.f32 %v272, %v324
    %v326 = vpop.f32.mrb[0].mxu0
    %v327 = vpop.f32.mrb[0].mxu0
    %v328 = vadd.f32 %v272, %v327
    %v329 = vpop.f32.mrb[0].mxu0
    %330 = vdwg.mxu0
    %v331 = vpack.c.bf16 %v255, %v254
    %v332 = vld [vmem:[#allocation11] sm:$0xf]
    %v333 = vld [vmem:[#allocation11 + $0x4] sm:$0xf]
    %v334 = vld [vmem:[#allocation11 + $0x8] sm:$0xf]
    %v335 = vld [vmem:[#allocation11 + $0xc] sm:$0xf]
    %v336 = vld [vmem:[#allocation12] sm:$0x1]
    %v338 = vlaneseq
    %v339 = vshrl.u32 %v338, 7
    %v340 = vsub.s32 0, %v339
    %v341 = vrot.slane %v336, %v340
    %v347 = vunpack.c.l.b16 %v332
    %v348 = vunpack.c.l.b16 %v333
    %v349 = vunpack.c.l.b16 %v334
    %v350 = vunpack.c.l.b16 %v335
    %v351 = vpack.c.b16 %v348, %v347
    %v352 = vpack.c.b16 %v350, %v349
    %v356 = vsel %vm286, %v331, 0
    %358 = vmatprep.subr.bf16.mxu0 0
    %359 = vmatpush1.bf16.msra.mxu0 %v351
    %360 = vmatprep.subr.bf16.mxu0 0
    %361 = vmatpush1.bf16.msra.mxu0 %v352
    %362 = vmatprep.subr.bf16.mxu0 0
    %363 = vmatpush1.bf16.msra.mxu0 0
    %364 = vmatprep.subr.bf16.mxu0 0
    %365 = vmatpush1.bf16.msra.mxu0 0
    %366 = vmatprep.subr.bf16.mxu0 0
    %367 = vmatpush1.bf16.msra.mxu0 0
    %368 = vmatprep.subr.bf16.mxu0 0
    %369 = vmatpush1.bf16.msra.mxu0 0
    %370 = vmatprep.subr.bf16.mxu0 0
    %371 = vmatpush1.bf16.msra.mxu0 0
    %372 = vmatprep.subr.bf16.mxu0 0
    %373 = vmatpush1.bf16.msra.mxu0 0
    %374 = vmatprep.subr.bf16.mxu0 0
    %375 = vmatpush1.bf16.msra.mxu0 0
    %376 = vmatprep.subr.bf16.mxu0 0
    %377 = vmatpush1.bf16.msra.mxu0 0
    %378 = vmatprep.subr.bf16.mxu0 0
    %379 = vmatpush1.bf16.msra.mxu0 0
    %380 = vmatprep.subr.bf16.mxu0 0
    %381 = vmatpush1.bf16.msra.mxu0 0
    %382 = vmatprep.subr.bf16.mxu0 0
    %383 = vmatpush1.bf16.msra.mxu0 0
    %384 = vmatprep.subr.bf16.mxu0 0
    %385 = vmatpush1.bf16.msra.mxu0 0
    %386 = vmatprep.subr.bf16.mxu0 0
    %387 = vmatpush1.bf16.msra.mxu0 0
    %388 = vmatprep.subr.bf16.mxu0 0
    %389 = vmatpush1.bf16.msra.mxu0 0
    %390 = vmatprep.mubr.bf16.mxu0 0
    %391 = vmatmul.mubr.bf16.gmra.mrb[0].mxu0 %v356
    %v392 = vpop.f32.mrb[0].mxu0
    %v393 = vadd.f32 %v341, %v392
    %v394 = vpop.f32.mrb[0].mxu0
    %v395 = vpop.f32.mrb[0].mxu0
    %v396 = vadd.f32 %v341, %v395
    %v397 = vpop.f32.mrb[0].mxu0
    %398 = vdwg.mxu0
    %v399 = vpack.c.bf16 %v325, %v325
    %v400 = vpack.c.bf16 %v328, %v328
    %v401 = vpack.c.bf16 %v393, %v393
    %v402 = vpack.c.bf16 %v396, %v396
    %404 = vrot.lane.b32.xlu0 %v399, 96
    %v405 = vpop.permute.xlu0 %404
    %vm406 = vcmask 64512
    %v408 = vsel %vm406, %v399, 0
    %v411 = vsel %vm406, %v405, 0
    %413 = vmatprep.subr.bf16.mxu0 0
    %414 = vmatpush1.bf16.xpose.msra.mxu0 %v411
    %415 = vmatprep.subr.bf16.mxu0 0
    %416 = vmatpush1.bf16.xpose.msra.mxu0 0
    %417 = vmatprep.subr.bf16.mxu0 0
    %418 = vmatpush1.bf16.xpose.msra.mxu0 0
    %419 = vmatprep.subr.bf16.mxu0 0
    %420 = vmatpush1.bf16.xpose.msra.mxu0 0
    %421 = vmatprep.subr.bf16.mxu0 0
    %422 = vmatpush1.bf16.xpose.msra.mxu0 0
    %423 = vmatprep.subr.bf16.mxu0 0
    %424 = vmatpush1.bf16.xpose.msra.mxu0 0
    %425 = vmatprep.subr.bf16.mxu0 0
    %426 = vmatpush1.bf16.xpose.msra.mxu0 0
    %427 = vmatprep.subr.bf16.mxu0 0
    %428 = vmatpush1.bf16.xpose.msra.mxu0 0
    %429 = vmatprep.subr.bf16.mxu0 0
    %430 = vmatpush1.bf16.xpose.msra.mxu0 0
    %431 = vmatprep.subr.bf16.mxu0 0
    %432 = vmatpush1.bf16.xpose.msra.mxu0 0
    %433 = vmatprep.subr.bf16.mxu0 0
    %434 = vmatpush1.bf16.xpose.msra.mxu0 0
    %435 = vmatprep.subr.bf16.mxu0 0
    %436 = vmatpush1.bf16.xpose.msra.mxu0 0
    %437 = vmatprep.subr.bf16.mxu0 0
    %438 = vmatpush1.bf16.xpose.msra.mxu0 0
    %439 = vmatprep.subr.bf16.mxu0 0
    %440 = vmatpush1.bf16.xpose.msra.mxu0 0
    %441 = vmatprep.subr.bf16.mxu0 0
    %442 = vmatpush1.bf16.xpose.msra.mxu0 0
    %443 = vmatprep.subr.bf16.mxu0 0
    %444 = vmatpush1.bf16.xpose.msra.mxu0 0
    %445 = vmatprep.mubr.bf16.mxu0 0
    %446 = vmatmul.mubr.bf16.gmra.mrb[0].mxu0 %v408
    %v447 = vpop.f32.mrb[0].mxu0
    %v448 = vadd.f32 0.0, %v447
    %v449 = vpop.f32.mrb[0].mxu0
    %v450 = vpop.f32.mrb[0].mxu0
    %v451 = vpop.f32.mrb[0].mxu0
    %452 = vdwg.mxu0
    %454 = vrot.lane.b32.xlu0 %v400, 96
    %v455 = vpop.permute.xlu0 %454
    %v457 = vsel %vm406, %v400, 0
    %v460 = vsel %vm406, %v455, 0
    %462 = vmatprep.subr.bf16.mxu0 0
    %463 = vmatpush1.bf16.xpose.msra.mxu0 %v460
    %464 = vmatprep.subr.bf16.mxu0 0
    %465 = vmatpush1.bf16.xpose.msra.mxu0 0
    %466 = vmatprep.subr.bf16.mxu0 0
    %467 = vmatpush1.bf16.xpose.msra.mxu0 0
    %468 = vmatprep.subr.bf16.mxu0 0
    %469 = vmatpush1.bf16.xpose.msra.mxu0 0
    %470 = vmatprep.subr.bf16.mxu0 0
    %471 = vmatpush1.bf16.xpose.msra.mxu0 0
    %472 = vmatprep.subr.bf16.mxu0 0
    %473 = vmatpush1.bf16.xpose.msra.mxu0 0
    %474 = vmatprep.subr.bf16.mxu0 0
    %475 = vmatpush1.bf16.xpose.msra.mxu0 0
    %476 = vmatprep.subr.bf16.mxu0 0
    %477 = vmatpush1.bf16.xpose.msra.mxu0 0
    %478 = vmatprep.subr.bf16.mxu0 0
    %479 = vmatpush1.bf16.xpose.msra.mxu0 0
    %480 = vmatprep.subr.bf16.mxu0 0
    %481 = vmatpush1.bf16.xpose.msra.mxu0 0
    %482 = vmatprep.subr.bf16.mxu0 0
    %483 = vmatpush1.bf16.xpose.msra.mxu0 0
    %484 = vmatprep.subr.bf16.mxu0 0
    %485 = vmatpush1.bf16.xpose.msra.mxu0 0
    %486 = vmatprep.subr.bf16.mxu0 0
    %487 = vmatpush1.bf16.xpose.msra.mxu0 0
    %488 = vmatprep.subr.bf16.mxu0 0
    %489 = vmatpush1.bf16.xpose.msra.mxu0 0
    %490 = vmatprep.subr.bf16.mxu0 0
    %491 = vmatpush1.bf16.xpose.msra.mxu0 0
    %492 = vmatprep.subr.bf16.mxu0 0
    %493 = vmatpush1.bf16.xpose.msra.mxu0 0
    %494 = vmatprep.mubr.bf16.mxu0 0
    %495 = vmatmul.mubr.bf16.gmra.mrb[0].mxu0 %v457
    %v496 = vpop.f32.mrb[0].mxu0
    %v497 = vadd.f32 0.0, %v496
    %v498 = vpop.f32.mrb[0].mxu0
    %v499 = vpop.f32.mrb[0].mxu0
    %v500 = vpop.f32.mrb[0].mxu0
    %501 = vdwg.mxu0
    %v502 = vsel %vm406, %v448, -inf
    %503 = vmax.xlane.f32.xlu0 %v502
    %v504 = vpop.xlane.xlu0 %503
    %v505 = vsel %vm406, %v497, -inf
    %506 = vmax.xlane.f32.xlu0 %v505
    %v507 = vpop.xlane.xlu0 %506
    %v508 = vsub.f32 %v448, %v504
    %v509 = vsub.f32 %v497, %v507
    %v510 = vmul.f32 %v508, 1.442695
    %v511 = vpow.pop %v510
    %v512 = vmul.f32 %v509, 1.442695
    %v513 = vpow.pop %v512
    %v514 = vsel %vm406, %v511, 0.0
    %515 = vadd.xlane.f32.xlu0 %v514
    %v516 = vpop.xlane.xlu0 %515
    %v517 = vsel %vm406, %v513, 0.0
    %518 = vadd.xlane.f32.xlu0 %v517
    %v519 = vpop.xlane.xlu0 %518
    %v520 = vrcp.pop %v516
    %v521 = vrcp.pop %v519
    %v522 = vmul.f32 %v511, %v520
    %v523 = vmul.f32 %v513, %v521
    %v524 = vpack.c.bf16 %v522, %v522
    %v525 = vpack.c.bf16 %v523, %v523
    %v527 = vsel %vm406, %v524, 0
    %vm529 = vcmask 1043456
    %v531 = vsel %vm529, %v401, 0
    %533 = vmatprep.subr.bf16.mxu0 0
    %534 = vmatpush1.bf16.msra.mxu0 %v531
    %535 = vmatprep.subr.bf16.mxu0 0
    %536 = vmatpush1.bf16.msra.mxu0 0
    %537 = vmatprep.subr.bf16.mxu0 0
    %538 = vmatpush1.bf16.msra.mxu0 0
    %539 = vmatprep.subr.bf16.mxu0 0
    %540 = vmatpush1.bf16.msra.mxu0 0
    %541 = vmatprep.subr.bf16.mxu0 0
    %542 = vmatpush1.bf16.msra.mxu0 0
    %543 = vmatprep.subr.bf16.mxu0 0
    %544 = vmatpush1.bf16.msra.mxu0 0
    %545 = vmatprep.subr.bf16.mxu0 0
    %546 = vmatpush1.bf16.msra.mxu0 0
    %547 = vmatprep.subr.bf16.mxu0 0
    %548 = vmatpush1.bf16.msra.mxu0 0
    %549 = vmatprep.subr.bf16.mxu0 0
    %550 = vmatpush1.bf16.msra.mxu0 0
    %551 = vmatprep.subr.bf16.mxu0 0
    %552 = vmatpush1.bf16.msra.mxu0 0
    %553 = vmatprep.subr.bf16.mxu0 0
    %554 = vmatpush1.bf16.msra.mxu0 0
    %555 = vmatprep.subr.bf16.mxu0 0
    %556 = vmatpush1.bf16.msra.mxu0 0
    %557 = vmatprep.subr.bf16.mxu0 0
    %558 = vmatpush1.bf16.msra.mxu0 0
    %559 = vmatprep.subr.bf16.mxu0 0
    %560 = vmatpush1.bf16.msra.mxu0 0
    %561 = vmatprep.subr.bf16.mxu0 0
    %562 = vmatpush1.bf16.msra.mxu0 0
    %563 = vmatprep.subr.bf16.mxu0 0
    %564 = vmatpush1.bf16.msra.mxu0 0
    %565 = vmatprep.mubr.bf16.mxu0 0
    %566 = vmatmul.mubr.bf16.gmra.mrb[0].mxu0 %v527
    %v567 = vpop.f32.mrb[0].mxu0
    %v568 = vadd.f32 0.0, %v567
    %v569 = vpop.f32.mrb[0].mxu0
    %v570 = vpop.f32.mrb[0].mxu0
    %v571 = vpop.f32.mrb[0].mxu0
    %572 = vdwg.mxu0
    %v574 = vsel %vm406, %v525, 0
    %v577 = vsel %vm529, %v402, 0
    %579 = vmatprep.subr.bf16.mxu0 0
    %580 = vmatpush1.bf16.msra.mxu0 %v577
    %581 = vmatprep.subr.bf16.mxu0 0
    %582 = vmatpush1.bf16.msra.mxu0 0
    %583 = vmatprep.subr.bf16.mxu0 0
    %584 = vmatpush1.bf16.msra.mxu0 0
    %585 = vmatprep.subr.bf16.mxu0 0
    %586 = vmatpush1.bf16.msra.mxu0 0
    %587 = vmatprep.subr.bf16.mxu0 0
    %588 = vmatpush1.bf16.msra.mxu0 0
    %589 = vmatprep.subr.bf16.mxu0 0
    %590 = vmatpush1.bf16.msra.mxu0 0
    %591 = vmatprep.subr.bf16.mxu0 0
    %592 = vmatpush1.bf16.msra.mxu0 0
    %593 = vmatprep.subr.bf16.mxu0 0
    %594 = vmatpush1.bf16.msra.mxu0 0
    %595 = vmatprep.subr.bf16.mxu0 0
    %596 = vmatpush1.bf16.msra.mxu0 0
    %597 = vmatprep.subr.bf16.mxu0 0
    %598 = vmatpush1.bf16.msra.mxu0 0
    %599 = vmatprep.subr.bf16.mxu0 0
    %600 = vmatpush1.bf16.msra.mxu0 0
    %601 = vmatprep.subr.bf16.mxu0 0
    %602 = vmatpush1.bf16.msra.mxu0 0
    %603 = vmatprep.subr.bf16.mxu0 0
    %604 = vmatpush1.bf16.msra.mxu0 0
    %605 = vmatprep.subr.bf16.mxu0 0
    %606 = vmatpush1.bf16.msra.mxu0 0
    %607 = vmatprep.subr.bf16.mxu0 0
    %608 = vmatpush1.bf16.msra.mxu0 0
    %609 = vmatprep.subr.bf16.mxu0 0
    %610 = vmatpush1.bf16.msra.mxu0 0
    %611 = vmatprep.mubr.bf16.mxu0 0
    %612 = vmatmul.mubr.bf16.gmra.mrb[0].mxu0 %v574
    %v613 = vpop.f32.mrb[0].mxu0
    %v614 = vadd.f32 0.0, %v613
    %v615 = vpop.f32.mrb[0].mxu0
    %v616 = vpop.f32.mrb[0].mxu0
    %v617 = vpop.f32.mrb[0].mxu0
    %618 = vdwg.mxu0
    %v619 = vpack.c.bf16 %v614, %v568
    %620 = vst.msk [vmem:[#allocation2] sm:$0xff] %vm406, %v619
    %621 = vrot.lane.b32.xlu0 %v399, 120
    %v622 = vpop.permute.xlu0 %621
    %623 = vrot.lane.b32.xlu0 %v399, 88
    %v624 = vpop.permute.xlu0 %623
    %v626 = vsel %vm406, %v622, 0
    %v629 = vsel %vm406, %v624, 0
    %631 = vmatprep.subr.bf16.mxu0 0
    %632 = vmatpush1.bf16.xpose.msra.mxu0 %v629
    %633 = vmatprep.subr.bf16.mxu0 0
    %634 = vmatpush1.bf16.xpose.msra.mxu0 0
    %635 = vmatprep.subr.bf16.mxu0 0
    %636 = vmatpush1.bf16.xpose.msra.mxu0 0
    %637 = vmatprep.subr.bf16.mxu0 0
    %638 = vmatpush1.bf16.xpose.msra.mxu0 0
    %639 = vmatprep.subr.bf16.mxu0 0
    %640 = vmatpush1.bf16.xpose.msra.mxu0 0
    %641 = vmatprep.subr.bf16.mxu0 0
    %642 = vmatpush1.bf16.xpose.msra.mxu0 0
    %643 = vmatprep.subr.bf16.mxu0 0
    %644 = vmatpush1.bf16.xpose.msra.mxu0 0
    %645 = vmatprep.subr.bf16.mxu0 0
    %646 = vmatpush1.bf16.xpose.msra.mxu0 0
    %647 = vmatprep.subr.bf16.mxu0 0
    %648 = vmatpush1.bf16.xpose.msra.mxu0 0
    %649 = vmatprep.subr.bf16.mxu0 0
    %650 = vmatpush1.bf16.xpose.msra.mxu0 0
    %651 = vmatprep.subr.bf16.mxu0 0
    %652 = vmatpush1.bf16.xpose.msra.mxu0 0
    %653 = vmatprep.subr.bf16.mxu0 0
    %654 = vmatpush1.bf16.xpose.msra.mxu0 0
    %655 = vmatprep.subr.bf16.mxu0 0
    %656 = vmatpush1.bf16.xpose.msra.mxu0 0
    %657 = vmatprep.subr.bf16.mxu0 0
    %658 = vmatpush1.bf16.xpose.msra.mxu0 0
    %659 = vmatprep.subr.bf16.mxu0 0
    %660 = vmatpush1.bf16.xpose.msra.mxu0 0
    %661 = vmatprep.subr.bf16.mxu0 0
    %662 = vmatpush1.bf16.xpose.msra.mxu0 0
    %663 = vmatprep.mubr.bf16.mxu0 0
    %664 = vmatmul.mubr.bf16.gmra.mrb[0].mxu0 %v626
    %v665 = vpop.f32.mrb[0].mxu0
    %v666 = vadd.f32 0.0, %v665
    %v667 = vpop.f32.mrb[0].mxu0
    %v668 = vpop.f32.mrb[0].mxu0
    %v669 = vpop.f32.mrb[0].mxu0
    %670 = vdwg.mxu0
    %671 = vrot.lane.b32.xlu0 %v400, 120
    %v672 = vpop.permute.xlu0 %671
    %673 = vrot.lane.b32.xlu0 %v400, 88
    %v674 = vpop.permute.xlu0 %673
    %v676 = vsel %vm406, %v672, 0
    %v679 = vsel %vm406, %v674, 0
    %681 = vmatprep.subr.bf16.mxu0 0
    %682 = vmatpush1.bf16.xpose.msra.mxu0 %v679
    %683 = vmatprep.subr.bf16.mxu0 0
    %684 = vmatpush1.bf16.xpose.msra.mxu0 0
    %685 = vmatprep.subr.bf16.mxu0 0
    %686 = vmatpush1.bf16.xpose.msra.mxu0 0
    %687 = vmatprep.subr.bf16.mxu0 0
    %688 = vmatpush1.bf16.xpose.msra.mxu0 0
    %689 = vmatprep.subr.bf16.mxu0 0
    %690 = vmatpush1.bf16.xpose.msra.mxu0 0
    %691 = vmatprep.subr.bf16.mxu0 0
    %692 = vmatpush1.bf16.xpose.msra.mxu0 0
    %693 = vmatprep.subr.bf16.mxu0 0
    %694 = vmatpush1.bf16.xpose.msra.mxu0 0
    %695 = vmatprep.subr.bf16.mxu0 0
    %696 = vmatpush1.bf16.xpose.msra.mxu0 0
    %697 = vmatprep.subr.bf16.mxu0 0
    %698 = vmatpush1.bf16.xpose.msra.mxu0 0
    %699 = vmatprep.subr.bf16.mxu0 0
    %700 = vmatpush1.bf16.xpose.msra.mxu0 0
    %701 = vmatprep.subr.bf16.mxu0 0
    %702 = vmatpush1.bf16.xpose.msra.mxu0 0
    %703 = vmatprep.subr.bf16.mxu0 0
    %704 = vmatpush1.bf16.xpose.msra.mxu0 0
    %705 = vmatprep.subr.bf16.mxu0 0
    %706 = vmatpush1.bf16.xpose.msra.mxu0 0
    %707 = vmatprep.subr.bf16.mxu0 0
    %708 = vmatpush1.bf16.xpose.msra.mxu0 0
    %709 = vmatprep.subr.bf16.mxu0 0
    %710 = vmatpush1.bf16.xpose.msra.mxu0 0
    %711 = vmatprep.subr.bf16.mxu0 0
    %712 = vmatpush1.bf16.xpose.msra.mxu0 0
    %713 = vmatprep.mubr.bf16.mxu0 0
    %714 = vmatmul.mubr.bf16.gmra.mrb[0].mxu0 %v676
    %v715 = vpop.f32.mrb[0].mxu0
    %v716 = vadd.f32 0.0, %v715
    %v717 = vpop.f32.mrb[0].mxu0
    %v718 = vpop.f32.mrb[0].mxu0
    %v719 = vpop.f32.mrb[0].mxu0
    %720 = vdwg.mxu0
    %v721 = vsel %vm406, %v666, -inf
    %722 = vmax.xlane.f32.xlu0 %v721
    %v723 = vpop.xlane.xlu0 %722
    %v724 = vsel %vm406, %v716, -inf
    %725 = vmax.xlane.f32.xlu0 %v724
    %v726 = vpop.xlane.xlu0 %725
    %v727 = vsub.f32 %v666, %v723
    %v728 = vsub.f32 %v716, %v726
    %v729 = vmul.f32 %v727, 1.442695
    %v730 = vpow.pop %v729
    %v731 = vmul.f32 %v728, 1.442695
    %v732 = vpow.pop %v731
    %v733 = vsel %vm406, %v730, 0.0
    %734 = vadd.xlane.f32.xlu0 %v733
    %v735 = vpop.xlane.xlu0 %734
    %v736 = vsel %vm406, %v732, 0.0
    %737 = vadd.xlane.f32.xlu0 %v736
    %v738 = vpop.xlane.xlu0 %737
    %v739 = vrcp.pop %v735
    %v740 = vrcp.pop %v738
    %v741 = vmul.f32 %v730, %v739
    %v742 = vmul.f32 %v732, %v740
    %v743 = vpack.c.bf16 %v741, %v741
    %v744 = vpack.c.bf16 %v742, %v742
    %746 = vrot.lane.b32.xlu0 %v401, 120
    %v747 = vpop.permute.xlu0 %746
    %v749 = vsel %vm406, %v743, 0
    %v752 = vsel %vm529, %v747, 0
    %754 = vmatprep.subr.bf16.mxu0 0
    %755 = vmatpush1.bf16.msra.mxu0 %v752
    %756 = vmatprep.subr.bf16.mxu0 0
    %757 = vmatpush1.bf16.msra.mxu0 0
    %758 = vmatprep.subr.bf16.mxu0 0
    %759 = vmatpush1.bf16.msra.mxu0 0
    %760 = vmatprep.subr.bf16.mxu0 0
    %761 = vmatpush1.bf16.msra.mxu0 0
    %762 = vmatprep.subr.bf16.mxu0 0
    %763 = vmatpush1.bf16.msra.mxu0 0
    %764 = vmatprep.subr.bf16.mxu0 0
    %765 = vmatpush1.bf16.msra.mxu0 0
    %766 = vmatprep.subr.bf16.mxu0 0
    %767 = vmatpush1.bf16.msra.mxu0 0
    %768 = vmatprep.subr.bf16.mxu0 0
    %769 = vmatpush1.bf16.msra.mxu0 0
    %770 = vmatprep.subr.bf16.mxu0 0
    %771 = vmatpush1.bf16.msra.mxu0 0
    %772 = vmatprep.subr.bf16.mxu0 0
    %773 = vmatpush1.bf16.msra.mxu0 0
    %774 = vmatprep.subr.bf16.mxu0 0
    %775 = vmatpush1.bf16.msra.mxu0 0
    %776 = vmatprep.subr.bf16.mxu0 0
    %777 = vmatpush1.bf16.msra.mxu0 0
    %778 = vmatprep.subr.bf16.mxu0 0
    %779 = vmatpush1.bf16.msra.mxu0 0
    %780 = vmatprep.subr.bf16.mxu0 0
    %781 = vmatpush1.bf16.msra.mxu0 0
    %782 = vmatprep.subr.bf16.mxu0 0
    %783 = vmatpush1.bf16.msra.mxu0 0
    %784 = vmatprep.subr.bf16.mxu0 0
    %785 = vmatpush1.bf16.msra.mxu0 0
    %786 = vmatprep.mubr.bf16.mxu0 0
    %787 = vmatmul.mubr.bf16.gmra.mrb[0].mxu0 %v749
    %v788 = vpop.f32.mrb[0].mxu0
    %v789 = vadd.f32 0.0, %v788
    %v790 = vpop.f32.mrb[0].mxu0
    %v791 = vpop.f32.mrb[0].mxu0
    %v792 = vpop.f32.mrb[0].mxu0
    %793 = vdwg.mxu0
    %795 = vrot.lane.b32.xlu0 %v402, 120
    %v796 = vpop.permute.xlu0 %795
    %v798 = vsel %vm406, %v744, 0
    %v801 = vsel %vm529, %v796, 0
    %803 = vmatprep.subr.bf16.mxu0 0
    %804 = vmatpush1.bf16.msra.mxu0 %v801
    %805 = vmatprep.subr.bf16.mxu0 0
    %806 = vmatpush1.bf16.msra.mxu0 0
    %807 = vmatprep.subr.bf16.mxu0 0
    %808 = vmatpush1.bf16.msra.mxu0 0
    %809 = vmatprep.subr.bf16.mxu0 0
    %810 = vmatpush1.bf16.msra.mxu0 0
    %811 = vmatprep.subr.bf16.mxu0 0
    %812 = vmatpush1.bf16.msra.mxu0 0
    %813 = vmatprep.subr.bf16.mxu0 0
    %814 = vmatpush1.bf16.msra.mxu0 0
    %815 = vmatprep.subr.bf16.mxu0 0
    %816 = vmatpush1.bf16.msra.mxu0 0
    %817 = vmatprep.subr.bf16.mxu0 0
    %818 = vmatpush1.bf16.msra.mxu0 0
    %819 = vmatprep.subr.bf16.mxu0 0
    %820 = vmatpush1.bf16.msra.mxu0 0
    %821 = vmatprep.subr.bf16.mxu0 0
    %822 = vmatpush1.bf16.msra.mxu0 0
    %823 = vmatprep.subr.bf16.mxu0 0
    %824 = vmatpush1.bf16.msra.mxu0 0
    %825 = vmatprep.subr.bf16.mxu0 0
    %826 = vmatpush1.bf16.msra.mxu0 0
    %827 = vmatprep.subr.bf16.mxu0 0
    %828 = vmatpush1.bf16.msra.mxu0 0
    %829 = vmatprep.subr.bf16.mxu0 0
    %830 = vmatpush1.bf16.msra.mxu0 0
    %831 = vmatprep.subr.bf16.mxu0 0
    %832 = vmatpush1.bf16.msra.mxu0 0
    %833 = vmatprep.subr.bf16.mxu0 0
    %834 = vmatpush1.bf16.msra.mxu0 0
    %835 = vmatprep.mubr.bf16.mxu0 0
    %836 = vmatmul.mubr.bf16.gmra.mrb[0].mxu0 %v798
    %v837 = vpop.f32.mrb[0].mxu0
    %v838 = vadd.f32 0.0, %v837
    %v839 = vpop.f32.mrb[0].mxu0
    %v840 = vpop.f32.mrb[0].mxu0
    %v841 = vpop.f32.mrb[0].mxu0
    %842 = vdwg.mxu0
    %v843 = vpack.c.bf16 %v838, %v789
    %845 = vrot.lane.b32.xlu0 %v843, 8
    %v846 = vpop.permute.xlu0 %845
    %vm848 = vcmask 130112
    %849 = vst.msk [vmem:[#allocation2] sm:$0xff] %vm848, %v846
    %850 = vrot.lane.b32.xlu0 %v399, 112
    %v851 = vpop.permute.xlu0 %850
    %852 = vrot.lane.b32.xlu0 %v399, 80
    %v853 = vpop.permute.xlu0 %852
    %v855 = vsel %vm406, %v851, 0
    %v858 = vsel %vm406, %v853, 0
    %860 = vmatprep.subr.bf16.mxu0 0
    %861 = vmatpush1.bf16.xpose.msra.mxu0 %v858
    %862 = vmatprep.subr.bf16.mxu0 0
    %863 = vmatpush1.bf16.xpose.msra.mxu0 0
    %864 = vmatprep.subr.bf16.mxu0 0
    %865 = vmatpush1.bf16.xpose.msra.mxu0 0
    %866 = vmatprep.subr.bf16.mxu0 0
    %867 = vmatpush1.bf16.xpose.msra.mxu0 0
    %868 = vmatprep.subr.bf16.mxu0 0
    %869 = vmatpush1.bf16.xpose.msra.mxu0 0
    %870 = vmatprep.subr.bf16.mxu0 0
    %871 = vmatpush1.bf16.xpose.msra.mxu0 0
    %872 = vmatprep.subr.bf16.mxu0 0
    %873 = vmatpush1.bf16.xpose.msra.mxu0 0
    %874 = vmatprep.subr.bf16.mxu0 0
    %875 = vmatpush1.bf16.xpose.msra.mxu0 0
    %876 = vmatprep.subr.bf16.mxu0 0
    %877 = vmatpush1.bf16.xpose.msra.mxu0 0
    %878 = vmatprep.subr.bf16.mxu0 0
    %879 = vmatpush1.bf16.xpose.msra.mxu0 0
    %880 = vmatprep.subr.bf16.mxu0 0
    %881 = vmatpush1.bf16.xpose.msra.mxu0 0
    %882 = vmatprep.subr.bf16.mxu0 0
    %883 = vmatpush1.bf16.xpose.msra.mxu0 0
    %884 = vmatprep.subr.bf16.mxu0 0
    %885 = vmatpush1.bf16.xpose.msra.mxu0 0
    %886 = vmatprep.subr.bf16.mxu0 0
    %887 = vmatpush1.bf16.xpose.msra.mxu0 0
    %888 = vmatprep.subr.bf16.mxu0 0
    %889 = vmatpush1.bf16.xpose.msra.mxu0 0
    %890 = vmatprep.subr.bf16.mxu0 0
    %891 = vmatpush1.bf16.xpose.msra.mxu0 0
    %892 = vmatprep.mubr.bf16.mxu0 0
    %893 = vmatmul.mubr.bf16.gmra.mrb[0].mxu0 %v855
    %v894 = vpop.f32.mrb[0].mxu0
    %v895 = vadd.f32 0.0, %v894
    %v896 = vpop.f32.mrb[0].mxu0
    %v897 = vpop.f32.mrb[0].mxu0
    %v898 = vpop.f32.mrb[0].mxu0
    %899 = vdwg.mxu0
    %900 = vrot.lane.b32.xlu0 %v400, 112
    %v901 = vpop.permute.xlu0 %900
    %902 = vrot.lane.b32.xlu0 %v400, 80
    %v903 = vpop.permute.xlu0 %902
    %v905 = vsel %vm406, %v901, 0
    %v908 = vsel %vm406, %v903, 0
    %910 = vmatprep.subr.bf16.mxu0 0
    %911 = vmatpush1.bf16.xpose.msra.mxu0 %v908
    %912 = vmatprep.subr.bf16.mxu0 0
    %913 = vmatpush1.bf16.xpose.msra.mxu0 0
    %914 = vmatprep.subr.bf16.mxu0 0
    %915 = vmatpush1.bf16.xpose.msra.mxu0 0
    %916 = vmatprep.subr.bf16.mxu0 0
    %917 = vmatpush1.bf16.xpose.msra.mxu0 0
    %918 = vmatprep.subr.bf16.mxu0 0
    %919 = vmatpush1.bf16.xpose.msra.mxu0 0
    %920 = vmatprep.subr.bf16.mxu0 0
    %921 = vmatpush1.bf16.xpose.msra.mxu0 0
    %922 = vmatprep.subr.bf16.mxu0 0
    %923 = vmatpush1.bf16.xpose.msra.mxu0 0
    %924 = vmatprep.subr.bf16.mxu0 0
    %925 = vmatpush1.bf16.xpose.msra.mxu0 0
    %926 = vmatprep.subr.bf16.mxu0 0
    %927 = vmatpush1.bf16.xpose.msra.mxu0 0
    %928 = vmatprep.subr.bf16.mxu0 0
    %929 = vmatpush1.bf16.xpose.msra.mxu0 0
    %930 = vmatprep.subr.bf16.mxu0 0
    %931 = vmatpush1.bf16.xpose.msra.mxu0 0
    %932 = vmatprep.subr.bf16.mxu0 0
    %933 = vmatpush1.bf16.xpose.msra.mxu0 0
    %934 = vmatprep.subr.bf16.mxu0 0
    %935 = vmatpush1.bf16.xpose.msra.mxu0 0
    %936 = vmatprep.subr.bf16.mxu0 0
    %937 = vmatpush1.bf16.xpose.msra.mxu0 0
    %938 = vmatprep.subr.bf16.mxu0 0
    %939 = vmatpush1.bf16.xpose.msra.mxu0 0
    %940 = vmatprep.subr.bf16.mxu0 0
    %941 = vmatpush1.bf16.xpose.msra.mxu0 0
    %942 = vmatprep.mubr.bf16.mxu0 0
    %943 = vmatmul.mubr.bf16.gmra.mrb[0].mxu0 %v905
    %v944 = vpop.f32.mrb[0].mxu0
    %v945 = vadd.f32 0.0, %v944
    %v946 = vpop.f32.mrb[0].mxu0
    %v947 = vpop.f32.mrb[0].mxu0
    %v948 = vpop.f32.mrb[0].mxu0
    %949 = vdwg.mxu0
    %v950 = vsel %vm406, %v895, -inf
    %951 = vmax.xlane.f32.xlu0 %v950
    %v952 = vpop.xlane.xlu0 %951
    %v953 = vsel %vm406, %v945, -inf
    %954 = vmax.xlane.f32.xlu0 %v953
    %v955 = vpop.xlane.xlu0 %954
    %v956 = vsub.f32 %v895, %v952
    %v957 = vsub.f32 %v945, %v955
    %v958 = vmul.f32 %v956, 1.442695
    %v959 = vpow.pop %v958
    %v960 = vmul.f32 %v957, 1.442695
    %v961 = vpow.pop %v960
    %v962 = vsel %vm406, %v959, 0.0
    %963 = vadd.xlane.f32.xlu0 %v962
    %v964 = vpop.xlane.xlu0 %963
    %v965 = vsel %vm406, %v961, 0.0
    %966 = vadd.xlane.f32.xlu0 %v965
    %v967 = vpop.xlane.xlu0 %966
    %v968 = vrcp.pop %v964
    %v969 = vrcp.pop %v967
    %v970 = vmul.f32 %v959, %v968
    %v971 = vmul.f32 %v961, %v969
    %v972 = vpack.c.bf16 %v970, %v970
    %v973 = vpack.c.bf16 %v971, %v971
    %974 = vrot.lane.b32.xlu0 %v401, 112
    %v975 = vpop.permute.xlu0 %974
    %v977 = vsel %vm406, %v972, 0
    %v980 = vsel %vm529, %v975, 0
    %982 = vmatprep.subr.bf16.mxu0 0
    %983 = vmatpush1.bf16.msra.mxu0 %v980
    %984 = vmatprep.subr.bf16.mxu0 0
    %985 = vmatpush1.bf16.msra.mxu0 0
    %986 = vmatprep.subr.bf16.mxu0 0
    %987 = vmatpush1.bf16.msra.mxu0 0
    %988 = vmatprep.subr.bf16.mxu0 0
    %989 = vmatpush1.bf16.msra.mxu0 0
    %990 = vmatprep.subr.bf16.mxu0 0
    %991 = vmatpush1.bf16.msra.mxu0 0
    %992 = vmatprep.subr.bf16.mxu0 0
    %993 = vmatpush1.bf16.msra.mxu0 0
    %994 = vmatprep.subr.bf16.mxu0 0
    %995 = vmatpush1.bf16.msra.mxu0 0
    %996 = vmatprep.subr.bf16.mxu0 0
    %997 = vmatpush1.bf16.msra.mxu0 0
    %998 = vmatprep.subr.bf16.mxu0 0
    %999 = vmatpush1.bf16.msra.mxu0 0
    %1000 = vmatprep.subr.bf16.mxu0 0
    %1001 = vmatpush1.bf16.msra.mxu0 0
    %1002 = vmatprep.subr.bf16.mxu0 0
    %1003 = vmatpush1.bf16.msra.mxu0 0
    %1004 = vmatprep.subr.bf16.mxu0 0
    %1005 = vmatpush1.bf16.msra.mxu0 0
    %1006 = vmatprep.subr.bf16.mxu0 0
    %1007 = vmatpush1.bf16.msra.mxu0 0
    %1008 = vmatprep.subr.bf16.mxu0 0
    %1009 = vmatpush1.bf16.msra.mxu0 0
    %1010 = vmatprep.subr.bf16.mxu0 0
    %1011 = vmatpush1.bf16.msra.mxu0 0
    %1012 = vmatprep.subr.bf16.mxu0 0
    %1013 = vmatpush1.bf16.msra.mxu0 0
    %1014 = vmatprep.mubr.bf16.mxu0 0
    %1015 = vmatmul.mubr.bf16.gmra.mrb[0].mxu0 %v977
    %v1016 = vpop.f32.mrb[0].mxu0
    %v1017 = vadd.f32 0.0, %v1016
    %v1018 = vpop.f32.mrb[0].mxu0
    %v1019 = vpop.f32.mrb[0].mxu0
    %v1020 = vpop.f32.mrb[0].mxu0
    %1021 = vdwg.mxu0
    %1022 = vrot.lane.b32.xlu0 %v402, 112
    %v1023 = vpop.permute.xlu0 %1022
    %v1025 = vsel %vm406, %v973, 0
    %v1028 = vsel %vm529, %v1023, 0
    %1030 = vmatprep.subr.bf16.mxu0 0
    %1031 = vmatpush1.bf16.msra.mxu0 %v1028
    %1032 = vmatprep.subr.bf16.mxu0 0
    %1033 = vmatpush1.bf16.msra.mxu0 0
    %1034 = vmatprep.subr.bf16.mxu0 0
    %1035 = vmatpush1.bf16.msra.mxu0 0
    %1036 = vmatprep.subr.bf16.mxu0 0
    %1037 = vmatpush1.bf16.msra.mxu0 0
    %1038 = vmatprep.subr.bf16.mxu0 0
    %1039 = vmatpush1.bf16.msra.mxu0 0
    %1040 = vmatprep.subr.bf16.mxu0 0
    %1041 = vmatpush1.bf16.msra.mxu0 0
    %1042 = vmatprep.subr.bf16.mxu0 0
    %1043 = vmatpush1.bf16.msra.mxu0 0
    %1044 = vmatprep.subr.bf16.mxu0 0
    %1045 = vmatpush1.bf16.msra.mxu0 0
    %1046 = vmatprep.subr.bf16.mxu0 0
    %1047 = vmatpush1.bf16.msra.mxu0 0
    %1048 = vmatprep.subr.bf16.mxu0 0
    %1049 = vmatpush1.bf16.msra.mxu0 0
    %1050 = vmatprep.subr.bf16.mxu0 0
    %1051 = vmatpush1.bf16.msra.mxu0 0
    %1052 = vmatprep.subr.bf16.mxu0 0
    %1053 = vmatpush1.bf16.msra.mxu0 0
    %1054 = vmatprep.subr.bf16.mxu0 0
    %1055 = vmatpush1.bf16.msra.mxu0 0
    %1056 = vmatprep.subr.bf16.mxu0 0
    %1057 = vmatpush1.bf16.msra.mxu0 0
    %1058 = vmatprep.subr.bf16.mxu0 0
    %1059 = vmatpush1.bf16.msra.mxu0 0
    %1060 = vmatprep.subr.bf16.mxu0 0
    %1061 = vmatpush1.bf16.msra.mxu0 0
    %1062 = vmatprep.mubr.bf16.mxu0 0
    %1063 = vmatmul.mubr.bf16.gmra.mrb[0].mxu0 %v1025
    %v1064 = vpop.f32.mrb[0].mxu0
    %v1065 = vadd.f32 0.0, %v1064
    %v1066 = vpop.f32.mrb[0].mxu0
    %v1067 = vpop.f32.mrb[0].mxu0
    %v1068 = vpop.f32.mrb[0].mxu0
    %1069 = vdwg.mxu0
    %v1070 = vpack.c.bf16 %v1065, %v1017
    %1072 = vrot.lane.b32.xlu0 %v1070, 16
    %v1073 = vpop.permute.xlu0 %1072
    %vm1075 = vcmask 195712
    %1076 = vst.msk [vmem:[#allocation2] sm:$0xff] %vm1075, %v1073
    %1077 = vrot.lane.b32.xlu0 %v399, 104
    %v1078 = vpop.permute.xlu0 %1077
    %1079 = vrot.lane.b32.xlu0 %v399, 72
    %v1080 = vpop.permute.xlu0 %1079
    %v1082 = vsel %vm406, %v1078, 0
    %v1085 = vsel %vm406, %v1080, 0
    %1087 = vmatprep.subr.bf16.mxu0 0
    %1088 = vmatpush1.bf16.xpose.msra.mxu0 %v1085
    %1089 = vmatprep.subr.bf16.mxu0 0
    %1090 = vmatpush1.bf16.xpose.msra.mxu0 0
    %1091 = vmatprep.subr.bf16.mxu0 0
    %1092 = vmatpush1.bf16.xpose.msra.mxu0 0
    %1093 = vmatprep.subr.bf16.mxu0 0
    %1094 = vmatpush1.bf16.xpose.msra.mxu0 0
    %1095 = vmatprep.subr.bf16.mxu0 0
    %1096 = vmatpush1.bf16.xpose.msra.mxu0 0
    %1097 = vmatprep.subr.bf16.mxu0 0
    %1098 = vmatpush1.bf16.xpose.msra.mxu0 0
    %1099 = vmatprep.subr.bf16.mxu0 0
    %1100 = vmatpush1.bf16.xpose.msra.mxu0 0
    %1101 = vmatprep.subr.bf16.mxu0 0
    %1102 = vmatpush1.bf16.xpose.msra.mxu0 0
    %1103 = vmatprep.subr.bf16.mxu0 0
    %1104 = vmatpush1.bf16.xpose.msra.mxu0 0
    %1105 = vmatprep.subr.bf16.mxu0 0
    %1106 = vmatpush1.bf16.xpose.msra.mxu0 0
    %1107 = vmatprep.subr.bf16.mxu0 0
    %1108 = vmatpush1.bf16.xpose.msra.mxu0 0
    %1109 = vmatprep.subr.bf16.mxu0 0
    %1110 = vmatpush1.bf16.xpose.msra.mxu0 0
    %1111 = vmatprep.subr.bf16.mxu0 0
    %1112 = vmatpush1.bf16.xpose.msra.mxu0 0
    %1113 = vmatprep.subr.bf16.mxu0 0
    %1114 = vmatpush1.bf16.xpose.msra.mxu0 0
    %1115 = vmatprep.subr.bf16.mxu0 0
    %1116 = vmatpush1.bf16.xpose.msra.mxu0 0
    %1117 = vmatprep.subr.bf16.mxu0 0
    %1118 = vmatpush1.bf16.xpose.msra.mxu0 0
    %1119 = vmatprep.mubr.bf16.mxu0 0
    %1120 = vmatmul.mubr.bf16.gmra.mrb[0].mxu0 %v1082
    %v1121 = vpop.f32.mrb[0].mxu0
    %v1122 = vadd.f32 0.0, %v1121
    %v1123 = vpop.f32.mrb[0].mxu0
    %v1124 = vpop.f32.mrb[0].mxu0
    %v1125 = vpop.f32.mrb[0].mxu0
    %1126 = vdwg.mxu0
    %1127 = vrot.lane.b32.xlu0 %v400, 104
    %v1128 = vpop.permute.xlu0 %1127
    %1129 = vrot.lane.b32.xlu0 %v400, 72
    %v1130 = vpop.permute.xlu0 %1129
    %v1132 = vsel %vm406, %v1128, 0
    %v1135 = vsel %vm406, %v1130, 0
    %1137 = vmatprep.subr.bf16.mxu0 0
    %1138 = vmatpush1.bf16.xpose.msra.mxu0 %v1135
    %1139 = vmatprep.subr.bf16.mxu0 0
    %1140 = vmatpush1.bf16.xpose.msra.mxu0 0
    %1141 = vmatprep.subr.bf16.mxu0 0
    %1142 = vmatpush1.bf16.xpose.msra.mxu0 0
    %1143 = vmatprep.subr.bf16.mxu0 0
    %1144 = vmatpush1.bf16.xpose.msra.mxu0 0
    %1145 = vmatprep.subr.bf16.mxu0 0
    %1146 = vmatpush1.bf16.xpose.msra.mxu0 0
    %1147 = vmatprep.subr.bf16.mxu0 0
    %1148 = vmatpush1.bf16.xpose.msra.mxu0 0
    %1149 = vmatprep.subr.bf16.mxu0 0
    %1150 = vmatpush1.bf16.xpose.msra.mxu0 0
    %1151 = vmatprep.subr.bf16.mxu0 0
    %1152 = vmatpush1.bf16.xpose.msra.mxu0 0
    %1153 = vmatprep.subr.bf16.mxu0 0
    %1154 = vmatpush1.bf16.xpose.msra.mxu0 0
    %1155 = vmatprep.subr.bf16.mxu0 0
    %1156 = vmatpush1.bf16.xpose.msra.mxu0 0
    %1157 = vmatprep.subr.bf16.mxu0 0
    %1158 = vmatpush1.bf16.xpose.msra.mxu0 0
    %1159 = vmatprep.subr.bf16.mxu0 0
    %1160 = vmatpush1.bf16.xpose.msra.mxu0 0
    %1161 = vmatprep.subr.bf16.mxu0 0
    %1162 = vmatpush1.bf16.xpose.msra.mxu0 0
    %1163 = vmatprep.subr.bf16.mxu0 0
    %1164 = vmatpush1.bf16.xpose.msra.mxu0 0
    %1165 = vmatprep.subr.bf16.mxu0 0
    %1166 = vmatpush1.bf16.xpose.msra.mxu0 0
    %1167 = vmatprep.subr.bf16.mxu0 0
    %1168 = vmatpush1.bf16.xpose.msra.mxu0 0
    %1169 = vmatprep.mubr.bf16.mxu0 0
    %1170 = vmatmul.mubr.bf16.gmra.mrb[0].mxu0 %v1132
    %v1171 = vpop.f32.mrb[0].mxu0
    %v1172 = vadd.f32 0.0, %v1171
    %v1173 = vpop.f32.mrb[0].mxu0
    %v1174 = vpop.f32.mrb[0].mxu0
    %v1175 = vpop.f32.mrb[0].mxu0
    %1176 = vdwg.mxu0
    %v1177 = vsel %vm406, %v1122, -inf
    %1178 = vmax.xlane.f32.xlu0 %v1177
    %v1179 = vpop.xlane.xlu0 %1178
    %v1180 = vsel %vm406, %v1172, -inf
    %1181 = vmax.xlane.f32.xlu0 %v1180
    %v1182 = vpop.xlane.xlu0 %1181
    %v1183 = vsub.f32 %v1122, %v1179
    %v1184 = vsub.f32 %v1172, %v1182
    %v1185 = vmul.f32 %v1183, 1.442695
    %v1186 = vpow.pop %v1185
    %v1187 = vmul.f32 %v1184, 1.442695
    %v1188 = vpow.pop %v1187
    %v1189 = vsel %vm406, %v1186, 0.0
    %1190 = vadd.xlane.f32.xlu0 %v1189
    %v1191 = vpop.xlane.xlu0 %1190
    %v1192 = vsel %vm406, %v1188, 0.0
    %1193 = vadd.xlane.f32.xlu0 %v1192
    %v1194 = vpop.xlane.xlu0 %1193
    %v1195 = vrcp.pop %v1191
    %v1196 = vrcp.pop %v1194
    %v1197 = vmul.f32 %v1186, %v1195
    %v1198 = vmul.f32 %v1188, %v1196
    %v1199 = vpack.c.bf16 %v1197, %v1197
    %v1200 = vpack.c.bf16 %v1198, %v1198
    %1201 = vrot.lane.b32.xlu0 %v401, 104
    %v1202 = vpop.permute.xlu0 %1201
    %v1204 = vsel %vm406, %v1199, 0
    %v1207 = vsel %vm529, %v1202, 0
    %1209 = vmatprep.subr.bf16.mxu0 0
    %1210 = vmatpush1.bf16.msra.mxu0 %v1207
    %1211 = vmatprep.subr.bf16.mxu0 0
    %1212 = vmatpush1.bf16.msra.mxu0 0
    %1213 = vmatprep.subr.bf16.mxu0 0
    %1214 = vmatpush1.bf16.msra.mxu0 0
    %1215 = vmatprep.subr.bf16.mxu0 0
    %1216 = vmatpush1.bf16.msra.mxu0 0
    %1217 = vmatprep.subr.bf16.mxu0 0
    %1218 = vmatpush1.bf16.msra.mxu0 0
    %1219 = vmatprep.subr.bf16.mxu0 0
    %1220 = vmatpush1.bf16.msra.mxu0 0
    %1221 = vmatprep.subr.bf16.mxu0 0
    %1222 = vmatpush1.bf16.msra.mxu0 0
    %1223 = vmatprep.subr.bf16.mxu0 0
    %1224 = vmatpush1.bf16.msra.mxu0 0
    %1225 = vmatprep.subr.bf16.mxu0 0
    %1226 = vmatpush1.bf16.msra.mxu0 0
    %1227 = vmatprep.subr.bf16.mxu0 0
    %1228 = vmatpush1.bf16.msra.mxu0 0
    %1229 = vmatprep.subr.bf16.mxu0 0
    %1230 = vmatpush1.bf16.msra.mxu0 0
    %1231 = vmatprep.subr.bf16.mxu0 0
    %1232 = vmatpush1.bf16.msra.mxu0 0
    %1233 = vmatprep.subr.bf16.mxu0 0
    %1234 = vmatpush1.bf16.msra.mxu0 0
    %1235 = vmatprep.subr.bf16.mxu0 0
    %1236 = vmatpush1.bf16.msra.mxu0 0
    %1237 = vmatprep.subr.bf16.mxu0 0
    %1238 = vmatpush1.bf16.msra.mxu0 0
    %1239 = vmatprep.subr.bf16.mxu0 0
    %1240 = vmatpush1.bf16.msra.mxu0 0
    %1241 = vmatprep.mubr.bf16.mxu0 0
    %1242 = vmatmul.mubr.bf16.gmra.mrb[0].mxu0 %v1204
    %v1243 = vpop.f32.mrb[0].mxu0
    %v1244 = vadd.f32 0.0, %v1243
    %v1245 = vpop.f32.mrb[0].mxu0
    %v1246 = vpop.f32.mrb[0].mxu0
    %v1247 = vpop.f32.mrb[0].mxu0
    %1248 = vdwg.mxu0
    %1249 = vrot.lane.b32.xlu0 %v402, 104
    %v1250 = vpop.permute.xlu0 %1249
    %v1252 = vsel %vm406, %v1200, 0
    %v1255 = vsel %vm529, %v1250, 0
    %1257 = vmatprep.subr.bf16.mxu0 0
    %1258 = vmatpush1.bf16.msra.mxu0 %v1255
    %1259 = vmatprep.subr.bf16.mxu0 0
    %1260 = vmatpush1.bf16.msra.mxu0 0
    %1261 = vmatprep.subr.bf16.mxu0 0
    %1262 = vmatpush1.bf16.msra.mxu0 0
    %1263 = vmatprep.subr.bf16.mxu0 0
    %1264 = vmatpush1.bf16.msra.mxu0 0
    %1265 = vmatprep.subr.bf16.mxu0 0
    %1266 = vmatpush1.bf16.msra.mxu0 0
    %1267 = vmatprep.subr.bf16.mxu0 0
    %1268 = vmatpush1.bf16.msra.mxu0 0
    %1269 = vmatprep.subr.bf16.mxu0 0
    %1270 = vmatpush1.bf16.msra.mxu0 0
    %1271 = vmatprep.subr.bf16.mxu0 0
    %1272 = vmatpush1.bf16.msra.mxu0 0
    %1273 = vmatprep.subr.bf16.mxu0 0
    %1274 = vmatpush1.bf16.msra.mxu0 0
    %1275 = vmatprep.subr.bf16.mxu0 0
    %1276 = vmatpush1.bf16.msra.mxu0 0
    %1277 = vmatprep.subr.bf16.mxu0 0
    %1278 = vmatpush1.bf16.msra.mxu0 0
    %1279 = vmatprep.subr.bf16.mxu0 0
    %1280 = vmatpush1.bf16.msra.mxu0 0
    %1281 = vmatprep.subr.bf16.mxu0 0
    %1282 = vmatpush1.bf16.msra.mxu0 0
    %1283 = vmatprep.subr.bf16.mxu0 0
    %1284 = vmatpush1.bf16.msra.mxu0 0
    %1285 = vmatprep.subr.bf16.mxu0 0
    %1286 = vmatpush1.bf16.msra.mxu0 0
    %1287 = vmatprep.subr.bf16.mxu0 0
    %1288 = vmatpush1.bf16.msra.mxu0 0
    %1289 = vmatprep.mubr.bf16.mxu0 0
    %1290 = vmatmul.mubr.bf16.gmra.mrb[0].mxu0 %v1252
    %v1291 = vpop.f32.mrb[0].mxu0
    %v1292 = vadd.f32 0.0, %v1291
    %v1293 = vpop.f32.mrb[0].mxu0
    %v1294 = vpop.f32.mrb[0].mxu0
    %v1295 = vpop.f32.mrb[0].mxu0
    %1296 = vdwg.mxu0
    %v1297 = vpack.c.bf16 %v1292, %v1244
    %1299 = vrot.lane.b32.xlu0 %v1297, 24
    %v1300 = vpop.permute.xlu0 %1299
    %vm1302 = vcmask 261312
    %1303 = vst.msk [vmem:[#allocation2] sm:$0xff] %vm1302, %v1300
    %v1304 = vld [vmem:[#allocation2] sm:$0xff]
    %v1305 = vld [vmem:[#allocation14] sm:$0xf]
    %v1306 = vld [vmem:[#allocation14 + $0x4] sm:$0xf]
    %v1307 = vld [vmem:[#allocation14 + $0x8] sm:$0xf]
    %v1308 = vld [vmem:[#allocation14 + $0xc] sm:$0xf]
    %v1309 = vld [vmem:[#allocation15] sm:$0x1]
    %v1311 = vlaneseq
    %v1312 = vshrl.u32 %v1311, 7
    %v1313 = vsub.s32 0, %v1312
    %v1314 = vrot.slane %v1309, %v1313
    %v1320 = vunpack.c.l.b16 %v1305
    %v1321 = vunpack.c.l.b16 %v1306
    %v1322 = vunpack.c.l.b16 %v1307
    %v1323 = vunpack.c.l.b16 %v1308
    %v1324 = vpack.c.b16 %v1321, %v1320
    %v1325 = vpack.c.b16 %v1323, %v1322
    %v1329 = vsel %vm286, %v1304, 0
    %1331 = vmatprep.subr.bf16.mxu0 0
    %1332 = vmatpush1.bf16.msra.mxu0 %v1324
    %1333 = vmatprep.subr.bf16.mxu0 0
    %1334 = vmatpush1.bf16.msra.mxu0 %v1325
    %1335 = vmatprep.subr.bf16.mxu0 0
    %1336 = vmatpush1.bf16.msra.mxu0 0
    %1337 = vmatprep.subr.bf16.mxu0 0
    %1338 = vmatpush1.bf16.msra.mxu0 0
    %1339 = vmatprep.subr.bf16.mxu0 0
    %1340 = vmatpush1.bf16.msra.mxu0 0
    %1341 = vmatprep.subr.bf16.mxu0 0
    %1342 = vmatpush1.bf16.msra.mxu0 0
    %1343 = vmatprep.subr.bf16.mxu0 0
    %1344 = vmatpush1.bf16.msra.mxu0 0
    %1345 = vmatprep.subr.bf16.mxu0 0
    %1346 = vmatpush1.bf16.msra.mxu0 0
    %1347 = vmatprep.subr.bf16.mxu0 0
    %1348 = vmatpush1.bf16.msra.mxu0 0
    %1349 = vmatprep.subr.bf16.mxu0 0
    %1350 = vmatpush1.bf16.msra.mxu0 0
    %1351 = vmatprep.subr.bf16.mxu0 0
    %1352 = vmatpush1.bf16.msra.mxu0 0
    %1353 = vmatprep.subr.bf16.mxu0 0
    %1354 = vmatpush1.bf16.msra.mxu0 0
    %1355 = vmatprep.subr.bf16.mxu0 0
    %1356 = vmatpush1.bf16.msra.mxu0 0
    %1357 = vmatprep.subr.bf16.mxu0 0
    %1358 = vmatpush1.bf16.msra.mxu0 0
    %1359 = vmatprep.subr.bf16.mxu0 0
    %1360 = vmatpush1.bf16.msra.mxu0 0
    %1361 = vmatprep.subr.bf16.mxu0 0
    %1362 = vmatpush1.bf16.msra.mxu0 0
    %1363 = vmatprep.mubr.bf16.mxu0 0
    %1364 = vmatmul.mubr.bf16.gmra.mrb[0].mxu0 %v1329
    %v1365 = vpop.f32.mrb[0].mxu0
    %v1366 = vadd.f32 %v1314, %v1365
    %v1367 = vpop.f32.mrb[0].mxu0
    %v1368 = vpop.f32.mrb[0].mxu0
    %v1369 = vadd.f32 %v1314, %v1368
    %v1370 = vpop.f32.mrb[0].mxu0
    %1371 = vdwg.mxu0
    %v1372 = vadd.f32 %v254, %v1366
    %v1373 = vadd.f32 %v255, %v1369
    %v1374 = vsel %vm286, %v1372, 0.0
    %1375 = vadd.xlane.f32.xlu0 %v1374
    %v1376 = vpop.xlane.xlu0 %1375
    %v1377 = vsel %vm286, %v1373, 0.0
    %1378 = vadd.xlane.f32.xlu0 %v1377
    %v1379 = vpop.xlane.xlu0 %1378
    %v1380 = vrcp.pop 32.0
    %v1381 = vmul.f32 %v1376, %v1380
    %v1382 = vmul.f32 %v1379, %v1380
    %v1383 = vsub.f32 %v1372, %v1381
    %v1384 = vsub.f32 %v1373, %v1382
    %v1385 = vmul.f32 %v1383, %v1383
    %v1386 = vmul.f32 %v1384, %v1384
    %v1387 = vsel %vm286, %v1385, 0.0
    %1388 = vadd.xlane.f32.xlu0 %v1387
    %v1389 = vpop.xlane.xlu0 %1388
    %v1390 = vsel %vm286, %v1386, 0.0
    %1391 = vadd.xlane.f32.xlu0 %v1390
    %v1392 = vpop.xlane.xlu0 %1391
    %v1393 = vmul.f32 %v1389, %v1380
    %v1394 = vmul.f32 %v1392, %v1380
    %v1395 = vadd.f32 %v1393, 1e-05
    %v1396 = vadd.f32 %v1394, 1e-05
    %v1397 = vrsqrt.pop %v1395
    %v1398 = vrsqrt.pop %v1396
    %v1399 = vmul.f32 %v1383, %v1397
    %v1400 = vmul.f32 %v1384, %v1398
    %v1401 = vld [vmem:[#allocation17] sm:$0x1]
    %v1403 = vlaneseq
    %v1404 = vshrl.u32 %v1403, 7
    %v1405 = vsub.s32 0, %v1404
    %v1406 = vrot.slane %v1401, %v1405
    %v1408 = vmul.f32 %v1399, %v1406
    %v1409 = vmul.f32 %v1400, %v1406
    %v1410 = vld [vmem:[#allocation18] sm:$0x1]
    %v1412 = vlaneseq
    %v1413 = vshrl.u32 %v1412, 7
    %v1414 = vsub.s32 0, %v1413
    %v1415 = vrot.slane %v1410, %v1414
    %v1417 = vadd.f32 %v1408, %v1415
    %v1418 = vadd.f32 %v1409, %v1415
    %v1419 = vpack.c.bf16 %v1418, %v1417
    %v1420 = vld [vmem:[#allocation20] sm:$0xf]
    %v1421 = vld [vmem:[#allocation20 + $0x4] sm:$0xf]
    %v1422 = vld [vmem:[#allocation20 + $0x8] sm:$0xf]
    %v1423 = vld [vmem:[#allocation20 + $0xc] sm:$0xf]
    %v1424 = vld [vmem:[#allocation21] sm:$0x1]
    %v1426 = vlaneseq
    %v1427 = vshrl.u32 %v1426, 7
    %v1428 = vsub.s32 0, %v1427
    %v1429 = vrot.slane %v1424, %v1428
    %v1435 = vunpack.c.l.b16 %v1420
    %v1436 = vunpack.c.l.b16 %v1421
    %v1437 = vunpack.c.l.b16 %v1422
    %v1438 = vunpack.c.l.b16 %v1423
    %v1439 = vpack.c.b16 %v1436, %v1435
    %v1440 = vpack.c.b16 %v1438, %v1437
    %v1444 = vsel %vm286, %v1419, 0
    %1446 = vmatprep.subr.bf16.mxu0 0
    %1447 = vmatpush1.bf16.msra.mxu0 %v1439
    %1448 = vmatprep.subr.bf16.mxu0 0
    %1449 = vmatpush1.bf16.msra.mxu0 %v1440
    %1450 = vmatprep.subr.bf16.mxu0 0
    %1451 = vmatpush1.bf16.msra.mxu0 0
    %1452 = vmatprep.subr.bf16.mxu0 0
    %1453 = vmatpush1.bf16.msra.mxu0 0
    %1454 = vmatprep.subr.bf16.mxu0 0
    %1455 = vmatpush1.bf16.msra.mxu0 0
    %1456 = vmatprep.subr.bf16.mxu0 0
    %1457 = vmatpush1.bf16.msra.mxu0 0
    %1458 = vmatprep.subr.bf16.mxu0 0
    %1459 = vmatpush1.bf16.msra.mxu0 0
    %1460 = vmatprep.subr.bf16.mxu0 0
    %1461 = vmatpush1.bf16.msra.mxu0 0
    %1462 = vmatprep.subr.bf16.mxu0 0
    %1463 = vmatpush1.bf16.msra.mxu0 0
    %1464 = vmatprep.subr.bf16.mxu0 0
    %1465 = vmatpush1.bf16.msra.mxu0 0
    %1466 = vmatprep.subr.bf16.mxu0 0
    %1467 = vmatpush1.bf16.msra.mxu0 0
    %1468 = vmatprep.subr.bf16.mxu0 0
    %1469 = vmatpush1.bf16.msra.mxu0 0
    %1470 = vmatprep.subr.bf16.mxu0 0
    %1471 = vmatpush1.bf16.msra.mxu0 0
    %1472 = vmatprep.subr.bf16.mxu0 0
    %1473 = vmatpush1.bf16.msra.mxu0 0
    %1474 = vmatprep.subr.bf16.mxu0 0
    %1475 = vmatpush1.bf16.msra.mxu0 0
    %1476 = vmatprep.subr.bf16.mxu0 0
    %1477 = vmatpush1.bf16.msra.mxu0 0
    %1478 = vmatprep.mubr.bf16.mxu0 0
    %1479 = vmatmul.mubr.bf16.gmra.mrb[0].mxu0 %v1444
    %v1480 = vpop.f32.mrb[0].mxu0
    %v1481 = vadd.f32 %v1429, %v1480
    %v1482 = vpop.f32.mrb[0].mxu0
    %v1483 = vpop.f32.mrb[0].mxu0
    %v1484 = vadd.f32 %v1429, %v1483
    %v1485 = vpop.f32.mrb[0].mxu0
    %1486 = vdwg.mxu0
    %v1487 = vmax.f32 %v1481, 0.0
    %v1488 = vmax.f32 %v1484, 0.0
    %v1489 = vpack.c.bf16 %v1488, %v1487
    %v1490 = vld [vmem:[#allocation23] sm:$0xf]
    %v1491 = vld [vmem:[#allocation23 + $0x4] sm:$0xf]
    %v1492 = vld [vmem:[#allocation23 + $0x8] sm:$0xf]
    %v1493 = vld [vmem:[#allocation23 + $0xc] sm:$0xf]
    %v1494 = vld [vmem:[#allocation23 + $0x10] sm:$0xf]
    %v1495 = vld [vmem:[#allocation23 + $0x14] sm:$0xf]
    %v1496 = vld [vmem:[#allocation23 + $0x18] sm:$0xf]
    %v1497 = vld [vmem:[#allocation23 + $0x1c] sm:$0xf]
    %v1498 = vld [vmem:[#allocation24] sm:$0x1]
    %v1500 = vlaneseq
    %v1501 = vshrl.u32 %v1500, 7
    %v1502 = vsub.s32 0, %v1501
    %v1503 = vrot.slane %v1498, %v1502
    %v1513 = vunpack.c.l.b16 %v1490
    %v1514 = vunpack.c.l.b16 %v1491
    %v1515 = vunpack.c.l.b16 %v1492
    %v1516 = vunpack.c.l.b16 %v1493
    %v1517 = vunpack.c.l.b16 %v1494
    %v1518 = vunpack.c.l.b16 %v1495
    %v1519 = vunpack.c.l.b16 %v1496
    %v1520 = vunpack.c.l.b16 %v1497
    %v1521 = vpack.c.b16 %v1514, %v1513
    %v1522 = vpack.c.b16 %v1516, %v1515
    %v1523 = vpack.c.b16 %v1518, %v1517
    %v1524 = vpack.c.b16 %v1520, %v1519
    %vm1529 = vcmask 523264
    %v1531 = vsel %vm1529, %v1489, 0
    %1533 = vmatprep.subr.bf16.mxu0 0
    %1534 = vmatpush1.bf16.msra.mxu0 %v1521
    %1535 = vmatprep.subr.bf16.mxu0 0
    %1536 = vmatpush1.bf16.msra.mxu0 %v1522
    %1537 = vmatprep.subr.bf16.mxu0 0
    %1538 = vmatpush1.bf16.msra.mxu0 %v1523
    %1539 = vmatprep.subr.bf16.mxu0 0
    %1540 = vmatpush1.bf16.msra.mxu0 %v1524
    %1541 = vmatprep.subr.bf16.mxu0 0
    %1542 = vmatpush1.bf16.msra.mxu0 0
    %1543 = vmatprep.subr.bf16.mxu0 0
    %1544 = vmatpush1.bf16.msra.mxu0 0
    %1545 = vmatprep.subr.bf16.mxu0 0
    %1546 = vmatpush1.bf16.msra.mxu0 0
    %1547 = vmatprep.subr.bf16.mxu0 0
    %1548 = vmatpush1.bf16.msra.mxu0 0
    %1549 = vmatprep.subr.bf16.mxu0 0
    %1550 = vmatpush1.bf16.msra.mxu0 0
    %1551 = vmatprep.subr.bf16.mxu0 0
    %1552 = vmatpush1.bf16.msra.mxu0 0
    %1553 = vmatprep.subr.bf16.mxu0 0
    %1554 = vmatpush1.bf16.msra.mxu0 0
    %1555 = vmatprep.subr.bf16.mxu0 0
    %1556 = vmatpush1.bf16.msra.mxu0 0
    %1557 = vmatprep.subr.bf16.mxu0 0
    %1558 = vmatpush1.bf16.msra.mxu0 0
    %1559 = vmatprep.subr.bf16.mxu0 0
    %1560 = vmatpush1.bf16.msra.mxu0 0
    %1561 = vmatprep.subr.bf16.mxu0 0
    %1562 = vmatpush1.bf16.msra.mxu0 0
    %1563 = vmatprep.subr.bf16.mxu0 0
    %1564 = vmatpush1.bf16.msra.mxu0 0
    %1565 = vmatprep.mubr.bf16.mxu0 0
    %1566 = vmatmul.mubr.bf16.gmra.mrb[0].mxu0 %v1531
    %v1567 = vpop.f32.mrb[0].mxu0
    %v1568 = vadd.f32 %v1503, %v1567
    %v1569 = vpop.f32.mrb[0].mxu0
    %v1570 = vpop.f32.mrb[0].mxu0
    %v1571 = vadd.f32 %v1503, %v1570
    %v1572 = vpop.f32.mrb[0].mxu0
    %1573 = vdwg.mxu0
    %v1574 = vadd.f32 %v1417, %v1568
    %v1575 = vadd.f32 %v1418, %v1571
    %v1576 = vsel %vm286, %v1574, 0.0
    %1577 = vadd.xlane.f32.xlu0 %v1576
    %v1578 = vpop.xlane.xlu0 %1577
    %v1579 = vsel %vm286, %v1575, 0.0
    %1580 = vadd.xlane.f32.xlu0 %v1579
    %v1581 = vpop.xlane.xlu0 %1580
    %v1582 = vmul.f32 %v1578, %v1380
    %v1583 = vmul.f32 %v1581, %v1380
    %v1584 = vsub.f32 %v1574, %v1582
    %v1585 = vsub.f32 %v1575, %v1583
    %v1586 = vmul.f32 %v1584, %v1584
    %v1587 = vmul.f32 %v1585, %v1585
    %v1588 = vsel %vm286, %v1586, 0.0
    %1589 = vadd.xlane.f32.xlu0 %v1588
    %v1590 = vpop.xlane.xlu0 %1589
    %v1591 = vsel %vm286, %v1587, 0.0
    %1592 = vadd.xlane.f32.xlu0 %v1591
    %v1593 = vpop.xlane.xlu0 %1592
    %v1594 = vmul.f32 %v1590, %v1380
    %v1595 = vmul.f32 %v1593, %v1380
    %v1596 = vadd.f32 %v1594, 1e-05
    %v1597 = vadd.f32 %v1595, 1e-05
    %v1598 = vrsqrt.pop %v1596
    %v1599 = vrsqrt.pop %v1597
    %v1600 = vmul.f32 %v1584, %v1598
    %v1601 = vmul.f32 %v1585, %v1599
    %v1602 = vld [vmem:[#allocation26] sm:$0x1]
    %v1604 = vlaneseq
    %v1605 = vshrl.u32 %v1604, 7
    %v1606 = vsub.s32 0, %v1605
    %v1607 = vrot.slane %v1602, %v1606
    %v1609 = vmul.f32 %v1600, %v1607
    %v1610 = vmul.f32 %v1601, %v1607
    %v1611 = vld [vmem:[#allocation27] sm:$0x1]
    %v1613 = vlaneseq
    %v1614 = vshrl.u32 %v1613, 7
    %v1615 = vsub.s32 0, %v1614
    %v1616 = vrot.slane %v1611, %v1615
    %v1618 = vadd.f32 %v1609, %v1616
    %v1619 = vadd.f32 %v1610, %v1616
    %1620 = vst.msk [vmem:[#allocation29] sm:$0xff] %vm286, %v1618
    %1621 = vst.msk [vmem:[#allocation29 + $0x8] sm:$0xff] %vm286, %v1619
    // Predicated region
    $region130: #{tpu_custom_call.1} parent=1 // pred_check
      _
    $region131: #{tpu_custom_call.1} parent=1 // pred_check_branch
      %1623 = sbr.rel (0) target = $region133
    $region132: #{tpu_custom_call.1} parent=1 // pred_region
      %s1625 = ssub.s32 256, 256
      %1626 = vsyncadd [#allocation5], %s1625
      %s1627 = sshll.u32 [#allocation29], 4
      %s1628 = int_to_ptr.vmem [resolvable:$true] %s1627
      %1633 = dma.vmem_to_hbm [thread:$0]  %s1628, 256, %s16, [#allocation5], 128, 128, 8
    $region133: #{tpu_custom_call.1} parent=1 // pred_fallthru
      _
    // Predicated region
    $region134: #{tpu_custom_call.1} parent=1 // pred_check
      _
    $region135: #{tpu_custom_call.1} parent=1 // pred_check_branch
      %1635 = sbr.rel (0) target = $region137
    $region136: #{tpu_custom_call.1} parent=1 // pred_region
      %1636 = dma.done [#allocation5], 256
    $region137: #{tpu_custom_call.1} parent=1 // pred_fallthru
      _
    %1637 = vsyncpa [#allocation4], 1
    %1638 = vsyncpa [#allocation7], 1
    %1639 = vsyncpa [#allocation10], 1
    %1640 = vsyncpa [#allocation13], 1
    %1641 = vsyncpa [#allocation16], 1
    %1642 = vsyncpa [#allocation19], 1
    %1643 = vsyncpa [#allocation22], 1
    %1644 = vsyncpa [#allocation25], 1
    %1645 = vsyncpa [#allocation28], 1
    %1646 = vsyncpa [#allocation5], 1

</llo_original>
